<compile_context>
chip_gen: v7x
topology: tpu7x:2x2x1
jax: 0.10.0
libtpu: 0.0.40
codegen_flags: <defaults>
</compile_context>

<pallas_src>
import jax
import jax.numpy as jnp
from jax.experimental import pallas as pl
from jax.experimental.pallas import tpu as pltpu

# ---------------- model hyper-parameters (small, consistent with the module) ----------
B = 2                   # batch
CIN, H, W = 3, 16, 16   # NCHW image
CIN_PAD = 8             # input channels zero-padded to a full sublane group
CONV_OUT = 8            # synthetic perception conv channels
NUM_CLASSES = 32        # params['encode']['perception']['res']['num_classes']
SPEED_DIM = 32          # params['encode']['speed']['fc']['neurons'][-1]
CMD_DIM = 32            # params['encode']['command']['fc']['neurons'][-1]
JOIN_DIM = 64           # params['join']['fc']['neurons'][-1]
NUM_C = 2               # params['affordances']['number_of_classification']
NUM_R = 2               # params['affordances']['number_of_regression']
NHEAD = 2 * NUM_C + NUM_R
CAT_DIM = NUM_CLASSES + SPEED_DIM + CMD_DIM

HW = H * W
BHW = B * HW
assert (H & (H - 1)) == 0 and (W & (W - 1)) == 0, "H, W must be powers of two"
W_SHIFT = W.bit_length() - 1

# ---------------- packed parameter slab layout (f32, width 128 lanes) ------------------
SLAB_COLS = 128
OFF_CONVW = 0                                  # 9*8 rows, cols 0:CIN     conv W_k[co, ci]
OFF_CONVB = OFF_CONVW + 9 * CONV_OUT           # 8  rows, col 0           conv bias column
OFF_PERCW = OFF_CONVB + CONV_OUT               # 32 rows, cols 0:8        perception fc W^T
OFF_MISC32 = OFF_PERCW + NUM_CLASSES           # 32 rows: c0 perc_b | c1 speed_w | c2 speed_b
                                               #          c3 cmd_b  | c4:8 cmd_w^T
OFF_JOINW = OFF_MISC32 + 32                    # 64 rows, cols 0:96       join fc W^T
OFF_MISC64 = OFF_JOINW + JOIN_DIM              # 64 rows: c0 join_b | c1 rows 0:6 heads_b
OFF_HEADW = OFF_MISC64 + JOIN_DIM              # 8  rows (0:6 used), cols 0:64   heads W^T
PARAM_ROWS = OFF_HEADW + 8                     # 280 (multiple of 8)

# ---------------- per-call ("dynamic") slab layout (f32, width 128) --------------------
D_M = 0                    # 1 row,  cols 0:B       speed measurement m^T
D_CMD = 1                  # 4 rows, cols 0:B       command one-hot c^T
D_GT = D_CMD + 4           # NUM_C rows, cols 0:B   classification gt (float, exact 0/1)
D_CLSW = D_GT + NUM_C      # 2 rows, cols 0:NUM_C   class weights^T [cls, head]
D_RGT = D_CLSW + 2         # NUM_R rows, cols 0:B   regression gt^T
D_VW = D_RGT + NUM_R       # NUM_R rows, col 0      variable weights column
DYN_ROWS = 16


# ---------------- the single fused Pallas kernel --------------------------------------

def _fused_kernel(x_ref, pw_ref, dyn_ref, o_ref):
    f32 = jnp.float32

    # ---- perception conv3x3 (padding=1) + ReLU, computed lane-dense as (CONV_OUT, B*H*W).
    #      9 shifted copies of the channel-major image (pltpu.roll along lanes, XLU slot),
    #      edge-masked, each accumulated through one small MXU matmul. ----
    x_all = x_ref[...]                                            # (CIN_PAD, BHW)
    sp = jax.lax.broadcasted_iota(jnp.int32, (1, BHW), 1)
    jj = sp & (W - 1)                                             # column within image
    ii = (sp >> W_SHIFT) & (H - 1)                                # row within image

    acc = jnp.zeros((CONV_OUT, BHW), f32)
    for kh in range(3):
        for kw in range(3):
            dh, dw = kh - 1, kw - 1
            shift = (-(dh * W + dw)) % BHW
            xs = pltpu.roll(x_all, shift, axis=1) if shift else x_all
            valid = ((ii + dh >= 0) & (ii + dh < H) &
                     (jj + dw >= 0) & (jj + dw < W))
            xs = jnp.where(valid, xs, 0.0)
            k = kh * 3 + kw
            wk = pw_ref[OFF_CONVW + CONV_OUT * k:
                        OFF_CONVW + CONV_OUT * (k + 1), 0:CIN_PAD]     # (8, 8)
            acc = acc + jnp.dot(wk, xs, preferred_element_type=f32)
    conv_b = pw_ref[OFF_CONVB:OFF_CONVB + CONV_OUT, 0:1]          # (8, 1)
    feat_t = jnp.maximum(acc + conv_b, 0.0)                       # (8, 512) lane-dense

    # ---- global average pool: per-batch lane reductions (XLU), no pool matrix, no MXU ----
    pooled_t = jnp.concatenate(
        [jnp.sum(feat_t[:, b * HW:(b + 1) * HW], axis=1, keepdims=True) for b in range(B)],
        axis=1) * (1.0 / HW)                                      # (CONV_OUT, B)

    # ---- perception FC -> z (encoder num_classes output, no activation) ----
    perc_w = pw_ref[OFF_PERCW:OFF_PERCW + NUM_CLASSES, 0:CONV_OUT]          # (32, 8)
    perc_b = pw_ref[OFF_MISC32:OFF_MISC32 + NUM_CLASSES, 0:1]               # (32, 1)
    z_t = jnp.dot(perc_w, pooled_t, preferred_element_type=f32) + perc_b    # (32, B)

    # ---- speed FC [1 -> 32]: K=1 matmul replaced by a VPU broadcast FMA ----
    m_t = dyn_ref[D_M:D_M + 1, 0:B]                                         # (1, B)
    sw = pw_ref[OFF_MISC32:OFF_MISC32 + SPEED_DIM, 1:2]                     # (32, 1)
    sb = pw_ref[OFF_MISC32:OFF_MISC32 + SPEED_DIM, 2:3]                     # (32, 1)
    s_t = jnp.maximum(sw * m_t + sb, 0.0)                                   # (32, B)

    # ---- command FC [4 -> 32]: 4 broadcast FMAs instead of a K=4 MXU pass ----
    cmd_acc = pw_ref[OFF_MISC32:OFF_MISC32 + CMD_DIM, 3:4]                  # bias (32, 1)
    for kk in range(4):
        cw_col = pw_ref[OFF_MISC32:OFF_MISC32 + CMD_DIM, 4 + kk:5 + kk]     # (32, 1)
        cmd_acc = cmd_acc + cw_col * dyn_ref[D_CMD + kk:D_CMD + kk + 1, 0:B]
    cmd_t = jnp.maximum(cmd_acc, 0.0)                                       # (32, B)

    # ---- Join ('cat') + after_process FC: free sublane stack (offsets 0/32/64) + 1 matmul -
    cat_t = jnp.concatenate([z_t, s_t, cmd_t], axis=0)                      # (96, B)
    jw = pw_ref[OFF_JOINW:OFF_JOINW + JOIN_DIM, 0:CAT_DIM]                  # (64, 96)
    jb = pw_ref[OFF_MISC64:OFF_MISC64 + JOIN_DIM, 0:1]                      # (64, 1)
    j_t = jnp.maximum(jnp.dot(jw, cat_t, preferred_element_type=f32) + jb, 0.0)   # (64, B)

    # ---- all affordance heads in ONE matmul: rows = [cls0(2) | cls1(2) | reg(NUM_R)] ----
    headw = pw_ref[OFF_HEADW:OFF_HEADW + NHEAD, 0:JOIN_DIM]                 # (6, 64)
    headb = pw_ref[OFF_MISC64:OFF_MISC64 + NHEAD, 1:2]                      # (6, 1)
    head_t = jnp.dot(headw, j_t, preferred_element_type=f32) + headb        # (6, B)

    # ---- weighted cross-entropy per classification head (PyTorch 'mean' semantics:
    #      sum_n w[y_n]*NLL_n / sum_n w[y_n]); exact division for parity ----
    gt_t = dyn_ref[D_GT:D_GT + NUM_C, 0:B]                                  # (NUM_C, B) float
    clsw_t = dyn_ref[D_CLSW:D_CLSW + 2, 0:NUM_C]                            # (2, NUM_C)
    rgt_t = dyn_ref[D_RGT:D_RGT + NUM_R, 0:B]                               # (NUM_R, B)
    vw = dyn_ref[D_VW:D_VW + NUM_R, 0:1]                                    # (NUM_R, 1)

    cls_iota = jax.lax.broadcasted_iota(jnp.int32, (2, B), 0)               # class id / sublane
    total = jnp.zeros((1, 1), f32)
    for i in range(NUM_C):
        logits = head_t[2 * i:2 * i + 2, :]                                 # (2, B)
        mx = jnp.max(logits, axis=0, keepdims=True)
        lse = mx + jnp.log(jnp.sum(jnp.exp(logits - mx), axis=0, keepdims=True))
        logp = logits - lse                                                 # log_softmax
        onehot = (cls_iota == gt_t[i:i + 1, :].astype(jnp.int32)).astype(f32)   # (2, B)
        nll = -jnp.sum(onehot * logp, axis=0, keepdims=True)                # (1, B)
        w_t = jnp.sum(onehot * clsw_t[:, i:i + 1], axis=0, keepdims=True)   # (1, B)
        num = jnp.sum(w_t * nll, keepdims=True)                             # (1, 1)
        den = jnp.sum(w_t, keepdims=True)                                   # (1, 1)
        total = total + num / den

    # ---- weighted L1 over regression heads: mean_B |pred - gt| * variable_weight ----
    r_pred = head_t[2 * NUM_C:2 * NUM_C + NUM_R, :]                         # (NUM_R, B)
    total = total + jnp.sum(jnp.abs(r_pred - rgt_t) * vw, keepdims=True) * (1.0 / B)

    o_ref[...] = total


def _spec2d(shape):
    return pl.BlockSpec(shape, lambda i: (0, 0))


# ---------------- parameter init (deterministic, synthetic) ---------------------------

def init_params(key):
    keys = jax.random.split(key, 24)
    it = iter(keys)

    def rnd(shape, scale=0.1):
        return jax.random.normal(next(it), shape, jnp.float32) * scale

    # synthetic perception encoder (stand-in for ResNet): conv3x3 -> ReLU -> GAP -> FC
    conv_w = rnd((CONV_OUT, CIN, 3, 3))           # PyTorch layout (Cout, Cin, KH, KW)
    conv_b = rnd((CONV_OUT,))
    perc_fc_w = rnd((CONV_OUT, NUM_CLASSES))
    perc_fc_b = rnd((NUM_CLASSES,))
    speed_w = rnd((1, SPEED_DIM))                 # speed FC [1 -> 32]
    speed_b = rnd((SPEED_DIM,))
    cmd_w = rnd((4, CMD_DIM))                     # command FC [4 -> 32]
    cmd_b = rnd((CMD_DIM,))
    join_w = rnd((CAT_DIM, JOIN_DIM))             # rows ordered [z | speed | command]
    join_b = rnd((JOIN_DIM,))
    cls_w = [rnd((JOIN_DIM, 2)) for _ in range(NUM_C)]
    cls_b = [rnd((2,)) for _ in range(NUM_C)]
    reg_w = [rnd((JOIN_DIM, 1)) for _ in range(NUM_R)]
    reg_b = [rnd((1,)) for _ in range(NUM_R)]
    heads_w = jnp.concatenate(cls_w + reg_w, axis=1)     # (64, 6) = [cls0|cls1|reg0|reg1]
    heads_b = jnp.concatenate(cls_b + reg_b, axis=0)     # (6,)

    # pack everything into ONE f32 slab (rows sliced by compile-time offsets in the kernel)
    # conv: row (k*CONV_OUT + co), cols 0:CIN holds conv_w[co, :, kh, kw], k = kh*3 + kw
    convw_k = conv_w.transpose(2, 3, 0, 1).reshape(9 * CONV_OUT, CIN)
    slab = jnp.zeros((PARAM_ROWS, SLAB_COLS), jnp.float32)
    slab = slab.at[OFF_CONVW:OFF_CONVW + 9 * CONV_OUT, 0:CIN].set(convw_k)
    slab = slab.at[OFF_CONVB:OFF_CONVB + CONV_OUT, 0:1].set(conv_b[:, None])
    slab = slab.at[OFF_PERCW:OFF_PERCW + NUM_CLASSES, 0:CONV_OUT].set(perc_fc_w.T)
    slab = slab.at[OFF_MISC32:OFF_MISC32 + NUM_CLASSES, 0:1].set(perc_fc_b[:, None])
    slab = slab.at[OFF_MISC32:OFF_MISC32 + SPEED_DIM, 1:2].set(speed_w.reshape(SPEED_DIM, 1))
    slab = slab.at[OFF_MISC32:OFF_MISC32 + SPEED_DIM, 2:3].set(speed_b[:, None])
    slab = slab.at[OFF_MISC32:OFF_MISC32 + CMD_DIM, 3:4].set(cmd_b[:, None])
    slab = slab.at[OFF_MISC32:OFF_MISC32 + CMD_DIM, 4:8].set(cmd_w.T)
    slab = slab.at[OFF_JOINW:OFF_JOINW + JOIN_DIM, 0:CAT_DIM].set(join_w.T)
    slab = slab.at[OFF_MISC64:OFF_MISC64 + JOIN_DIM, 0:1].set(join_b[:, None])
    slab = slab.at[OFF_MISC64:OFF_MISC64 + NHEAD, 1:2].set(heads_b[:, None])
    slab = slab.at[OFF_HEADW:OFF_HEADW + NHEAD, 0:JOIN_DIM].set(heads_w.T)
    return {'slab': slab}


# ---------------- per-call packing (tiny; fused by XLA under jit) ----------------------

def _pack_dyn(m, c, loss_params):
    def rowblk(a):
        a = jnp.asarray(a, jnp.float32)
        return jnp.pad(a, ((0, 0), (0, SLAB_COLS - a.shape[1])))

    parts = [
        rowblk(m.T),                                                        # D_M
        rowblk(c.T),                                                        # D_CMD
        rowblk(loss_params['classification_gt'].astype(jnp.float32).T),    # D_GT
        rowblk(loss_params['class_weights'].T),                             # D_CLSW
        rowblk(loss_params['regression_gt'].T),                             # D_RGT
        rowblk(loss_params['variable_weights'].reshape(NUM_R, 1)),          # D_VW
    ]
    dyn = jnp.concatenate(parts, axis=0)
    return jnp.pad(dyn, ((0, DYN_ROWS - dyn.shape[0]), (0, 0)))


# ---------------- forward (returns scalar loss, like the PyTorch module) ---------------

@jax.jit
def affordances_separate_forward(p, x, m, c, loss_params):
    # NCHW -> channel-major, flattened-spatial (CIN_PAD, B*H*W); tiny layout change only.
    x_cm = jnp.pad(x.transpose(1, 0, 2, 3).reshape(CIN, BHW),
                   ((0, CIN_PAD - CIN), (0, 0)))
    dyn = _pack_dyn(m, c, loss_params)

    out = pl.pallas_call(
        _fused_kernel,
        out_shape=jax.ShapeDtypeStruct((1, 1), jnp.float32),
        grid=(1,),
        in_specs=[_spec2d(x_cm.shape), _spec2d(p['slab'].shape), _spec2d(dyn.shape)],
        out_specs=pl.BlockSpec((1, 1), lambda i: (0, 0)),
        compiler_params=pltpu.CompilerParams(dimension_semantics=("arbitrary",)),
    )(x_cm, p['slab'], dyn)
    return out[0, 0]


# ---------------- main ------------------------------------------------------------------

if __name__ == "__main__":
    key = jax.random.PRNGKey(0)
    kp, kx, km, kg, kr = jax.random.split(key, 5)

    params = init_params(kp)

    x = jax.random.normal(kx, (B, CIN, H, W), jnp.float32)          # NCHW image
    m = jax.random.uniform(km, (B, 1), jnp.float32)                 # speed measurement
    cmd = jax.nn.one_hot(jnp.array([1, 3]), 4).astype(jnp.float32)  # command one-hot (B, 4)

    loss_params = {
        'classification_gt': jax.random.randint(kg, (B, NUM_C), 0, 2).astype(jnp.int32),
        'class_weights': jnp.array([[1.0, 2.0], [0.5, 1.5]], jnp.float32),   # (NUM_C, 2)
        'regression_gt': jax.random.normal(kr, (B, NUM_R), jnp.float32),
        'variable_weights': jnp.array([[1.0, 0.5]], jnp.float32),            # (1, NUM_R)
    }

    loss = affordances_separate_forward(params, x, m, cmd, loss_params)
    jax.block_until_ready(loss)
    print("KERNEL_OK")
</pallas_src>

<mosaic_0001>
module attributes {stable_mosaic.version = 11 : i64} {
  func.func @_fused_kernel(%arg0: i32, %arg1: memref<8x512xf32, #tpu.memory_space<vmem>>, %arg2: memref<280x128xf32, #tpu.memory_space<vmem>>, %arg3: memref<16x128xf32, #tpu.memory_space<vmem>>, %arg4: memref<1x1xf32, #tpu.memory_space<vmem>>) attributes {dimension_semantics = [#tpu.dimension_semantics<arbitrary>], iteration_bounds = array<i64: 1>, scalar_prefetch = 0 : i64, scratch_operands = 0 : i64, tpu.core_type = #tpu.core_type<tc>, window_params = [{pipeline_mode = #tpu.pipeline_mode<synchronous>, transform_indices = @transform_0, window_bounds = array<i64: 8, 512>}, {pipeline_mode = #tpu.pipeline_mode<synchronous>, transform_indices = @transform_1, window_bounds = array<i64: 280, 128>}, {pipeline_mode = #tpu.pipeline_mode<synchronous>, transform_indices = @transform_2, window_bounds = array<i64: 16, 128>}, {pipeline_mode = #tpu.pipeline_mode<synchronous>, transform_indices = @transform_3, window_bounds = array<i64: 1, 1>}]} {
    %c0 = arith.constant 0 : index
    %c0_0 = arith.constant 0 : index
    %0 = vector.load %arg1[%c0, %c0_0] : memref<8x512xf32, #tpu.memory_space<vmem>>, vector<8x512xf32>
    %1 = tpu.iota {dimensions = array<i32: 1>} : vector<1x512xi32>
    %c15_i32 = arith.constant 15 : i32
    %2 = vector.broadcast %c15_i32 : i32 to vector<1x512xi32>
    %3 = arith.andi %1, %2 : vector<1x512xi32>
    %c4_i32 = arith.constant 4 : i32
    %4 = vector.broadcast %c4_i32 : i32 to vector<1x512xi32>
    %5 = arith.shrsi %1, %4 : vector<1x512xi32>
    %c15_i32_1 = arith.constant 15 : i32
    %6 = vector.broadcast %c15_i32_1 : i32 to vector<1x512xi32>
    %7 = arith.andi %5, %6 : vector<1x512xi32>
    %cst = arith.constant 0.000000e+00 : f32
    %8 = vector.broadcast %cst : f32 to vector<8x512xf32>
    %c17_i32 = arith.constant 17 : i32
    %9 = tpu.dynamic_rotate %0 by %c17_i32 dim 1 : vector<8x512xf32>, i32 -> vector<8x512xf32>
    %c-1_i32 = arith.constant -1 : i32
    %10 = vector.broadcast %c-1_i32 : i32 to vector<1x512xi32>
    %11 = arith.addi %7, %10 : vector<1x512xi32>
    %c0_i32 = arith.constant 0 : i32
    %12 = vector.broadcast %c0_i32 : i32 to vector<1x512xi32>
    %13 = arith.cmpi sge, %11, %12 : vector<1x512xi32>
    %c-1_i32_2 = arith.constant -1 : i32
    %14 = vector.broadcast %c-1_i32_2 : i32 to vector<1x512xi32>
    %15 = arith.addi %7, %14 : vector<1x512xi32>
    %c16_i32 = arith.constant 16 : i32
    %16 = vector.broadcast %c16_i32 : i32 to vector<1x512xi32>
    %17 = arith.cmpi slt, %15, %16 : vector<1x512xi32>
    %18 = arith.andi %13, %17 : vector<1x512xi1>
    %c-1_i32_3 = arith.constant -1 : i32
    %19 = vector.broadcast %c-1_i32_3 : i32 to vector<1x512xi32>
    %20 = arith.addi %3, %19 : vector<1x512xi32>
    %c0_i32_4 = arith.constant 0 : i32
    %21 = vector.broadcast %c0_i32_4 : i32 to vector<1x512xi32>
    %22 = arith.cmpi sge, %20, %21 : vector<1x512xi32>
    %23 = arith.andi %18, %22 : vector<1x512xi1>
    %c-1_i32_5 = arith.constant -1 : i32
    %24 = vector.broadcast %c-1_i32_5 : i32 to vector<1x512xi32>
    %25 = arith.addi %3, %24 : vector<1x512xi32>
    %c16_i32_6 = arith.constant 16 : i32
    %26 = vector.broadcast %c16_i32_6 : i32 to vector<1x512xi32>
    %27 = arith.cmpi slt, %25, %26 : vector<1x512xi32>
    %28 = arith.andi %23, %27 : vector<1x512xi1>
    %cst_7 = arith.constant 0.000000e+00 : f32
    %29 = vector.shape_cast %28 : vector<1x512xi1> to vector<1x512xi1>
    %30 = vector.broadcast %29 : vector<1x512xi1> to vector<8x512xi1>
    %31 = vector.broadcast %cst_7 : f32 to vector<8x512xf32>
    %32 = arith.select %30, %9, %31 : vector<8x512xi1>, vector<8x512xf32>
    %c0_8 = arith.constant 0 : index
    %c0_9 = arith.constant 0 : index
    %33 = vector.load %arg2[%c0_8, %c0_9] : memref<280x128xf32, #tpu.memory_space<vmem>>, vector<8x8xf32>
    %cst_10 = arith.constant dense<0.000000e+00> : vector<8x512xf32>
    %34 = tpu.matmul %33, %32, %cst_10 {dimension_numbers = #tpu.dot_dimension_numbers<[1], [0], [0], [1], [0, 0, 1, 1], [], []>} : vector<8x8xf32>, vector<8x512xf32>, vector<8x512xf32> -> vector<8x512xf32>
    %35 = arith.addf %8, %34 : vector<8x512xf32>
    %c16_i32_11 = arith.constant 16 : i32
    %36 = tpu.dynamic_rotate %0 by %c16_i32_11 dim 1 : vector<8x512xf32>, i32 -> vector<8x512xf32>
    %c-1_i32_12 = arith.constant -1 : i32
    %37 = vector.broadcast %c-1_i32_12 : i32 to vector<1x512xi32>
    %38 = arith.addi %7, %37 : vector<1x512xi32>
    %c0_i32_13 = arith.constant 0 : i32
    %39 = vector.broadcast %c0_i32_13 : i32 to vector<1x512xi32>
    %40 = arith.cmpi sge, %38, %39 : vector<1x512xi32>
    %c-1_i32_14 = arith.constant -1 : i32
    %41 = vector.broadcast %c-1_i32_14 : i32 to vector<1x512xi32>
    %42 = arith.addi %7, %41 : vector<1x512xi32>
    %c16_i32_15 = arith.constant 16 : i32
    %43 = vector.broadcast %c16_i32_15 : i32 to vector<1x512xi32>
    %44 = arith.cmpi slt, %42, %43 : vector<1x512xi32>
    %45 = arith.andi %40, %44 : vector<1x512xi1>
    %c0_i32_16 = arith.constant 0 : i32
    %46 = vector.broadcast %c0_i32_16 : i32 to vector<1x512xi32>
    %47 = arith.addi %3, %46 : vector<1x512xi32>
    %c0_i32_17 = arith.constant 0 : i32
    %48 = vector.broadcast %c0_i32_17 : i32 to vector<1x512xi32>
    %49 = arith.cmpi sge, %47, %48 : vector<1x512xi32>
    %50 = arith.andi %45, %49 : vector<1x512xi1>
    %c0_i32_18 = arith.constant 0 : i32
    %51 = vector.broadcast %c0_i32_18 : i32 to vector<1x512xi32>
    %52 = arith.addi %3, %51 : vector<1x512xi32>
    %c16_i32_19 = arith.constant 16 : i32
    %53 = vector.broadcast %c16_i32_19 : i32 to vector<1x512xi32>
    %54 = arith.cmpi slt, %52, %53 : vector<1x512xi32>
    %55 = arith.andi %50, %54 : vector<1x512xi1>
    %cst_20 = arith.constant 0.000000e+00 : f32
    %56 = vector.shape_cast %55 : vector<1x512xi1> to vector<1x512xi1>
    %57 = vector.broadcast %56 : vector<1x512xi1> to vector<8x512xi1>
    %58 = vector.broadcast %cst_20 : f32 to vector<8x512xf32>
    %59 = arith.select %57, %36, %58 : vector<8x512xi1>, vector<8x512xf32>
    %c8 = arith.constant 8 : index
    %c0_21 = arith.constant 0 : index
    %60 = vector.load %arg2[%c8, %c0_21] : memref<280x128xf32, #tpu.memory_space<vmem>>, vector<8x8xf32>
    %cst_22 = arith.constant dense<0.000000e+00> : vector<8x512xf32>
    %61 = tpu.matmul %60, %59, %cst_22 {dimension_numbers = #tpu.dot_dimension_numbers<[1], [0], [0], [1], [0, 0, 1, 1], [], []>} : vector<8x8xf32>, vector<8x512xf32>, vector<8x512xf32> -> vector<8x512xf32>
    %62 = arith.addf %35, %61 : vector<8x512xf32>
    %c15_i32_23 = arith.constant 15 : i32
    %63 = tpu.dynamic_rotate %0 by %c15_i32_23 dim 1 : vector<8x512xf32>, i32 -> vector<8x512xf32>
    %c-1_i32_24 = arith.constant -1 : i32
    %64 = vector.broadcast %c-1_i32_24 : i32 to vector<1x512xi32>
    %65 = arith.addi %7, %64 : vector<1x512xi32>
    %c0_i32_25 = arith.constant 0 : i32
    %66 = vector.broadcast %c0_i32_25 : i32 to vector<1x512xi32>
    %67 = arith.cmpi sge, %65, %66 : vector<1x512xi32>
    %c-1_i32_26 = arith.constant -1 : i32
    %68 = vector.broadcast %c-1_i32_26 : i32 to vector<1x512xi32>
    %69 = arith.addi %7, %68 : vector<1x512xi32>
    %c16_i32_27 = arith.constant 16 : i32
    %70 = vector.broadcast %c16_i32_27 : i32 to vector<1x512xi32>
    %71 = arith.cmpi slt, %69, %70 : vector<1x512xi32>
    %72 = arith.andi %67, %71 : vector<1x512xi1>
    %c1_i32 = arith.constant 1 : i32
    %73 = vector.broadcast %c1_i32 : i32 to vector<1x512xi32>
    %74 = arith.addi %3, %73 : vector<1x512xi32>
    %c0_i32_28 = arith.constant 0 : i32
    %75 = vector.broadcast %c0_i32_28 : i32 to vector<1x512xi32>
    %76 = arith.cmpi sge, %74, %75 : vector<1x512xi32>
    %77 = arith.andi %72, %76 : vector<1x512xi1>
    %c1_i32_29 = arith.constant 1 : i32
    %78 = vector.broadcast %c1_i32_29 : i32 to vector<1x512xi32>
    %79 = arith.addi %3, %78 : vector<1x512xi32>
    %c16_i32_30 = arith.constant 16 : i32
    %80 = vector.broadcast %c16_i32_30 : i32 to vector<1x512xi32>
    %81 = arith.cmpi slt, %79, %80 : vector<1x512xi32>
    %82 = arith.andi %77, %81 : vector<1x512xi1>
    %cst_31 = arith.constant 0.000000e+00 : f32
    %83 = vector.shape_cast %82 : vector<1x512xi1> to vector<1x512xi1>
    %84 = vector.broadcast %83 : vector<1x512xi1> to vector<8x512xi1>
    %85 = vector.broadcast %cst_31 : f32 to vector<8x512xf32>
    %86 = arith.select %84, %63, %85 : vector<8x512xi1>, vector<8x512xf32>
    %c16 = arith.constant 16 : index
    %c0_32 = arith.constant 0 : index
    %87 = vector.load %arg2[%c16, %c0_32] : memref<280x128xf32, #tpu.memory_space<vmem>>, vector<8x8xf32>
    %cst_33 = arith.constant dense<0.000000e+00> : vector<8x512xf32>
    %88 = tpu.matmul %87, %86, %cst_33 {dimension_numbers = #tpu.dot_dimension_numbers<[1], [0], [0], [1], [0, 0, 1, 1], [], []>} : vector<8x8xf32>, vector<8x512xf32>, vector<8x512xf32> -> vector<8x512xf32>
    %89 = arith.addf %62, %88 : vector<8x512xf32>
    %c1_i32_34 = arith.constant 1 : i32
    %90 = tpu.dynamic_rotate %0 by %c1_i32_34 dim 1 : vector<8x512xf32>, i32 -> vector<8x512xf32>
    %c0_i32_35 = arith.constant 0 : i32
    %91 = vector.broadcast %c0_i32_35 : i32 to vector<1x512xi32>
    %92 = arith.addi %7, %91 : vector<1x512xi32>
    %c0_i32_36 = arith.constant 0 : i32
    %93 = vector.broadcast %c0_i32_36 : i32 to vector<1x512xi32>
    %94 = arith.cmpi sge, %92, %93 : vector<1x512xi32>
    %c0_i32_37 = arith.constant 0 : i32
    %95 = vector.broadcast %c0_i32_37 : i32 to vector<1x512xi32>
    %96 = arith.addi %7, %95 : vector<1x512xi32>
    %c16_i32_38 = arith.constant 16 : i32
    %97 = vector.broadcast %c16_i32_38 : i32 to vector<1x512xi32>
    %98 = arith.cmpi slt, %96, %97 : vector<1x512xi32>
    %99 = arith.andi %94, %98 : vector<1x512xi1>
    %c-1_i32_39 = arith.constant -1 : i32
    %100 = vector.broadcast %c-1_i32_39 : i32 to vector<1x512xi32>
    %101 = arith.addi %3, %100 : vector<1x512xi32>
    %c0_i32_40 = arith.constant 0 : i32
    %102 = vector.broadcast %c0_i32_40 : i32 to vector<1x512xi32>
    %103 = arith.cmpi sge, %101, %102 : vector<1x512xi32>
    %104 = arith.andi %99, %103 : vector<1x512xi1>
    %c-1_i32_41 = arith.constant -1 : i32
    %105 = vector.broadcast %c-1_i32_41 : i32 to vector<1x512xi32>
    %106 = arith.addi %3, %105 : vector<1x512xi32>
    %c16_i32_42 = arith.constant 16 : i32
    %107 = vector.broadcast %c16_i32_42 : i32 to vector<1x512xi32>
    %108 = arith.cmpi slt, %106, %107 : vector<1x512xi32>
    %109 = arith.andi %104, %108 : vector<1x512xi1>
    %cst_43 = arith.constant 0.000000e+00 : f32
    %110 = vector.shape_cast %109 : vector<1x512xi1> to vector<1x512xi1>
    %111 = vector.broadcast %110 : vector<1x512xi1> to vector<8x512xi1>
    %112 = vector.broadcast %cst_43 : f32 to vector<8x512xf32>
    %113 = arith.select %111, %90, %112 : vector<8x512xi1>, vector<8x512xf32>
    %c24 = arith.constant 24 : index
    %c0_44 = arith.constant 0 : index
    %114 = vector.load %arg2[%c24, %c0_44] : memref<280x128xf32, #tpu.memory_space<vmem>>, vector<8x8xf32>
    %cst_45 = arith.constant dense<0.000000e+00> : vector<8x512xf32>
    %115 = tpu.matmul %114, %113, %cst_45 {dimension_numbers = #tpu.dot_dimension_numbers<[1], [0], [0], [1], [0, 0, 1, 1], [], []>} : vector<8x8xf32>, vector<8x512xf32>, vector<8x512xf32> -> vector<8x512xf32>
    %116 = arith.addf %89, %115 : vector<8x512xf32>
    %c0_i32_46 = arith.constant 0 : i32
    %117 = vector.broadcast %c0_i32_46 : i32 to vector<1x512xi32>
    %118 = arith.addi %7, %117 : vector<1x512xi32>
    %c0_i32_47 = arith.constant 0 : i32
    %119 = vector.broadcast %c0_i32_47 : i32 to vector<1x512xi32>
    %120 = arith.cmpi sge, %118, %119 : vector<1x512xi32>
    %c0_i32_48 = arith.constant 0 : i32
    %121 = vector.broadcast %c0_i32_48 : i32 to vector<1x512xi32>
    %122 = arith.addi %7, %121 : vector<1x512xi32>
    %c16_i32_49 = arith.constant 16 : i32
    %123 = vector.broadcast %c16_i32_49 : i32 to vector<1x512xi32>
    %124 = arith.cmpi slt, %122, %123 : vector<1x512xi32>
    %125 = arith.andi %120, %124 : vector<1x512xi1>
    %c0_i32_50 = arith.constant 0 : i32
    %126 = vector.broadcast %c0_i32_50 : i32 to vector<1x512xi32>
    %127 = arith.addi %3, %126 : vector<1x512xi32>
    %c0_i32_51 = arith.constant 0 : i32
    %128 = vector.broadcast %c0_i32_51 : i32 to vector<1x512xi32>
    %129 = arith.cmpi sge, %127, %128 : vector<1x512xi32>
    %130 = arith.andi %125, %129 : vector<1x512xi1>
    %c0_i32_52 = arith.constant 0 : i32
    %131 = vector.broadcast %c0_i32_52 : i32 to vector<1x512xi32>
    %132 = arith.addi %3, %131 : vector<1x512xi32>
    %c16_i32_53 = arith.constant 16 : i32
    %133 = vector.broadcast %c16_i32_53 : i32 to vector<1x512xi32>
    %134 = arith.cmpi slt, %132, %133 : vector<1x512xi32>
    %135 = arith.andi %130, %134 : vector<1x512xi1>
    %cst_54 = arith.constant 0.000000e+00 : f32
    %136 = vector.shape_cast %135 : vector<1x512xi1> to vector<1x512xi1>
    %137 = vector.broadcast %136 : vector<1x512xi1> to vector<8x512xi1>
    %138 = vector.broadcast %cst_54 : f32 to vector<8x512xf32>
    %139 = arith.select %137, %0, %138 : vector<8x512xi1>, vector<8x512xf32>
    %c32 = arith.constant 32 : index
    %c0_55 = arith.constant 0 : index
    %140 = vector.load %arg2[%c32, %c0_55] : memref<280x128xf32, #tpu.memory_space<vmem>>, vector<8x8xf32>
    %cst_56 = arith.constant dense<0.000000e+00> : vector<8x512xf32>
    %141 = tpu.matmul %140, %139, %cst_56 {dimension_numbers = #tpu.dot_dimension_numbers<[1], [0], [0], [1], [0, 0, 1, 1], [], []>} : vector<8x8xf32>, vector<8x512xf32>, vector<8x512xf32> -> vector<8x512xf32>
    %142 = arith.addf %116, %141 : vector<8x512xf32>
    %c511_i32 = arith.constant 511 : i32
    %143 = tpu.dynamic_rotate %0 by %c511_i32 dim 1 : vector<8x512xf32>, i32 -> vector<8x512xf32>
    %c0_i32_57 = arith.constant 0 : i32
    %144 = vector.broadcast %c0_i32_57 : i32 to vector<1x512xi32>
    %145 = arith.addi %7, %144 : vector<1x512xi32>
    %c0_i32_58 = arith.constant 0 : i32
    %146 = vector.broadcast %c0_i32_58 : i32 to vector<1x512xi32>
    %147 = arith.cmpi sge, %145, %146 : vector<1x512xi32>
    %c0_i32_59 = arith.constant 0 : i32
    %148 = vector.broadcast %c0_i32_59 : i32 to vector<1x512xi32>
    %149 = arith.addi %7, %148 : vector<1x512xi32>
    %c16_i32_60 = arith.constant 16 : i32
    %150 = vector.broadcast %c16_i32_60 : i32 to vector<1x512xi32>
    %151 = arith.cmpi slt, %149, %150 : vector<1x512xi32>
    %152 = arith.andi %147, %151 : vector<1x512xi1>
    %c1_i32_61 = arith.constant 1 : i32
    %153 = vector.broadcast %c1_i32_61 : i32 to vector<1x512xi32>
    %154 = arith.addi %3, %153 : vector<1x512xi32>
    %c0_i32_62 = arith.constant 0 : i32
    %155 = vector.broadcast %c0_i32_62 : i32 to vector<1x512xi32>
    %156 = arith.cmpi sge, %154, %155 : vector<1x512xi32>
    %157 = arith.andi %152, %156 : vector<1x512xi1>
    %c1_i32_63 = arith.constant 1 : i32
    %158 = vector.broadcast %c1_i32_63 : i32 to vector<1x512xi32>
    %159 = arith.addi %3, %158 : vector<1x512xi32>
    %c16_i32_64 = arith.constant 16 : i32
    %160 = vector.broadcast %c16_i32_64 : i32 to vector<1x512xi32>
    %161 = arith.cmpi slt, %159, %160 : vector<1x512xi32>
    %162 = arith.andi %157, %161 : vector<1x512xi1>
    %cst_65 = arith.constant 0.000000e+00 : f32
    %163 = vector.shape_cast %162 : vector<1x512xi1> to vector<1x512xi1>
    %164 = vector.broadcast %163 : vector<1x512xi1> to vector<8x512xi1>
    %165 = vector.broadcast %cst_65 : f32 to vector<8x512xf32>
    %166 = arith.select %164, %143, %165 : vector<8x512xi1>, vector<8x512xf32>
    %c40 = arith.constant 40 : index
    %c0_66 = arith.constant 0 : index
    %167 = vector.load %arg2[%c40, %c0_66] : memref<280x128xf32, #tpu.memory_space<vmem>>, vector<8x8xf32>
    %cst_67 = arith.constant dense<0.000000e+00> : vector<8x512xf32>
    %168 = tpu.matmul %167, %166, %cst_67 {dimension_numbers = #tpu.dot_dimension_numbers<[1], [0], [0], [1], [0, 0, 1, 1], [], []>} : vector<8x8xf32>, vector<8x512xf32>, vector<8x512xf32> -> vector<8x512xf32>
    %169 = arith.addf %142, %168 : vector<8x512xf32>
    %c497_i32 = arith.constant 497 : i32
    %170 = tpu.dynamic_rotate %0 by %c497_i32 dim 1 : vector<8x512xf32>, i32 -> vector<8x512xf32>
    %c1_i32_68 = arith.constant 1 : i32
    %171 = vector.broadcast %c1_i32_68 : i32 to vector<1x512xi32>
    %172 = arith.addi %7, %171 : vector<1x512xi32>
    %c0_i32_69 = arith.constant 0 : i32
    %173 = vector.broadcast %c0_i32_69 : i32 to vector<1x512xi32>
    %174 = arith.cmpi sge, %172, %173 : vector<1x512xi32>
    %c1_i32_70 = arith.constant 1 : i32
    %175 = vector.broadcast %c1_i32_70 : i32 to vector<1x512xi32>
    %176 = arith.addi %7, %175 : vector<1x512xi32>
    %c16_i32_71 = arith.constant 16 : i32
    %177 = vector.broadcast %c16_i32_71 : i32 to vector<1x512xi32>
    %178 = arith.cmpi slt, %176, %177 : vector<1x512xi32>
    %179 = arith.andi %174, %178 : vector<1x512xi1>
    %c-1_i32_72 = arith.constant -1 : i32
    %180 = vector.broadcast %c-1_i32_72 : i32 to vector<1x512xi32>
    %181 = arith.addi %3, %180 : vector<1x512xi32>
    %c0_i32_73 = arith.constant 0 : i32
    %182 = vector.broadcast %c0_i32_73 : i32 to vector<1x512xi32>
    %183 = arith.cmpi sge, %181, %182 : vector<1x512xi32>
    %184 = arith.andi %179, %183 : vector<1x512xi1>
    %c-1_i32_74 = arith.constant -1 : i32
    %185 = vector.broadcast %c-1_i32_74 : i32 to vector<1x512xi32>
    %186 = arith.addi %3, %185 : vector<1x512xi32>
    %c16_i32_75 = arith.constant 16 : i32
    %187 = vector.broadcast %c16_i32_75 : i32 to vector<1x512xi32>
    %188 = arith.cmpi slt, %186, %187 : vector<1x512xi32>
    %189 = arith.andi %184, %188 : vector<1x512xi1>
    %cst_76 = arith.constant 0.000000e+00 : f32
    %190 = vector.shape_cast %189 : vector<1x512xi1> to vector<1x512xi1>
    %191 = vector.broadcast %190 : vector<1x512xi1> to vector<8x512xi1>
    %192 = vector.broadcast %cst_76 : f32 to vector<8x512xf32>
    %193 = arith.select %191, %170, %192 : vector<8x512xi1>, vector<8x512xf32>
    %c48 = arith.constant 48 : index
    %c0_77 = arith.constant 0 : index
    %194 = vector.load %arg2[%c48, %c0_77] : memref<280x128xf32, #tpu.memory_space<vmem>>, vector<8x8xf32>
    %cst_78 = arith.constant dense<0.000000e+00> : vector<8x512xf32>
    %195 = tpu.matmul %194, %193, %cst_78 {dimension_numbers = #tpu.dot_dimension_numbers<[1], [0], [0], [1], [0, 0, 1, 1], [], []>} : vector<8x8xf32>, vector<8x512xf32>, vector<8x512xf32> -> vector<8x512xf32>
    %196 = arith.addf %169, %195 : vector<8x512xf32>
    %c496_i32 = arith.constant 496 : i32
    %197 = tpu.dynamic_rotate %0 by %c496_i32 dim 1 : vector<8x512xf32>, i32 -> vector<8x512xf32>
    %c1_i32_79 = arith.constant 1 : i32
    %198 = vector.broadcast %c1_i32_79 : i32 to vector<1x512xi32>
    %199 = arith.addi %7, %198 : vector<1x512xi32>
    %c0_i32_80 = arith.constant 0 : i32
    %200 = vector.broadcast %c0_i32_80 : i32 to vector<1x512xi32>
    %201 = arith.cmpi sge, %199, %200 : vector<1x512xi32>
    %c1_i32_81 = arith.constant 1 : i32
    %202 = vector.broadcast %c1_i32_81 : i32 to vector<1x512xi32>
    %203 = arith.addi %7, %202 : vector<1x512xi32>
    %c16_i32_82 = arith.constant 16 : i32
    %204 = vector.broadcast %c16_i32_82 : i32 to vector<1x512xi32>
    %205 = arith.cmpi slt, %203, %204 : vector<1x512xi32>
    %206 = arith.andi %201, %205 : vector<1x512xi1>
    %c0_i32_83 = arith.constant 0 : i32
    %207 = vector.broadcast %c0_i32_83 : i32 to vector<1x512xi32>
    %208 = arith.addi %3, %207 : vector<1x512xi32>
    %c0_i32_84 = arith.constant 0 : i32
    %209 = vector.broadcast %c0_i32_84 : i32 to vector<1x512xi32>
    %210 = arith.cmpi sge, %208, %209 : vector<1x512xi32>
    %211 = arith.andi %206, %210 : vector<1x512xi1>
    %c0_i32_85 = arith.constant 0 : i32
    %212 = vector.broadcast %c0_i32_85 : i32 to vector<1x512xi32>
    %213 = arith.addi %3, %212 : vector<1x512xi32>
    %c16_i32_86 = arith.constant 16 : i32
    %214 = vector.broadcast %c16_i32_86 : i32 to vector<1x512xi32>
    %215 = arith.cmpi slt, %213, %214 : vector<1x512xi32>
    %216 = arith.andi %211, %215 : vector<1x512xi1>
    %cst_87 = arith.constant 0.000000e+00 : f32
    %217 = vector.shape_cast %216 : vector<1x512xi1> to vector<1x512xi1>
    %218 = vector.broadcast %217 : vector<1x512xi1> to vector<8x512xi1>
    %219 = vector.broadcast %cst_87 : f32 to vector<8x512xf32>
    %220 = arith.select %218, %197, %219 : vector<8x512xi1>, vector<8x512xf32>
    %c56 = arith.constant 56 : index
    %c0_88 = arith.constant 0 : index
    %221 = vector.load %arg2[%c56, %c0_88] : memref<280x128xf32, #tpu.memory_space<vmem>>, vector<8x8xf32>
    %cst_89 = arith.constant dense<0.000000e+00> : vector<8x512xf32>
    %222 = tpu.matmul %221, %220, %cst_89 {dimension_numbers = #tpu.dot_dimension_numbers<[1], [0], [0], [1], [0, 0, 1, 1], [], []>} : vector<8x8xf32>, vector<8x512xf32>, vector<8x512xf32> -> vector<8x512xf32>
    %223 = arith.addf %196, %222 : vector<8x512xf32>
    %c495_i32 = arith.constant 495 : i32
    %224 = tpu.dynamic_rotate %0 by %c495_i32 dim 1 : vector<8x512xf32>, i32 -> vector<8x512xf32>
    %c1_i32_90 = arith.constant 1 : i32
    %225 = vector.broadcast %c1_i32_90 : i32 to vector<1x512xi32>
    %226 = arith.addi %7, %225 : vector<1x512xi32>
    %c0_i32_91 = arith.constant 0 : i32
    %227 = vector.broadcast %c0_i32_91 : i32 to vector<1x512xi32>
    %228 = arith.cmpi sge, %226, %227 : vector<1x512xi32>
    %c1_i32_92 = arith.constant 1 : i32
    %229 = vector.broadcast %c1_i32_92 : i32 to vector<1x512xi32>
    %230 = arith.addi %7, %229 : vector<1x512xi32>
    %c16_i32_93 = arith.constant 16 : i32
    %231 = vector.broadcast %c16_i32_93 : i32 to vector<1x512xi32>
    %232 = arith.cmpi slt, %230, %231 : vector<1x512xi32>
    %233 = arith.andi %228, %232 : vector<1x512xi1>
    %c1_i32_94 = arith.constant 1 : i32
    %234 = vector.broadcast %c1_i32_94 : i32 to vector<1x512xi32>
    %235 = arith.addi %3, %234 : vector<1x512xi32>
    %c0_i32_95 = arith.constant 0 : i32
    %236 = vector.broadcast %c0_i32_95 : i32 to vector<1x512xi32>
    %237 = arith.cmpi sge, %235, %236 : vector<1x512xi32>
    %238 = arith.andi %233, %237 : vector<1x512xi1>
    %c1_i32_96 = arith.constant 1 : i32
    %239 = vector.broadcast %c1_i32_96 : i32 to vector<1x512xi32>
    %240 = arith.addi %3, %239 : vector<1x512xi32>
    %c16_i32_97 = arith.constant 16 : i32
    %241 = vector.broadcast %c16_i32_97 : i32 to vector<1x512xi32>
    %242 = arith.cmpi slt, %240, %241 : vector<1x512xi32>
    %243 = arith.andi %238, %242 : vector<1x512xi1>
    %cst_98 = arith.constant 0.000000e+00 : f32
    %244 = vector.shape_cast %243 : vector<1x512xi1> to vector<1x512xi1>
    %245 = vector.broadcast %244 : vector<1x512xi1> to vector<8x512xi1>
    %246 = vector.broadcast %cst_98 : f32 to vector<8x512xf32>
    %247 = arith.select %245, %224, %246 : vector<8x512xi1>, vector<8x512xf32>
    %c64 = arith.constant 64 : index
    %c0_99 = arith.constant 0 : index
    %248 = vector.load %arg2[%c64, %c0_99] : memref<280x128xf32, #tpu.memory_space<vmem>>, vector<8x8xf32>
    %cst_100 = arith.constant dense<0.000000e+00> : vector<8x512xf32>
    %249 = tpu.matmul %248, %247, %cst_100 {dimension_numbers = #tpu.dot_dimension_numbers<[1], [0], [0], [1], [0, 0, 1, 1], [], []>} : vector<8x8xf32>, vector<8x512xf32>, vector<8x512xf32> -> vector<8x512xf32>
    %250 = arith.addf %223, %249 : vector<8x512xf32>
    %c72 = arith.constant 72 : index
    %c0_101 = arith.constant 0 : index
    %251 = vector.load %arg2[%c72, %c0_101] : memref<280x128xf32, #tpu.memory_space<vmem>>, vector<8x1xf32>
    %252 = vector.broadcast %251 : vector<8x1xf32> to vector<8x512xf32>
    %253 = arith.addf %250, %252 : vector<8x512xf32>
    %cst_102 = arith.constant 0.000000e+00 : f32
    %254 = vector.broadcast %cst_102 : f32 to vector<8x512xf32>
    %255 = arith.maximumf %253, %254 : vector<8x512xf32>
    %256 = vector.extract_strided_slice %255 {offsets = [0, 0], sizes = [8, 256], strides = [1, 1]} : vector<8x512xf32> to vector<8x256xf32>
    %cst_103 = arith.constant dense<0.000000e+00> : vector<8xf32>
    %257 = vector.multi_reduction <add>, %256, %cst_103 [1] : vector<8x256xf32> to vector<8xf32>
    %258 = vector.shape_cast %257 : vector<8xf32> to vector<8x1xf32>
    %259 = vector.extract_strided_slice %255 {offsets = [0, 256], sizes = [8, 256], strides = [1, 1]} : vector<8x512xf32> to vector<8x256xf32>
    %cst_104 = arith.constant dense<0.000000e+00> : vector<8xf32>
    %260 = vector.multi_reduction <add>, %259, %cst_104 [1] : vector<8x256xf32> to vector<8xf32>
    %261 = vector.shape_cast %260 : vector<8xf32> to vector<8x1xf32>
    %262 = tpu.concatenate %258, %261 in 1 : vector<8x1xf32>, vector<8x1xf32> -> vector<8x2xf32>
    %cst_105 = arith.constant 3.906250e-03 : f32
    %263 = vector.broadcast %cst_105 : f32 to vector<8x2xf32>
    %264 = arith.mulf %262, %263 : vector<8x2xf32>
    %c80 = arith.constant 80 : index
    %c0_106 = arith.constant 0 : index
    %265 = vector.load %arg2[%c80, %c0_106] : memref<280x128xf32, #tpu.memory_space<vmem>>, vector<32x8xf32>
    %c112 = arith.constant 112 : index
    %c0_107 = arith.constant 0 : index
    %266 = vector.load %arg2[%c112, %c0_107] : memref<280x128xf32, #tpu.memory_space<vmem>>, vector<32x1xf32>
    %cst_108 = arith.constant dense<0.000000e+00> : vector<32x2xf32>
    %267 = tpu.matmul %265, %264, %cst_108 {dimension_numbers = #tpu.dot_dimension_numbers<[1], [0], [0], [1], [0, 0, 1, 1], [], []>} : vector<32x8xf32>, vector<8x2xf32>, vector<32x2xf32> -> vector<32x2xf32>
    %268 = vector.broadcast %266 : vector<32x1xf32> to vector<32x2xf32>
    %269 = arith.addf %267, %268 : vector<32x2xf32>
    %c0_109 = arith.constant 0 : index
    %c0_110 = arith.constant 0 : index
    %270 = vector.load %arg3[%c0_109, %c0_110] : memref<16x128xf32, #tpu.memory_space<vmem>>, vector<1x2xf32>
    %c112_111 = arith.constant 112 : index
    %c1 = arith.constant 1 : index
    %271 = vector.load %arg2[%c112_111, %c1] : memref<280x128xf32, #tpu.memory_space<vmem>>, vector<32x1xf32>
    %c112_112 = arith.constant 112 : index
    %c2 = arith.constant 2 : index
    %272 = vector.load %arg2[%c112_112, %c2] : memref<280x128xf32, #tpu.memory_space<vmem>>, vector<32x1xf32>
    %273 = vector.broadcast %271 : vector<32x1xf32> to vector<32x2xf32>
    %274 = vector.broadcast %270 : vector<1x2xf32> to vector<32x2xf32>
    %275 = arith.mulf %273, %274 : vector<32x2xf32>
    %276 = vector.broadcast %272 : vector<32x1xf32> to vector<32x2xf32>
    %277 = arith.addf %275, %276 : vector<32x2xf32>
    %cst_113 = arith.constant 0.000000e+00 : f32
    %278 = vector.broadcast %cst_113 : f32 to vector<32x2xf32>
    %279 = arith.maximumf %277, %278 : vector<32x2xf32>
    %c112_114 = arith.constant 112 : index
    %c3 = arith.constant 3 : index
    %280 = vector.load %arg2[%c112_114, %c3] : memref<280x128xf32, #tpu.memory_space<vmem>>, vector<32x1xf32>
    %c112_115 = arith.constant 112 : index
    %c4 = arith.constant 4 : index
    %281 = vector.load %arg2[%c112_115, %c4] : memref<280x128xf32, #tpu.memory_space<vmem>>, vector<32x1xf32>
    %c1_116 = arith.constant 1 : index
    %c0_117 = arith.constant 0 : index
    %282 = vector.load %arg3[%c1_116, %c0_117] : memref<16x128xf32, #tpu.memory_space<vmem>>, vector<1x2xf32>
    %283 = vector.broadcast %281 : vector<32x1xf32> to vector<32x2xf32>
    %284 = vector.broadcast %282 : vector<1x2xf32> to vector<32x2xf32>
    %285 = arith.mulf %283, %284 : vector<32x2xf32>
    %286 = vector.broadcast %280 : vector<32x1xf32> to vector<32x2xf32>
    %287 = arith.addf %286, %285 : vector<32x2xf32>
    %c112_118 = arith.constant 112 : index
    %c5 = arith.constant 5 : index
    %288 = vector.load %arg2[%c112_118, %c5] : memref<280x128xf32, #tpu.memory_space<vmem>>, vector<32x1xf32>
    %c2_119 = arith.constant 2 : index
    %c0_120 = arith.constant 0 : index
    %289 = vector.load %arg3[%c2_119, %c0_120] : memref<16x128xf32, #tpu.memory_space<vmem>>, vector<1x2xf32>
    %290 = vector.broadcast %288 : vector<32x1xf32> to vector<32x2xf32>
    %291 = vector.broadcast %289 : vector<1x2xf32> to vector<32x2xf32>
    %292 = arith.mulf %290, %291 : vector<32x2xf32>
    %293 = arith.addf %287, %292 : vector<32x2xf32>
    %c112_121 = arith.constant 112 : index
    %c6 = arith.constant 6 : index
    %294 = vector.load %arg2[%c112_121, %c6] : memref<280x128xf32, #tpu.memory_space<vmem>>, vector<32x1xf32>
    %c3_122 = arith.constant 3 : index
    %c0_123 = arith.constant 0 : index
    %295 = vector.load %arg3[%c3_122, %c0_123] : memref<16x128xf32, #tpu.memory_space<vmem>>, vector<1x2xf32>
    %296 = vector.broadcast %294 : vector<32x1xf32> to vector<32x2xf32>
    %297 = vector.broadcast %295 : vector<1x2xf32> to vector<32x2xf32>
    %298 = arith.mulf %296, %297 : vector<32x2xf32>
    %299 = arith.addf %293, %298 : vector<32x2xf32>
    %c112_124 = arith.constant 112 : index
    %c7 = arith.constant 7 : index
    %300 = vector.load %arg2[%c112_124, %c7] : memref<280x128xf32, #tpu.memory_space<vmem>>, vector<32x1xf32>
    %c4_125 = arith.constant 4 : index
    %c0_126 = arith.constant 0 : index
    %301 = vector.load %arg3[%c4_125, %c0_126] : memref<16x128xf32, #tpu.memory_space<vmem>>, vector<1x2xf32>
    %302 = vector.broadcast %300 : vector<32x1xf32> to vector<32x2xf32>
    %303 = vector.broadcast %301 : vector<1x2xf32> to vector<32x2xf32>
    %304 = arith.mulf %302, %303 : vector<32x2xf32>
    %305 = arith.addf %299, %304 : vector<32x2xf32>
    %cst_127 = arith.constant 0.000000e+00 : f32
    %306 = vector.broadcast %cst_127 : f32 to vector<32x2xf32>
    %307 = arith.maximumf %305, %306 : vector<32x2xf32>
    %308 = tpu.concatenate %269, %279, %307 in 0 : vector<32x2xf32>, vector<32x2xf32>, vector<32x2xf32> -> vector<96x2xf32>
    %c144 = arith.constant 144 : index
    %c0_128 = arith.constant 0 : index
    %309 = vector.load %arg2[%c144, %c0_128] : memref<280x128xf32, #tpu.memory_space<vmem>>, vector<64x96xf32>
    %c208 = arith.constant 208 : index
    %c0_129 = arith.constant 0 : index
    %310 = vector.load %arg2[%c208, %c0_129] : memref<280x128xf32, #tpu.memory_space<vmem>>, vector<64x1xf32>
    %cst_130 = arith.constant dense<0.000000e+00> : vector<64x2xf32>
    %311 = tpu.matmul %309, %308, %cst_130 {dimension_numbers = #tpu.dot_dimension_numbers<[1], [0], [0], [1], [0, 0, 1, 1], [], []>} : vector<64x96xf32>, vector<96x2xf32>, vector<64x2xf32> -> vector<64x2xf32>
    %312 = vector.broadcast %310 : vector<64x1xf32> to vector<64x2xf32>
    %313 = arith.addf %311, %312 : vector<64x2xf32>
    %cst_131 = arith.constant 0.000000e+00 : f32
    %314 = vector.broadcast %cst_131 : f32 to vector<64x2xf32>
    %315 = arith.maximumf %313, %314 : vector<64x2xf32>
    %c272 = arith.constant 272 : index
    %c0_132 = arith.constant 0 : index
    %316 = vector.load %arg2[%c272, %c0_132] : memref<280x128xf32, #tpu.memory_space<vmem>>, vector<6x64xf32>
    %c208_133 = arith.constant 208 : index
    %c1_134 = arith.constant 1 : index
    %317 = vector.load %arg2[%c208_133, %c1_134] : memref<280x128xf32, #tpu.memory_space<vmem>>, vector<6x1xf32>
    %cst_135 = arith.constant dense<0.000000e+00> : vector<6x2xf32>
    %318 = tpu.matmul %316, %315, %cst_135 {dimension_numbers = #tpu.dot_dimension_numbers<[1], [0], [0], [1], [0, 0, 1, 1], [], []>} : vector<6x64xf32>, vector<64x2xf32>, vector<6x2xf32> -> vector<6x2xf32>
    %319 = vector.broadcast %317 : vector<6x1xf32> to vector<6x2xf32>
    %320 = arith.addf %318, %319 : vector<6x2xf32>
    %c5_136 = arith.constant 5 : index
    %c0_137 = arith.constant 0 : index
    %321 = vector.load %arg3[%c5_136, %c0_137] : memref<16x128xf32, #tpu.memory_space<vmem>>, vector<2x2xf32>
    %c7_138 = arith.constant 7 : index
    %c0_139 = arith.constant 0 : index
    %322 = vector.load %arg3[%c7_138, %c0_139] : memref<16x128xf32, #tpu.memory_space<vmem>>, vector<2x2xf32>
    %c9 = arith.constant 9 : index
    %c0_140 = arith.constant 0 : index
    %323 = vector.load %arg3[%c9, %c0_140] : memref<16x128xf32, #tpu.memory_space<vmem>>, vector<2x2xf32>
    %c11 = arith.constant 11 : index
    %c0_141 = arith.constant 0 : index
    %324 = vector.load %arg3[%c11, %c0_141] : memref<16x128xf32, #tpu.memory_space<vmem>>, vector<2x1xf32>
    %325 = tpu.iota {dimensions = array<i32: 0>} : vector<2x2xi32>
    %cst_142 = arith.constant 0.000000e+00 : f32
    %326 = vector.broadcast %cst_142 : f32 to vector<1x1xf32>
    %327 = vector.extract_strided_slice %320 {offsets = [0, 0], sizes = [2, 2], strides = [1, 1]} : vector<6x2xf32> to vector<2x2xf32>
    %cst_143 = arith.constant dense<0xFF800000> : vector<2xf32>
    %328 = vector.multi_reduction <maximumf>, %327, %cst_143 [0] : vector<2x2xf32> to vector<2xf32>
    %329 = vector.shape_cast %328 : vector<2xf32> to vector<1x2xf32>
    %330 = vector.broadcast %329 : vector<1x2xf32> to vector<2x2xf32>
    %331 = arith.subf %327, %330 : vector<2x2xf32>
    %332 = math.exp %331 : vector<2x2xf32>
    %cst_144 = arith.constant dense<0.000000e+00> : vector<2xf32>
    %333 = vector.multi_reduction <add>, %332, %cst_144 [0] : vector<2x2xf32> to vector<2xf32>
    %334 = vector.shape_cast %333 : vector<2xf32> to vector<1x2xf32>
    %335 = math.log %334 : vector<1x2xf32>
    %336 = arith.addf %329, %335 : vector<1x2xf32>
    %337 = vector.broadcast %336 : vector<1x2xf32> to vector<2x2xf32>
    %338 = arith.subf %327, %337 : vector<2x2xf32>
    %339 = vector.extract_strided_slice %321 {offsets = [0, 0], sizes = [1, 2], strides = [1, 1]} : vector<2x2xf32> to vector<1x2xf32>
    %340 = arith.fptosi %339 : vector<1x2xf32> to vector<1x2xi32>
    %341 = vector.broadcast %340 : vector<1x2xi32> to vector<2x2xi32>
    %342 = arith.cmpi eq, %325, %341 : vector<2x2xi32>
    %343 = arith.extui %342 : vector<2x2xi1> to vector<2x2xi32>
    %344 = arith.sitofp %343 : vector<2x2xi32> to vector<2x2xf32>
    %345 = arith.mulf %344, %338 : vector<2x2xf32>
    %cst_145 = arith.constant dense<0.000000e+00> : vector<2xf32>
    %346 = vector.multi_reduction <add>, %345, %cst_145 [0] : vector<2x2xf32> to vector<2xf32>
    %347 = vector.shape_cast %346 : vector<2xf32> to vector<1x2xf32>
    %cst_146 = arith.constant 0.000000e+00 : f32
    %348 = vector.broadcast %cst_146 : f32 to vector<1x2xf32>
    %349 = arith.subf %348, %347 : vector<1x2xf32>
    %350 = vector.extract_strided_slice %322 {offsets = [0, 0], sizes = [2, 1], strides = [1, 1]} : vector<2x2xf32> to vector<2x1xf32>
    %351 = vector.broadcast %350 : vector<2x1xf32> to vector<2x2xf32>
    %352 = arith.mulf %344, %351 : vector<2x2xf32>
    %cst_147 = arith.constant dense<0.000000e+00> : vector<2xf32>
    %353 = vector.multi_reduction <add>, %352, %cst_147 [0] : vector<2x2xf32> to vector<2xf32>
    %354 = vector.shape_cast %353 : vector<2xf32> to vector<1x2xf32>
    %355 = arith.mulf %354, %349 : vector<1x2xf32>
    %356 = vector.shape_cast %355 : vector<1x2xf32> to vector<1x1x2xf32>
    %cst_148 = arith.constant dense<0.000000e+00> : vector<1xf32>
    %357 = vector.multi_reduction <add>, %356, %cst_148 [1, 2] : vector<1x1x2xf32> to vector<1xf32>
    %358 = vector.shape_cast %357 : vector<1xf32> to vector<1x1x1xf32>
    %359 = vector.extract %358[0, 0, 0] : f32 from vector<1x1x1xf32>
    %360 = vector.broadcast %359 : f32 to vector<1x1xf32>
    %361 = vector.shape_cast %354 : vector<1x2xf32> to vector<1x1x2xf32>
    %cst_149 = arith.constant dense<0.000000e+00> : vector<1xf32>
    %362 = vector.multi_reduction <add>, %361, %cst_149 [1, 2] : vector<1x1x2xf32> to vector<1xf32>
    %363 = vector.shape_cast %362 : vector<1xf32> to vector<1x1x1xf32>
    %364 = vector.extract %363[0, 0, 0] : f32 from vector<1x1x1xf32>
    %365 = vector.broadcast %364 : f32 to vector<1x1xf32>
    %366 = arith.divf %360, %365 : vector<1x1xf32>
    %367 = arith.addf %326, %366 : vector<1x1xf32>
    %368 = vector.extract_strided_slice %320 {offsets = [2, 0], sizes = [2, 2], strides = [1, 1]} : vector<6x2xf32> to vector<2x2xf32>
    %cst_150 = arith.constant dense<0xFF800000> : vector<2xf32>
    %369 = vector.multi_reduction <maximumf>, %368, %cst_150 [0] : vector<2x2xf32> to vector<2xf32>
    %370 = vector.shape_cast %369 : vector<2xf32> to vector<1x2xf32>
    %371 = vector.broadcast %370 : vector<1x2xf32> to vector<2x2xf32>
    %372 = arith.subf %368, %371 : vector<2x2xf32>
    %373 = math.exp %372 : vector<2x2xf32>
    %cst_151 = arith.constant dense<0.000000e+00> : vector<2xf32>
    %374 = vector.multi_reduction <add>, %373, %cst_151 [0] : vector<2x2xf32> to vector<2xf32>
    %375 = vector.shape_cast %374 : vector<2xf32> to vector<1x2xf32>
    %376 = math.log %375 : vector<1x2xf32>
    %377 = arith.addf %370, %376 : vector<1x2xf32>
    %378 = vector.broadcast %377 : vector<1x2xf32> to vector<2x2xf32>
    %379 = arith.subf %368, %378 : vector<2x2xf32>
    %380 = vector.extract_strided_slice %321 {offsets = [1, 0], sizes = [1, 2], strides = [1, 1]} : vector<2x2xf32> to vector<1x2xf32>
    %381 = arith.fptosi %380 : vector<1x2xf32> to vector<1x2xi32>
    %382 = vector.broadcast %381 : vector<1x2xi32> to vector<2x2xi32>
    %383 = arith.cmpi eq, %325, %382 : vector<2x2xi32>
    %384 = arith.extui %383 : vector<2x2xi1> to vector<2x2xi32>
    %385 = arith.sitofp %384 : vector<2x2xi32> to vector<2x2xf32>
    %386 = arith.mulf %385, %379 : vector<2x2xf32>
    %cst_152 = arith.constant dense<0.000000e+00> : vector<2xf32>
    %387 = vector.multi_reduction <add>, %386, %cst_152 [0] : vector<2x2xf32> to vector<2xf32>
    %388 = vector.shape_cast %387 : vector<2xf32> to vector<1x2xf32>
    %cst_153 = arith.constant 0.000000e+00 : f32
    %389 = vector.broadcast %cst_153 : f32 to vector<1x2xf32>
    %390 = arith.subf %389, %388 : vector<1x2xf32>
    %391 = vector.extract_strided_slice %322 {offsets = [0, 1], sizes = [2, 1], strides = [1, 1]} : vector<2x2xf32> to vector<2x1xf32>
    %392 = vector.broadcast %391 : vector<2x1xf32> to vector<2x2xf32>
    %393 = arith.mulf %385, %392 : vector<2x2xf32>
    %cst_154 = arith.constant dense<0.000000e+00> : vector<2xf32>
    %394 = vector.multi_reduction <add>, %393, %cst_154 [0] : vector<2x2xf32> to vector<2xf32>
    %395 = vector.shape_cast %394 : vector<2xf32> to vector<1x2xf32>
    %396 = arith.mulf %395, %390 : vector<1x2xf32>
    %397 = vector.shape_cast %396 : vector<1x2xf32> to vector<1x1x2xf32>
    %cst_155 = arith.constant dense<0.000000e+00> : vector<1xf32>
    %398 = vector.multi_reduction <add>, %397, %cst_155 [1, 2] : vector<1x1x2xf32> to vector<1xf32>
    %399 = vector.shape_cast %398 : vector<1xf32> to vector<1x1x1xf32>
    %400 = vector.extract %399[0, 0, 0] : f32 from vector<1x1x1xf32>
    %401 = vector.broadcast %400 : f32 to vector<1x1xf32>
    %402 = vector.shape_cast %395 : vector<1x2xf32> to vector<1x1x2xf32>
    %cst_156 = arith.constant dense<0.000000e+00> : vector<1xf32>
    %403 = vector.multi_reduction <add>, %402, %cst_156 [1, 2] : vector<1x1x2xf32> to vector<1xf32>
    %404 = vector.shape_cast %403 : vector<1xf32> to vector<1x1x1xf32>
    %405 = vector.extract %404[0, 0, 0] : f32 from vector<1x1x1xf32>
    %406 = vector.broadcast %405 : f32 to vector<1x1xf32>
    %407 = arith.divf %401, %406 : vector<1x1xf32>
    %408 = arith.addf %367, %407 : vector<1x1xf32>
    %409 = vector.extract_strided_slice %320 {offsets = [4, 0], sizes = [2, 2], strides = [1, 1]} : vector<6x2xf32> to vector<2x2xf32>
    %410 = arith.subf %409, %323 : vector<2x2xf32>
    %411 = math.absf %410 : vector<2x2xf32>
    %412 = vector.broadcast %324 : vector<2x1xf32> to vector<2x2xf32>
    %413 = arith.mulf %411, %412 : vector<2x2xf32>
    %414 = vector.shape_cast %413 : vector<2x2xf32> to vector<1x2x2xf32>
    %cst_157 = arith.constant dense<0.000000e+00> : vector<1xf32>
    %415 = vector.multi_reduction <add>, %414, %cst_157 [1, 2] : vector<1x2x2xf32> to vector<1xf32>
    %416 = vector.shape_cast %415 : vector<1xf32> to vector<1x1x1xf32>
    %417 = vector.extract %416[0, 0, 0] : f32 from vector<1x1x1xf32>
    %418 = vector.broadcast %417 : f32 to vector<1x1xf32>
    %cst_158 = arith.constant 5.000000e-01 : f32
    %419 = vector.broadcast %cst_158 : f32 to vector<1x1xf32>
    %420 = arith.mulf %418, %419 : vector<1x1xf32>
    %421 = arith.addf %408, %420 : vector<1x1xf32>
    %c0_159 = arith.constant 0 : index
    %c0_160 = arith.constant 0 : index
    %422 = vector.load %arg4[%c0_159, %c0_160] : memref<1x1xf32, #tpu.memory_space<vmem>>, vector<1x1xf32>
    tpu.vector_store %arg4[%c0_159, %c0_160], %421 {strides = array<i32>} : memref<1x1xf32, #tpu.memory_space<vmem>>, vector<1x1xf32>,
    return
  }
  func.func @transform_0(%arg0: i32) -> (i32, i32) {
    %c0_i32 = arith.constant 0 : i32
    %c0_i32_0 = arith.constant 0 : i32
    %c0_i32_1 = arith.constant 0 : i32
    return %c0_i32, %c0_i32_0 : i32, i32
  }
  func.func @transform_1(%arg0: i32) -> (i32, i32) {
    %c0_i32 = arith.constant 0 : i32
    %c0_i32_0 = arith.constant 0 : i32
    %c0_i32_1 = arith.constant 0 : i32
    return %c0_i32, %c0_i32_0 : i32, i32
  }
  func.func @transform_2(%arg0: i32) -> (i32, i32) {
    %c0_i32 = arith.constant 0 : i32
    %c0_i32_0 = arith.constant 0 : i32
    %c0_i32_1 = arith.constant 0 : i32
    return %c0_i32, %c0_i32_0 : i32, i32
  }
  func.func @transform_3(%arg0: i32) -> (i32, i32) {
    %c0_i32 = arith.constant 0 : i32
    %c0_i32_0 = arith.constant 0 : i32
    %c0_i32_1 = arith.constant 0 : i32
    return %c0_i32, %c0_i32_0 : i32, i32
  }
}

</mosaic_0001>

<llo_original>
// kernel: affordances_separate_forward.1
$region0: #{affordances_separate_forward.1}
  #allocation0 [shape = 'u32[]', space=smem, size = 0x4, offset = 0x4, fixed_abs, tag = 'smem constant byte address 0x4 - core index']
  #allocation1 [shape = 'u32[144,128]{1,0:T(1,128)}', space=vmem, size = 0x12000, scoped, tag = 'internal scratch']
  %s0 = inlined_call_operand.vmem [shape: f32[8,512], index: 0, kind: input, shape index: {}]
  %s1 = inlined_call_operand.vmem [shape: f32[280,128], index: 1, kind: input, shape index: {}]
  %s2 = inlined_call_operand.vmem [shape: f32[16,128], index: 2, kind: input, shape index: {}]
  %s3 = inlined_call_operand.hbm [shape: f32[1,1], index: 3, kind: output, shape index: {}]
  %s4 = sld [smem:[#allocation0]]
  $region22: #{affordances_separate_forward.1} parent=0
    _
  %s6 = ssub.s32 1, %s4
  %s7 = scalar_select 0, %s6, %s4
  $region1: #{affordances_separate_forward.1} parent=0
    #allocation2 [shape = 'u8[512]{0}', space=vmem, size = 0x400, scoped, tag = 'output window, operand 0, single buffered']
    #allocation3 [shape = 's32[1]{0}', space=sflag, size = 0x4, scoped, tag = 'scoped memory for affordances_separate_forward.1']
    %8 = vsyncpa [#allocation3], 0
    // Predicated region
    $region2: #{affordances_separate_forward.1} parent=1 // pred_check
      _
    $region3: #{affordances_separate_forward.1} parent=1 // pred_check_branch
      %10 = sbr.rel (0) target = $region5
    $region4: #{affordances_separate_forward.1} parent=1 // pred_region
      _
    $region5: #{affordances_separate_forward.1} parent=1 // pred_fallthru
      _
    // Predicated region
    $region6: #{affordances_separate_forward.1} parent=1 // pred_check
      _
    $region7: #{affordances_separate_forward.1} parent=1 // pred_check_branch
      %12 = sbr.rel (0) target = $region9
    $region8: #{affordances_separate_forward.1} parent=1 // pred_region
      _
    $region9: #{affordances_separate_forward.1} parent=1 // pred_fallthru
      _
    // Predicated region
    $region10: #{affordances_separate_forward.1} parent=1 // pred_check
      _
    $region11: #{affordances_separate_forward.1} parent=1 // pred_check_branch
      %14 = sbr.rel (0) target = $region13
    $region12: #{affordances_separate_forward.1} parent=1 // pred_region
      _
    $region13: #{affordances_separate_forward.1} parent=1 // pred_fallthru
      _
    %v15 = vld [vmem:[%s0] sm:$0xff]
    %v16 = vld [vmem:[%s0 + $0x8] sm:$0xff]
    %v17 = vld [vmem:[%s0 + $0x10] sm:$0xff]
    %v18 = vld [vmem:[%s0 + $0x18] sm:$0xff]
    %v19 = vlaneseq
    %v20 = vand.u32 %v19, 127
    %v21 = vadd.s32 %v20, 128
    %v22 = vadd.s32 %v20, 256
    %v23 = vadd.s32 %v20, 384
    %v24 = vand.u32 %v20, 15
    %v25 = vand.u32 %v21, 15
    %v26 = vand.u32 %v22, 15
    %v27 = vand.u32 %v23, 15
    %v28 = vshra.s32 %v20, 4
    %v29 = vshra.s32 %v21, 4
    %v30 = vshra.s32 %v22, 4
    %v31 = vshra.s32 %v23, 4
    %v32 = vand.u32 %v28, 15
    %v33 = vand.u32 %v29, 15
    %v34 = vand.u32 %v30, 15
    %v35 = vand.u32 %v31, 15
    %36 = vrot.lane.b32.xlu0 %v15, 17
    %v37 = vpop.permute.xlu0 %36
    %38 = vrot.lane.b32.xlu0 %v16, 17
    %v39 = vpop.permute.xlu0 %38
    %40 = vrot.lane.b32.xlu0 %v17, 17
    %v41 = vpop.permute.xlu0 %40
    %42 = vrot.lane.b32.xlu0 %v18, 17
    %v43 = vpop.permute.xlu0 %42
    %vm44 = vcmp.lt.s32.totalorder %v20, 17
    %v45 = vsel %vm44, %v41, %v43
    %v46 = vsel %vm44, %v39, %v41
    %v47 = vsel %vm44, %v37, %v39
    %v48 = vsel %vm44, %v43, %v37
    %v49 = vadd.s32 %v32, 4294967295
    %v50 = vadd.s32 %v33, 4294967295
    %v51 = vadd.s32 %v34, 4294967295
    %v52 = vadd.s32 %v35, 4294967295
    %vm53 = vcmp.ge.s32.totalorder %v49, 0
    %vm54 = vcmp.ge.s32.totalorder %v50, 0
    %vm55 = vcmp.ge.s32.totalorder %v51, 0
    %vm56 = vcmp.ge.s32.totalorder %v52, 0
    %vm57 = vcmp.lt.s32.totalorder %v49, 16
    %vm58 = vcmp.lt.s32.totalorder %v50, 16
    %vm59 = vcmp.lt.s32.totalorder %v51, 16
    %vm60 = vcmp.lt.s32.totalorder %v52, 16
    %vm61 = vmand %vm53, %vm57
    %vm62 = vmand %vm54, %vm58
    %vm63 = vmand %vm55, %vm59
    %vm64 = vmand %vm56, %vm60
    %v65 = vadd.s32 %v24, 4294967295
    %v66 = vadd.s32 %v25, 4294967295
    %v67 = vadd.s32 %v26, 4294967295
    %v68 = vadd.s32 %v27, 4294967295
    %vm69 = vcmp.ge.s32.totalorder %v65, 0
    %vm70 = vcmp.ge.s32.totalorder %v66, 0
    %vm71 = vcmp.ge.s32.totalorder %v67, 0
    %vm72 = vcmp.ge.s32.totalorder %v68, 0
    %vm73 = vmand %vm61, %vm69
    %vm74 = vmand %vm62, %vm70
    %vm75 = vmand %vm63, %vm71
    %vm76 = vmand %vm64, %vm72
    %vm77 = vcmp.lt.s32.totalorder %v65, 16
    %vm78 = vcmp.lt.s32.totalorder %v66, 16
    %vm79 = vcmp.lt.s32.totalorder %v67, 16
    %vm80 = vcmp.lt.s32.totalorder %v68, 16
    %vm81 = vmand %vm73, %vm77
    %vm82 = vmand %vm74, %vm78
    %vm83 = vmand %vm75, %vm79
    %vm84 = vmand %vm76, %vm80
    %v85 = vsel %vm81, 1, 0
    %v86 = vsel %vm82, 1, 0
    %v87 = vsel %vm83, 1, 0
    %v88 = vsel %vm84, 1, 0
    %vm89 = vcmp.eq.s32.totalorder %v85, 1
    %vm90 = vcmp.eq.s32.totalorder %v86, 1
    %vm91 = vcmp.eq.s32.totalorder %v87, 1
    %vm92 = vcmp.eq.s32.totalorder %v88, 1
    %v93 = vsel %vm89, %v48, 0.0
    %v94 = vsel %vm90, %v47, 0.0
    %v95 = vsel %vm91, %v46, 0.0
    %v96 = vsel %vm92, %v45, 0.0
    %v97 = vld [vmem:[%s1] sm:$0xff]
    %98 = vrot.lane.b32.xlu0 %v15, 16
    %v99 = vpop.permute.xlu0 %98
    %100 = vrot.lane.b32.xlu0 %v16, 16
    %v101 = vpop.permute.xlu0 %100
    %102 = vrot.lane.b32.xlu0 %v17, 16
    %v103 = vpop.permute.xlu0 %102
    %104 = vrot.lane.b32.xlu0 %v18, 16
    %v105 = vpop.permute.xlu0 %104
    %vm106 = vcmp.lt.s32.totalorder %v20, 16
    %v107 = vsel %vm106, %v103, %v105
    %v108 = vsel %vm106, %v101, %v103
    %v109 = vsel %vm106, %v99, %v101
    %v110 = vsel %vm106, %v105, %v99
    %vm111 = vcmp.ge.s32.totalorder %v24, 0
    %vm112 = vcmp.ge.s32.totalorder %v25, 0
    %vm113 = vcmp.ge.s32.totalorder %v26, 0
    %vm114 = vcmp.ge.s32.totalorder %v27, 0
    %vm115 = vmand %vm61, %vm111
    %vm116 = vmand %vm62, %vm112
    %vm117 = vmand %vm63, %vm113
    %vm118 = vmand %vm64, %vm114
    %vm119 = vcmp.lt.s32.totalorder %v24, 16
    %vm120 = vcmp.lt.s32.totalorder %v25, 16
    %vm121 = vcmp.lt.s32.totalorder %v26, 16
    %vm122 = vcmp.lt.s32.totalorder %v27, 16
    %vm123 = vmand %vm115, %vm119
    %vm124 = vmand %vm116, %vm120
    %vm125 = vmand %vm117, %vm121
    %vm126 = vmand %vm118, %vm122
    %v127 = vsel %vm123, 1, 0
    %v128 = vsel %vm124, 1, 0
    %v129 = vsel %vm125, 1, 0
    %v130 = vsel %vm126, 1, 0
    %vm131 = vcmp.eq.s32.totalorder %v127, 1
    %vm132 = vcmp.eq.s32.totalorder %v128, 1
    %vm133 = vcmp.eq.s32.totalorder %v129, 1
    %vm134 = vcmp.eq.s32.totalorder %v130, 1
    %v135 = vsel %vm131, %v110, 0.0
    %v136 = vsel %vm132, %v109, 0.0
    %v137 = vsel %vm133, %v108, 0.0
    %v138 = vsel %vm134, %v107, 0.0
    %v139 = vld [vmem:[%s1 + $0x8] sm:$0xff]
    %vm140 = vcmask 64512
    %v142 = vsel %vm140, %v139, 0
    %144 = vmatprep.subr.mxu0 %v136
    %145 = vmatpush1.msra.mxu0 %v135
    %146 = vmatprep.subr.mxu0 0.0
    %147 = vmatpush1.msra.mxu0 0.0
    %148 = vmatprep.subr.mxu0 0.0
    %149 = vmatpush1.msra.mxu0 0.0
    %150 = vmatprep.subr.mxu0 0.0
    %151 = vmatpush1.msra.mxu0 0.0
    %152 = vmatprep.subr.mxu0 0.0
    %153 = vmatpush1.msra.mxu0 0.0
    %154 = vmatprep.subr.mxu0 0.0
    %155 = vmatpush1.msra.mxu0 0.0
    %156 = vmatprep.subr.mxu0 0.0
    %157 = vmatpush1.msra.mxu0 0.0
    %158 = vmatprep.subr.mxu0 0.0
    %159 = vmatpush1.msra.mxu0 0.0
    %160 = vmatprep.subr.mxu0 0.0
    %161 = vmatpush1.msra.mxu0 0.0
    %162 = vmatprep.subr.mxu0 0.0
    %163 = vmatpush1.msra.mxu0 0.0
    %164 = vmatprep.subr.mxu0 0.0
    %165 = vmatpush1.msra.mxu0 0.0
    %166 = vmatprep.subr.mxu0 0.0
    %167 = vmatpush1.msra.mxu0 0.0
    %168 = vmatprep.subr.mxu0 0.0
    %169 = vmatpush1.msra.mxu0 0.0
    %170 = vmatprep.subr.mxu0 0.0
    %171 = vmatpush1.msra.mxu0 0.0
    %172 = vmatprep.subr.mxu0 0.0
    %173 = vmatpush1.msra.mxu0 0.0
    %174 = vmatprep.subr.mxu0 0.0
    %175 = vmatpush1.msra.mxu0 0.0
    %176 = vmatprep.subr.mxu0 0.0
    %177 = vmatpush1.msra.mxu0 0.0
    %178 = vmatprep.subr.mxu0 0.0
    %179 = vmatpush1.msra.mxu0 0.0
    %180 = vmatprep.subr.mxu0 0.0
    %181 = vmatpush1.msra.mxu0 0.0
    %182 = vmatprep.subr.mxu0 0.0
    %183 = vmatpush1.msra.mxu0 0.0
    %184 = vmatprep.subr.mxu0 0.0
    %185 = vmatpush1.msra.mxu0 0.0
    %186 = vmatprep.subr.mxu0 0.0
    %187 = vmatpush1.msra.mxu0 0.0
    %188 = vmatprep.subr.mxu0 0.0
    %189 = vmatpush1.msra.mxu0 0.0
    %190 = vmatprep.subr.mxu0 0.0
    %191 = vmatpush1.msra.mxu0 0.0
    %192 = vmatprep.subr.mxu0 0.0
    %193 = vmatpush1.msra.mxu0 0.0
    %194 = vmatprep.subr.mxu0 0.0
    %195 = vmatpush1.msra.mxu0 0.0
    %196 = vmatprep.subr.mxu0 0.0
    %197 = vmatpush1.msra.mxu0 0.0
    %198 = vmatprep.subr.mxu0 0.0
    %199 = vmatpush1.msra.mxu0 0.0
    %200 = vmatprep.subr.mxu0 0.0
    %201 = vmatpush1.msra.mxu0 0.0
    %202 = vmatprep.subr.mxu0 0.0
    %203 = vmatpush1.msra.mxu0 0.0
    %204 = vmatprep.subr.mxu0 0.0
    %205 = vmatpush1.msra.mxu0 0.0
    %206 = vmatprep.subr.mxu0 0.0
    %207 = vmatpush1.msra.mxu0 0.0
    %208 = vmatprep.mubr.f32.mxu0 0.0
    %209 = vmatmul.mubr.f32.gmra.mrb[0].mxu0 %v142
    %v210 = vpop.f32.mrb[0].mxu0
    %v211 = vadd.f32 0.0, %v210
    %v212 = vpop.f32.mrb[0].mxu0
    %v213 = vadd.f32 0.0, %v212
    %214 = vdwg.mxu0
    %215 = vmatprep.subr.mxu0 %v138
    %216 = vmatpush1.msra.mxu0 %v137
    %217 = vmatprep.subr.mxu0 0.0
    %218 = vmatpush1.msra.mxu0 0.0
    %219 = vmatprep.subr.mxu0 0.0
    %220 = vmatpush1.msra.mxu0 0.0
    %221 = vmatprep.subr.mxu0 0.0
    %222 = vmatpush1.msra.mxu0 0.0
    %223 = vmatprep.subr.mxu0 0.0
    %224 = vmatpush1.msra.mxu0 0.0
    %225 = vmatprep.subr.mxu0 0.0
    %226 = vmatpush1.msra.mxu0 0.0
    %227 = vmatprep.subr.mxu0 0.0
    %228 = vmatpush1.msra.mxu0 0.0
    %229 = vmatprep.subr.mxu0 0.0
    %230 = vmatpush1.msra.mxu0 0.0
    %231 = vmatprep.subr.mxu0 0.0
    %232 = vmatpush1.msra.mxu0 0.0
    %233 = vmatprep.subr.mxu0 0.0
    %234 = vmatpush1.msra.mxu0 0.0
    %235 = vmatprep.subr.mxu0 0.0
    %236 = vmatpush1.msra.mxu0 0.0
    %237 = vmatprep.subr.mxu0 0.0
    %238 = vmatpush1.msra.mxu0 0.0
    %239 = vmatprep.subr.mxu0 0.0
    %240 = vmatpush1.msra.mxu0 0.0
    %241 = vmatprep.subr.mxu0 0.0
    %242 = vmatpush1.msra.mxu0 0.0
    %243 = vmatprep.subr.mxu0 0.0
    %244 = vmatpush1.msra.mxu0 0.0
    %245 = vmatprep.subr.mxu0 0.0
    %246 = vmatpush1.msra.mxu0 0.0
    %247 = vmatprep.subr.mxu0 0.0
    %248 = vmatpush1.msra.mxu0 0.0
    %249 = vmatprep.subr.mxu0 0.0
    %250 = vmatpush1.msra.mxu0 0.0
    %251 = vmatprep.subr.mxu0 0.0
    %252 = vmatpush1.msra.mxu0 0.0
    %253 = vmatprep.subr.mxu0 0.0
    %254 = vmatpush1.msra.mxu0 0.0
    %255 = vmatprep.subr.mxu0 0.0
    %256 = vmatpush1.msra.mxu0 0.0
    %257 = vmatprep.subr.mxu0 0.0
    %258 = vmatpush1.msra.mxu0 0.0
    %259 = vmatprep.subr.mxu0 0.0
    %260 = vmatpush1.msra.mxu0 0.0
    %261 = vmatprep.subr.mxu0 0.0
    %262 = vmatpush1.msra.mxu0 0.0
    %263 = vmatprep.subr.mxu0 0.0
    %264 = vmatpush1.msra.mxu0 0.0
    %265 = vmatprep.subr.mxu0 0.0
    %266 = vmatpush1.msra.mxu0 0.0
    %267 = vmatprep.subr.mxu0 0.0
    %268 = vmatpush1.msra.mxu0 0.0
    %269 = vmatprep.subr.mxu0 0.0
    %270 = vmatpush1.msra.mxu0 0.0
    %271 = vmatprep.subr.mxu0 0.0
    %272 = vmatpush1.msra.mxu0 0.0
    %273 = vmatprep.subr.mxu0 0.0
    %274 = vmatpush1.msra.mxu0 0.0
    %275 = vmatprep.subr.mxu0 0.0
    %276 = vmatpush1.msra.mxu0 0.0
    %277 = vmatprep.subr.mxu0 0.0
    %278 = vmatpush1.msra.mxu0 0.0
    %279 = vmatprep.mubr.f32.mxu0 0.0
    %280 = vmatmul.mubr.f32.gmra.mrb[0].mxu0 %v142
    %v281 = vpop.f32.mrb[0].mxu0
    %v282 = vadd.f32 0.0, %v281
    %v283 = vpop.f32.mrb[0].mxu0
    %v284 = vadd.f32 0.0, %v283
    %285 = vdwg.mxu0
    %v287 = vsel %vm140, %v97, 0
    %289 = vmatprep.subr.mxu0 %v94
    %290 = vmatpush1.msra.mxu0 %v93
    %291 = vmatprep.subr.mxu0 0.0
    %292 = vmatpush1.msra.mxu0 0.0
    %293 = vmatprep.subr.mxu0 0.0
    %294 = vmatpush1.msra.mxu0 0.0
    %295 = vmatprep.subr.mxu0 0.0
    %296 = vmatpush1.msra.mxu0 0.0
    %297 = vmatprep.subr.mxu0 0.0
    %298 = vmatpush1.msra.mxu0 0.0
    %299 = vmatprep.subr.mxu0 0.0
    %300 = vmatpush1.msra.mxu0 0.0
    %301 = vmatprep.subr.mxu0 0.0
    %302 = vmatpush1.msra.mxu0 0.0
    %303 = vmatprep.subr.mxu0 0.0
    %304 = vmatpush1.msra.mxu0 0.0
    %305 = vmatprep.subr.mxu0 0.0
    %306 = vmatpush1.msra.mxu0 0.0
    %307 = vmatprep.subr.mxu0 0.0
    %308 = vmatpush1.msra.mxu0 0.0
    %309 = vmatprep.subr.mxu0 0.0
    %310 = vmatpush1.msra.mxu0 0.0
    %311 = vmatprep.subr.mxu0 0.0
    %312 = vmatpush1.msra.mxu0 0.0
    %313 = vmatprep.subr.mxu0 0.0
    %314 = vmatpush1.msra.mxu0 0.0
    %315 = vmatprep.subr.mxu0 0.0
    %316 = vmatpush1.msra.mxu0 0.0
    %317 = vmatprep.subr.mxu0 0.0
    %318 = vmatpush1.msra.mxu0 0.0
    %319 = vmatprep.subr.mxu0 0.0
    %320 = vmatpush1.msra.mxu0 0.0
    %321 = vmatprep.subr.mxu0 0.0
    %322 = vmatpush1.msra.mxu0 0.0
    %323 = vmatprep.subr.mxu0 0.0
    %324 = vmatpush1.msra.mxu0 0.0
    %325 = vmatprep.subr.mxu0 0.0
    %326 = vmatpush1.msra.mxu0 0.0
    %327 = vmatprep.subr.mxu0 0.0
    %328 = vmatpush1.msra.mxu0 0.0
    %329 = vmatprep.subr.mxu0 0.0
    %330 = vmatpush1.msra.mxu0 0.0
    %331 = vmatprep.subr.mxu0 0.0
    %332 = vmatpush1.msra.mxu0 0.0
    %333 = vmatprep.subr.mxu0 0.0
    %334 = vmatpush1.msra.mxu0 0.0
    %335 = vmatprep.subr.mxu0 0.0
    %336 = vmatpush1.msra.mxu0 0.0
    %337 = vmatprep.subr.mxu0 0.0
    %338 = vmatpush1.msra.mxu0 0.0
    %339 = vmatprep.subr.mxu0 0.0
    %340 = vmatpush1.msra.mxu0 0.0
    %341 = vmatprep.subr.mxu0 0.0
    %342 = vmatpush1.msra.mxu0 0.0
    %343 = vmatprep.subr.mxu0 0.0
    %344 = vmatpush1.msra.mxu0 0.0
    %345 = vmatprep.subr.mxu0 0.0
    %346 = vmatpush1.msra.mxu0 0.0
    %347 = vmatprep.subr.mxu0 0.0
    %348 = vmatpush1.msra.mxu0 0.0
    %349 = vmatprep.subr.mxu0 0.0
    %350 = vmatpush1.msra.mxu0 0.0
    %351 = vmatprep.subr.mxu0 0.0
    %352 = vmatpush1.msra.mxu0 0.0
    %353 = vmatprep.mubr.f32.mxu0 0.0
    %354 = vmatmul.mubr.f32.gmra.mrb[0].mxu0 %v287
    %v355 = vpop.f32.mrb[0].mxu0
    %v356 = vadd.f32 %v211, %v355
    %v357 = vpop.f32.mrb[0].mxu0
    %v358 = vadd.f32 %v213, %v357
    %359 = vdwg.mxu0
    %360 = vmatprep.subr.mxu0 %v96
    %361 = vmatpush1.msra.mxu0 %v95
    %362 = vmatprep.subr.mxu0 0.0
    %363 = vmatpush1.msra.mxu0 0.0
    %364 = vmatprep.subr.mxu0 0.0
    %365 = vmatpush1.msra.mxu0 0.0
    %366 = vmatprep.subr.mxu0 0.0
    %367 = vmatpush1.msra.mxu0 0.0
    %368 = vmatprep.subr.mxu0 0.0
    %369 = vmatpush1.msra.mxu0 0.0
    %370 = vmatprep.subr.mxu0 0.0
    %371 = vmatpush1.msra.mxu0 0.0
    %372 = vmatprep.subr.mxu0 0.0
    %373 = vmatpush1.msra.mxu0 0.0
    %374 = vmatprep.subr.mxu0 0.0
    %375 = vmatpush1.msra.mxu0 0.0
    %376 = vmatprep.subr.mxu0 0.0
    %377 = vmatpush1.msra.mxu0 0.0
    %378 = vmatprep.subr.mxu0 0.0
    %379 = vmatpush1.msra.mxu0 0.0
    %380 = vmatprep.subr.mxu0 0.0
    %381 = vmatpush1.msra.mxu0 0.0
    %382 = vmatprep.subr.mxu0 0.0
    %383 = vmatpush1.msra.mxu0 0.0
    %384 = vmatprep.subr.mxu0 0.0
    %385 = vmatpush1.msra.mxu0 0.0
    %386 = vmatprep.subr.mxu0 0.0
    %387 = vmatpush1.msra.mxu0 0.0
    %388 = vmatprep.subr.mxu0 0.0
    %389 = vmatpush1.msra.mxu0 0.0
    %390 = vmatprep.subr.mxu0 0.0
    %391 = vmatpush1.msra.mxu0 0.0
    %392 = vmatprep.subr.mxu0 0.0
    %393 = vmatpush1.msra.mxu0 0.0
    %394 = vmatprep.subr.mxu0 0.0
    %395 = vmatpush1.msra.mxu0 0.0
    %396 = vmatprep.subr.mxu0 0.0
    %397 = vmatpush1.msra.mxu0 0.0
    %398 = vmatprep.subr.mxu0 0.0
    %399 = vmatpush1.msra.mxu0 0.0
    %400 = vmatprep.subr.mxu0 0.0
    %401 = vmatpush1.msra.mxu0 0.0
    %402 = vmatprep.subr.mxu0 0.0
    %403 = vmatpush1.msra.mxu0 0.0
    %404 = vmatprep.subr.mxu0 0.0
    %405 = vmatpush1.msra.mxu0 0.0
    %406 = vmatprep.subr.mxu0 0.0
    %407 = vmatpush1.msra.mxu0 0.0
    %408 = vmatprep.subr.mxu0 0.0
    %409 = vmatpush1.msra.mxu0 0.0
    %410 = vmatprep.subr.mxu0 0.0
    %411 = vmatpush1.msra.mxu0 0.0
    %412 = vmatprep.subr.mxu0 0.0
    %413 = vmatpush1.msra.mxu0 0.0
    %414 = vmatprep.subr.mxu0 0.0
    %415 = vmatpush1.msra.mxu0 0.0
    %416 = vmatprep.subr.mxu0 0.0
    %417 = vmatpush1.msra.mxu0 0.0
    %418 = vmatprep.subr.mxu0 0.0
    %419 = vmatpush1.msra.mxu0 0.0
    %420 = vmatprep.subr.mxu0 0.0
    %421 = vmatpush1.msra.mxu0 0.0
    %422 = vmatprep.subr.mxu0 0.0
    %423 = vmatpush1.msra.mxu0 0.0
    %424 = vmatprep.mubr.f32.mxu0 0.0
    %425 = vmatmul.mubr.f32.gmra.mrb[0].mxu0 %v287
    %v426 = vpop.f32.mrb[0].mxu0
    %v427 = vadd.f32 %v282, %v426
    %v428 = vpop.f32.mrb[0].mxu0
    %v429 = vadd.f32 %v284, %v428
    %430 = vdwg.mxu0
    %431 = vrot.lane.b32.xlu0 %v15, 15
    %v432 = vpop.permute.xlu0 %431
    %433 = vrot.lane.b32.xlu0 %v16, 15
    %v434 = vpop.permute.xlu0 %433
    %435 = vrot.lane.b32.xlu0 %v17, 15
    %v436 = vpop.permute.xlu0 %435
    %437 = vrot.lane.b32.xlu0 %v18, 15
    %v438 = vpop.permute.xlu0 %437
    %vm439 = vcmp.lt.s32.totalorder %v20, 15
    %v440 = vsel %vm439, %v436, %v438
    %v441 = vsel %vm439, %v434, %v436
    %v442 = vsel %vm439, %v432, %v434
    %v443 = vsel %vm439, %v438, %v432
    %v444 = vadd.s32 %v24, 1
    %v445 = vadd.s32 %v25, 1
    %v446 = vadd.s32 %v26, 1
    %v447 = vadd.s32 %v27, 1
    %vm448 = vcmp.ge.s32.totalorder %v444, 0
    %vm449 = vcmp.ge.s32.totalorder %v445, 0
    %vm450 = vcmp.ge.s32.totalorder %v446, 0
    %vm451 = vcmp.ge.s32.totalorder %v447, 0
    %vm452 = vmand %vm61, %vm448
    %vm453 = vmand %vm62, %vm449
    %vm454 = vmand %vm63, %vm450
    %vm455 = vmand %vm64, %vm451
    %vm456 = vcmp.lt.s32.totalorder %v444, 16
    %vm457 = vcmp.lt.s32.totalorder %v445, 16
    %vm458 = vcmp.lt.s32.totalorder %v446, 16
    %vm459 = vcmp.lt.s32.totalorder %v447, 16
    %vm460 = vmand %vm452, %vm456
    %vm461 = vmand %vm453, %vm457
    %vm462 = vmand %vm454, %vm458
    %vm463 = vmand %vm455, %vm459
    %v464 = vsel %vm460, 1, 0
    %v465 = vsel %vm461, 1, 0
    %v466 = vsel %vm462, 1, 0
    %v467 = vsel %vm463, 1, 0
    %vm468 = vcmp.eq.s32.totalorder %v464, 1
    %vm469 = vcmp.eq.s32.totalorder %v465, 1
    %vm470 = vcmp.eq.s32.totalorder %v466, 1
    %vm471 = vcmp.eq.s32.totalorder %v467, 1
    %v472 = vsel %vm468, %v443, 0.0
    %v473 = vsel %vm469, %v442, 0.0
    %v474 = vsel %vm470, %v441, 0.0
    %v475 = vsel %vm471, %v440, 0.0
    %v476 = vld [vmem:[%s1 + $0x10] sm:$0xff]
    %v478 = vsel %vm140, %v476, 0
    %480 = vmatprep.subr.mxu0 %v473
    %481 = vmatpush1.msra.mxu0 %v472
    %482 = vmatprep.subr.mxu0 0.0
    %483 = vmatpush1.msra.mxu0 0.0
    %484 = vmatprep.subr.mxu0 0.0
    %485 = vmatpush1.msra.mxu0 0.0
    %486 = vmatprep.subr.mxu0 0.0
    %487 = vmatpush1.msra.mxu0 0.0
    %488 = vmatprep.subr.mxu0 0.0
    %489 = vmatpush1.msra.mxu0 0.0
    %490 = vmatprep.subr.mxu0 0.0
    %491 = vmatpush1.msra.mxu0 0.0
    %492 = vmatprep.subr.mxu0 0.0
    %493 = vmatpush1.msra.mxu0 0.0
    %494 = vmatprep.subr.mxu0 0.0
    %495 = vmatpush1.msra.mxu0 0.0
    %496 = vmatprep.subr.mxu0 0.0
    %497 = vmatpush1.msra.mxu0 0.0
    %498 = vmatprep.subr.mxu0 0.0
    %499 = vmatpush1.msra.mxu0 0.0
    %500 = vmatprep.subr.mxu0 0.0
    %501 = vmatpush1.msra.mxu0 0.0
    %502 = vmatprep.subr.mxu0 0.0
    %503 = vmatpush1.msra.mxu0 0.0
    %504 = vmatprep.subr.mxu0 0.0
    %505 = vmatpush1.msra.mxu0 0.0
    %506 = vmatprep.subr.mxu0 0.0
    %507 = vmatpush1.msra.mxu0 0.0
    %508 = vmatprep.subr.mxu0 0.0
    %509 = vmatpush1.msra.mxu0 0.0
    %510 = vmatprep.subr.mxu0 0.0
    %511 = vmatpush1.msra.mxu0 0.0
    %512 = vmatprep.subr.mxu0 0.0
    %513 = vmatpush1.msra.mxu0 0.0
    %514 = vmatprep.subr.mxu0 0.0
    %515 = vmatpush1.msra.mxu0 0.0
    %516 = vmatprep.subr.mxu0 0.0
    %517 = vmatpush1.msra.mxu0 0.0
    %518 = vmatprep.subr.mxu0 0.0
    %519 = vmatpush1.msra.mxu0 0.0
    %520 = vmatprep.subr.mxu0 0.0
    %521 = vmatpush1.msra.mxu0 0.0
    %522 = vmatprep.subr.mxu0 0.0
    %523 = vmatpush1.msra.mxu0 0.0
    %524 = vmatprep.subr.mxu0 0.0
    %525 = vmatpush1.msra.mxu0 0.0
    %526 = vmatprep.subr.mxu0 0.0
    %527 = vmatpush1.msra.mxu0 0.0
    %528 = vmatprep.subr.mxu0 0.0
    %529 = vmatpush1.msra.mxu0 0.0
    %530 = vmatprep.subr.mxu0 0.0
    %531 = vmatpush1.msra.mxu0 0.0
    %532 = vmatprep.subr.mxu0 0.0
    %533 = vmatpush1.msra.mxu0 0.0
    %534 = vmatprep.subr.mxu0 0.0
    %535 = vmatpush1.msra.mxu0 0.0
    %536 = vmatprep.subr.mxu0 0.0
    %537 = vmatpush1.msra.mxu0 0.0
    %538 = vmatprep.subr.mxu0 0.0
    %539 = vmatpush1.msra.mxu0 0.0
    %540 = vmatprep.subr.mxu0 0.0
    %541 = vmatpush1.msra.mxu0 0.0
    %542 = vmatprep.subr.mxu0 0.0
    %543 = vmatpush1.msra.mxu0 0.0
    %544 = vmatprep.mubr.f32.mxu0 0.0
    %545 = vmatmul.mubr.f32.gmra.mrb[0].mxu0 %v478
    %v546 = vpop.f32.mrb[0].mxu0
    %v547 = vadd.f32 0.0, %v546
    %v548 = vpop.f32.mrb[0].mxu0
    %v549 = vadd.f32 0.0, %v548
    %550 = vdwg.mxu0
    %551 = vmatprep.subr.mxu0 %v475
    %552 = vmatpush1.msra.mxu0 %v474
    %553 = vmatprep.subr.mxu0 0.0
    %554 = vmatpush1.msra.mxu0 0.0
    %555 = vmatprep.subr.mxu0 0.0
    %556 = vmatpush1.msra.mxu0 0.0
    %557 = vmatprep.subr.mxu0 0.0
    %558 = vmatpush1.msra.mxu0 0.0
    %559 = vmatprep.subr.mxu0 0.0
    %560 = vmatpush1.msra.mxu0 0.0
    %561 = vmatprep.subr.mxu0 0.0
    %562 = vmatpush1.msra.mxu0 0.0
    %563 = vmatprep.subr.mxu0 0.0
    %564 = vmatpush1.msra.mxu0 0.0
    %565 = vmatprep.subr.mxu0 0.0
    %566 = vmatpush1.msra.mxu0 0.0
    %567 = vmatprep.subr.mxu0 0.0
    %568 = vmatpush1.msra.mxu0 0.0
    %569 = vmatprep.subr.mxu0 0.0
    %570 = vmatpush1.msra.mxu0 0.0
    %571 = vmatprep.subr.mxu0 0.0
    %572 = vmatpush1.msra.mxu0 0.0
    %573 = vmatprep.subr.mxu0 0.0
    %574 = vmatpush1.msra.mxu0 0.0
    %575 = vmatprep.subr.mxu0 0.0
    %576 = vmatpush1.msra.mxu0 0.0
    %577 = vmatprep.subr.mxu0 0.0
    %578 = vmatpush1.msra.mxu0 0.0
    %579 = vmatprep.subr.mxu0 0.0
    %580 = vmatpush1.msra.mxu0 0.0
    %581 = vmatprep.subr.mxu0 0.0
    %582 = vmatpush1.msra.mxu0 0.0
    %583 = vmatprep.subr.mxu0 0.0
    %584 = vmatpush1.msra.mxu0 0.0
    %585 = vmatprep.subr.mxu0 0.0
    %586 = vmatpush1.msra.mxu0 0.0
    %587 = vmatprep.subr.mxu0 0.0
    %588 = vmatpush1.msra.mxu0 0.0
    %589 = vmatprep.subr.mxu0 0.0
    %590 = vmatpush1.msra.mxu0 0.0
    %591 = vmatprep.subr.mxu0 0.0
    %592 = vmatpush1.msra.mxu0 0.0
    %593 = vmatprep.subr.mxu0 0.0
    %594 = vmatpush1.msra.mxu0 0.0
    %595 = vmatprep.subr.mxu0 0.0
    %596 = vmatpush1.msra.mxu0 0.0
    %597 = vmatprep.subr.mxu0 0.0
    %598 = vmatpush1.msra.mxu0 0.0
    %599 = vmatprep.subr.mxu0 0.0
    %600 = vmatpush1.msra.mxu0 0.0
    %601 = vmatprep.subr.mxu0 0.0
    %602 = vmatpush1.msra.mxu0 0.0
    %603 = vmatprep.subr.mxu0 0.0
    %604 = vmatpush1.msra.mxu0 0.0
    %605 = vmatprep.subr.mxu0 0.0
    %606 = vmatpush1.msra.mxu0 0.0
    %607 = vmatprep.subr.mxu0 0.0
    %608 = vmatpush1.msra.mxu0 0.0
    %609 = vmatprep.subr.mxu0 0.0
    %610 = vmatpush1.msra.mxu0 0.0
    %611 = vmatprep.subr.mxu0 0.0
    %612 = vmatpush1.msra.mxu0 0.0
    %613 = vmatprep.subr.mxu0 0.0
    %614 = vmatpush1.msra.mxu0 0.0
    %615 = vmatprep.mubr.f32.mxu0 0.0
    %616 = vmatmul.mubr.f32.gmra.mrb[0].mxu0 %v478
    %v617 = vpop.f32.mrb[0].mxu0
    %v618 = vadd.f32 0.0, %v617
    %v619 = vpop.f32.mrb[0].mxu0
    %v620 = vadd.f32 0.0, %v619
    %621 = vdwg.mxu0
    %v622 = vadd.f32 %v356, %v547
    %v623 = vadd.f32 %v358, %v549
    %v624 = vadd.f32 %v427, %v618
    %v625 = vadd.f32 %v429, %v620
    %626 = vrot.lane.b32.xlu0 %v15, 1
    %v627 = vpop.permute.xlu0 %626
    %628 = vrot.lane.b32.xlu0 %v16, 1
    %v629 = vpop.permute.xlu0 %628
    %630 = vrot.lane.b32.xlu0 %v17, 1
    %v631 = vpop.permute.xlu0 %630
    %632 = vrot.lane.b32.xlu0 %v18, 1
    %v633 = vpop.permute.xlu0 %632
    %vm634 = vcmp.lt.s32.totalorder %v20, 1
    %v635 = vsel %vm634, %v631, %v633
    %v636 = vsel %vm634, %v629, %v631
    %v637 = vsel %vm634, %v627, %v629
    %v638 = vsel %vm634, %v633, %v627
    %vm639 = vcmp.ge.s32.totalorder %v32, 0
    %vm640 = vcmp.ge.s32.totalorder %v33, 0
    %vm641 = vcmp.ge.s32.totalorder %v34, 0
    %vm642 = vcmp.ge.s32.totalorder %v35, 0
    %vm643 = vcmp.lt.s32.totalorder %v32, 16
    %vm644 = vcmp.lt.s32.totalorder %v33, 16
    %vm645 = vcmp.lt.s32.totalorder %v34, 16
    %vm646 = vcmp.lt.s32.totalorder %v35, 16
    %vm647 = vmand %vm639, %vm643
    %vm648 = vmand %vm640, %vm644
    %vm649 = vmand %vm641, %vm645
    %vm650 = vmand %vm642, %vm646
    %vm651 = vmand %vm647, %vm69
    %vm652 = vmand %vm648, %vm70
    %vm653 = vmand %vm649, %vm71
    %vm654 = vmand %vm650, %vm72
    %vm655 = vmand %vm651, %vm77
    %vm656 = vmand %vm652, %vm78
    %vm657 = vmand %vm653, %vm79
    %vm658 = vmand %vm654, %vm80
    %v659 = vsel %vm655, 1, 0
    %v660 = vsel %vm656, 1, 0
    %v661 = vsel %vm657, 1, 0
    %v662 = vsel %vm658, 1, 0
    %vm663 = vcmp.eq.s32.totalorder %v659, 1
    %vm664 = vcmp.eq.s32.totalorder %v660, 1
    %vm665 = vcmp.eq.s32.totalorder %v661, 1
    %vm666 = vcmp.eq.s32.totalorder %v662, 1
    %v667 = vsel %vm663, %v638, 0.0
    %v668 = vsel %vm664, %v637, 0.0
    %v669 = vsel %vm665, %v636, 0.0
    %v670 = vsel %vm666, %v635, 0.0
    %v671 = vld [vmem:[%s1 + $0x18] sm:$0xff]
    %v673 = vsel %vm140, %v671, 0
    %675 = vmatprep.subr.mxu0 %v668
    %676 = vmatpush1.msra.mxu0 %v667
    %677 = vmatprep.subr.mxu0 0.0
    %678 = vmatpush1.msra.mxu0 0.0
    %679 = vmatprep.subr.mxu0 0.0
    %680 = vmatpush1.msra.mxu0 0.0
    %681 = vmatprep.subr.mxu0 0.0
    %682 = vmatpush1.msra.mxu0 0.0
    %683 = vmatprep.subr.mxu0 0.0
    %684 = vmatpush1.msra.mxu0 0.0
    %685 = vmatprep.subr.mxu0 0.0
    %686 = vmatpush1.msra.mxu0 0.0
    %687 = vmatprep.subr.mxu0 0.0
    %688 = vmatpush1.msra.mxu0 0.0
    %689 = vmatprep.subr.mxu0 0.0
    %690 = vmatpush1.msra.mxu0 0.0
    %691 = vmatprep.subr.mxu0 0.0
    %692 = vmatpush1.msra.mxu0 0.0
    %693 = vmatprep.subr.mxu0 0.0
    %694 = vmatpush1.msra.mxu0 0.0
    %695 = vmatprep.subr.mxu0 0.0
    %696 = vmatpush1.msra.mxu0 0.0
    %697 = vmatprep.subr.mxu0 0.0
    %698 = vmatpush1.msra.mxu0 0.0
    %699 = vmatprep.subr.mxu0 0.0
    %700 = vmatpush1.msra.mxu0 0.0
    %701 = vmatprep.subr.mxu0 0.0
    %702 = vmatpush1.msra.mxu0 0.0
    %703 = vmatprep.subr.mxu0 0.0
    %704 = vmatpush1.msra.mxu0 0.0
    %705 = vmatprep.subr.mxu0 0.0
    %706 = vmatpush1.msra.mxu0 0.0
    %707 = vmatprep.subr.mxu0 0.0
    %708 = vmatpush1.msra.mxu0 0.0
    %709 = vmatprep.subr.mxu0 0.0
    %710 = vmatpush1.msra.mxu0 0.0
    %711 = vmatprep.subr.mxu0 0.0
    %712 = vmatpush1.msra.mxu0 0.0
    %713 = vmatprep.subr.mxu0 0.0
    %714 = vmatpush1.msra.mxu0 0.0
    %715 = vmatprep.subr.mxu0 0.0
    %716 = vmatpush1.msra.mxu0 0.0
    %717 = vmatprep.subr.mxu0 0.0
    %718 = vmatpush1.msra.mxu0 0.0
    %719 = vmatprep.subr.mxu0 0.0
    %720 = vmatpush1.msra.mxu0 0.0
    %721 = vmatprep.subr.mxu0 0.0
    %722 = vmatpush1.msra.mxu0 0.0
    %723 = vmatprep.subr.mxu0 0.0
    %724 = vmatpush1.msra.mxu0 0.0
    %725 = vmatprep.subr.mxu0 0.0
    %726 = vmatpush1.msra.mxu0 0.0
    %727 = vmatprep.subr.mxu0 0.0
    %728 = vmatpush1.msra.mxu0 0.0
    %729 = vmatprep.subr.mxu0 0.0
    %730 = vmatpush1.msra.mxu0 0.0
    %731 = vmatprep.subr.mxu0 0.0
    %732 = vmatpush1.msra.mxu0 0.0
    %733 = vmatprep.subr.mxu0 0.0
    %734 = vmatpush1.msra.mxu0 0.0
    %735 = vmatprep.subr.mxu0 0.0
    %736 = vmatpush1.msra.mxu0 0.0
    %737 = vmatprep.subr.mxu0 0.0
    %738 = vmatpush1.msra.mxu0 0.0
    %739 = vmatprep.mubr.f32.mxu0 0.0
    %740 = vmatmul.mubr.f32.gmra.mrb[0].mxu0 %v673
    %v741 = vpop.f32.mrb[0].mxu0
    %v742 = vadd.f32 0.0, %v741
    %v743 = vpop.f32.mrb[0].mxu0
    %v744 = vadd.f32 0.0, %v743
    %745 = vdwg.mxu0
    %746 = vmatprep.subr.mxu0 %v670
    %747 = vmatpush1.msra.mxu0 %v669
    %748 = vmatprep.subr.mxu0 0.0
    %749 = vmatpush1.msra.mxu0 0.0
    %750 = vmatprep.subr.mxu0 0.0
    %751 = vmatpush1.msra.mxu0 0.0
    %752 = vmatprep.subr.mxu0 0.0
    %753 = vmatpush1.msra.mxu0 0.0
    %754 = vmatprep.subr.mxu0 0.0
    %755 = vmatpush1.msra.mxu0 0.0
    %756 = vmatprep.subr.mxu0 0.0
    %757 = vmatpush1.msra.mxu0 0.0
    %758 = vmatprep.subr.mxu0 0.0
    %759 = vmatpush1.msra.mxu0 0.0
    %760 = vmatprep.subr.mxu0 0.0
    %761 = vmatpush1.msra.mxu0 0.0
    %762 = vmatprep.subr.mxu0 0.0
    %763 = vmatpush1.msra.mxu0 0.0
    %764 = vmatprep.subr.mxu0 0.0
    %765 = vmatpush1.msra.mxu0 0.0
    %766 = vmatprep.subr.mxu0 0.0
    %767 = vmatpush1.msra.mxu0 0.0
    %768 = vmatprep.subr.mxu0 0.0
    %769 = vmatpush1.msra.mxu0 0.0
    %770 = vmatprep.subr.mxu0 0.0
    %771 = vmatpush1.msra.mxu0 0.0
    %772 = vmatprep.subr.mxu0 0.0
    %773 = vmatpush1.msra.mxu0 0.0
    %774 = vmatprep.subr.mxu0 0.0
    %775 = vmatpush1.msra.mxu0 0.0
    %776 = vmatprep.subr.mxu0 0.0
    %777 = vmatpush1.msra.mxu0 0.0
    %778 = vmatprep.subr.mxu0 0.0
    %779 = vmatpush1.msra.mxu0 0.0
    %780 = vmatprep.subr.mxu0 0.0
    %781 = vmatpush1.msra.mxu0 0.0
    %782 = vmatprep.subr.mxu0 0.0
    %783 = vmatpush1.msra.mxu0 0.0
    %784 = vmatprep.subr.mxu0 0.0
    %785 = vmatpush1.msra.mxu0 0.0
    %786 = vmatprep.subr.mxu0 0.0
    %787 = vmatpush1.msra.mxu0 0.0
    %788 = vmatprep.subr.mxu0 0.0
    %789 = vmatpush1.msra.mxu0 0.0
    %790 = vmatprep.subr.mxu0 0.0
    %791 = vmatpush1.msra.mxu0 0.0
    %792 = vmatprep.subr.mxu0 0.0
    %793 = vmatpush1.msra.mxu0 0.0
    %794 = vmatprep.subr.mxu0 0.0
    %795 = vmatpush1.msra.mxu0 0.0
    %796 = vmatprep.subr.mxu0 0.0
    %797 = vmatpush1.msra.mxu0 0.0
    %798 = vmatprep.subr.mxu0 0.0
    %799 = vmatpush1.msra.mxu0 0.0
    %800 = vmatprep.subr.mxu0 0.0
    %801 = vmatpush1.msra.mxu0 0.0
    %802 = vmatprep.subr.mxu0 0.0
    %803 = vmatpush1.msra.mxu0 0.0
    %804 = vmatprep.subr.mxu0 0.0
    %805 = vmatpush1.msra.mxu0 0.0
    %806 = vmatprep.subr.mxu0 0.0
    %807 = vmatpush1.msra.mxu0 0.0
    %808 = vmatprep.subr.mxu0 0.0
    %809 = vmatpush1.msra.mxu0 0.0
    %810 = vmatprep.mubr.f32.mxu0 0.0
    %811 = vmatmul.mubr.f32.gmra.mrb[0].mxu0 %v673
    %v812 = vpop.f32.mrb[0].mxu0
    %v813 = vadd.f32 0.0, %v812
    %v814 = vpop.f32.mrb[0].mxu0
    %v815 = vadd.f32 0.0, %v814
    %816 = vdwg.mxu0
    %v817 = vadd.f32 %v622, %v742
    %v818 = vadd.f32 %v623, %v744
    %v819 = vadd.f32 %v624, %v813
    %v820 = vadd.f32 %v625, %v815
    %vm821 = vmand %vm647, %vm111
    %vm822 = vmand %vm648, %vm112
    %vm823 = vmand %vm649, %vm113
    %vm824 = vmand %vm650, %vm114
    %vm825 = vmand %vm821, %vm119
    %vm826 = vmand %vm822, %vm120
    %vm827 = vmand %vm823, %vm121
    %vm828 = vmand %vm824, %vm122
    %v829 = vsel %vm825, 1, 0
    %v830 = vsel %vm826, 1, 0
    %v831 = vsel %vm827, 1, 0
    %v832 = vsel %vm828, 1, 0
    %vm833 = vcmp.eq.s32.totalorder %v829, 1
    %vm834 = vcmp.eq.s32.totalorder %v830, 1
    %vm835 = vcmp.eq.s32.totalorder %v831, 1
    %vm836 = vcmp.eq.s32.totalorder %v832, 1
    %v837 = vsel %vm833, %v15, 0.0
    %v838 = vsel %vm834, %v16, 0.0
    %v839 = vsel %vm835, %v17, 0.0
    %v840 = vsel %vm836, %v18, 0.0
    %v841 = vld [vmem:[%s1 + $0x20] sm:$0xff]
    %v843 = vsel %vm140, %v841, 0
    %845 = vmatprep.subr.mxu0 %v838
    %846 = vmatpush1.msra.mxu0 %v837
    %847 = vmatprep.subr.mxu0 0.0
    %848 = vmatpush1.msra.mxu0 0.0
    %849 = vmatprep.subr.mxu0 0.0
    %850 = vmatpush1.msra.mxu0 0.0
    %851 = vmatprep.subr.mxu0 0.0
    %852 = vmatpush1.msra.mxu0 0.0
    %853 = vmatprep.subr.mxu0 0.0
    %854 = vmatpush1.msra.mxu0 0.0
    %855 = vmatprep.subr.mxu0 0.0
    %856 = vmatpush1.msra.mxu0 0.0
    %857 = vmatprep.subr.mxu0 0.0
    %858 = vmatpush1.msra.mxu0 0.0
    %859 = vmatprep.subr.mxu0 0.0
    %860 = vmatpush1.msra.mxu0 0.0
    %861 = vmatprep.subr.mxu0 0.0
    %862 = vmatpush1.msra.mxu0 0.0
    %863 = vmatprep.subr.mxu0 0.0
    %864 = vmatpush1.msra.mxu0 0.0
    %865 = vmatprep.subr.mxu0 0.0
    %866 = vmatpush1.msra.mxu0 0.0
    %867 = vmatprep.subr.mxu0 0.0
    %868 = vmatpush1.msra.mxu0 0.0
    %869 = vmatprep.subr.mxu0 0.0
    %870 = vmatpush1.msra.mxu0 0.0
    %871 = vmatprep.subr.mxu0 0.0
    %872 = vmatpush1.msra.mxu0 0.0
    %873 = vmatprep.subr.mxu0 0.0
    %874 = vmatpush1.msra.mxu0 0.0
    %875 = vmatprep.subr.mxu0 0.0
    %876 = vmatpush1.msra.mxu0 0.0
    %877 = vmatprep.subr.mxu0 0.0
    %878 = vmatpush1.msra.mxu0 0.0
    %879 = vmatprep.subr.mxu0 0.0
    %880 = vmatpush1.msra.mxu0 0.0
    %881 = vmatprep.subr.mxu0 0.0
    %882 = vmatpush1.msra.mxu0 0.0
    %883 = vmatprep.subr.mxu0 0.0
    %884 = vmatpush1.msra.mxu0 0.0
    %885 = vmatprep.subr.mxu0 0.0
    %886 = vmatpush1.msra.mxu0 0.0
    %887 = vmatprep.subr.mxu0 0.0
    %888 = vmatpush1.msra.mxu0 0.0
    %889 = vmatprep.subr.mxu0 0.0
    %890 = vmatpush1.msra.mxu0 0.0
    %891 = vmatprep.subr.mxu0 0.0
    %892 = vmatpush1.msra.mxu0 0.0
    %893 = vmatprep.subr.mxu0 0.0
    %894 = vmatpush1.msra.mxu0 0.0
    %895 = vmatprep.subr.mxu0 0.0
    %896 = vmatpush1.msra.mxu0 0.0
    %897 = vmatprep.subr.mxu0 0.0
    %898 = vmatpush1.msra.mxu0 0.0
    %899 = vmatprep.subr.mxu0 0.0
    %900 = vmatpush1.msra.mxu0 0.0
    %901 = vmatprep.subr.mxu0 0.0
    %902 = vmatpush1.msra.mxu0 0.0
    %903 = vmatprep.subr.mxu0 0.0
    %904 = vmatpush1.msra.mxu0 0.0
    %905 = vmatprep.subr.mxu0 0.0
    %906 = vmatpush1.msra.mxu0 0.0
    %907 = vmatprep.subr.mxu0 0.0
    %908 = vmatpush1.msra.mxu0 0.0
    %909 = vmatprep.mubr.f32.mxu0 0.0
    %910 = vmatmul.mubr.f32.gmra.mrb[0].mxu0 %v843
    %v911 = vpop.f32.mrb[0].mxu0
    %v912 = vadd.f32 0.0, %v911
    %v913 = vpop.f32.mrb[0].mxu0
    %v914 = vadd.f32 0.0, %v913
    %915 = vdwg.mxu0
    %916 = vmatprep.subr.mxu0 %v840
    %917 = vmatpush1.msra.mxu0 %v839
    %918 = vmatprep.subr.mxu0 0.0
    %919 = vmatpush1.msra.mxu0 0.0
    %920 = vmatprep.subr.mxu0 0.0
    %921 = vmatpush1.msra.mxu0 0.0
    %922 = vmatprep.subr.mxu0 0.0
    %923 = vmatpush1.msra.mxu0 0.0
    %924 = vmatprep.subr.mxu0 0.0
    %925 = vmatpush1.msra.mxu0 0.0
    %926 = vmatprep.subr.mxu0 0.0
    %927 = vmatpush1.msra.mxu0 0.0
    %928 = vmatprep.subr.mxu0 0.0
    %929 = vmatpush1.msra.mxu0 0.0
    %930 = vmatprep.subr.mxu0 0.0
    %931 = vmatpush1.msra.mxu0 0.0
    %932 = vmatprep.subr.mxu0 0.0
    %933 = vmatpush1.msra.mxu0 0.0
    %934 = vmatprep.subr.mxu0 0.0
    %935 = vmatpush1.msra.mxu0 0.0
    %936 = vmatprep.subr.mxu0 0.0
    %937 = vmatpush1.msra.mxu0 0.0
    %938 = vmatprep.subr.mxu0 0.0
    %939 = vmatpush1.msra.mxu0 0.0
    %940 = vmatprep.subr.mxu0 0.0
    %941 = vmatpush1.msra.mxu0 0.0
    %942 = vmatprep.subr.mxu0 0.0
    %943 = vmatpush1.msra.mxu0 0.0
    %944 = vmatprep.subr.mxu0 0.0
    %945 = vmatpush1.msra.mxu0 0.0
    %946 = vmatprep.subr.mxu0 0.0
    %947 = vmatpush1.msra.mxu0 0.0
    %948 = vmatprep.subr.mxu0 0.0
    %949 = vmatpush1.msra.mxu0 0.0
    %950 = vmatprep.subr.mxu0 0.0
    %951 = vmatpush1.msra.mxu0 0.0
    %952 = vmatprep.subr.mxu0 0.0
    %953 = vmatpush1.msra.mxu0 0.0
    %954 = vmatprep.subr.mxu0 0.0
    %955 = vmatpush1.msra.mxu0 0.0
    %956 = vmatprep.subr.mxu0 0.0
    %957 = vmatpush1.msra.mxu0 0.0
    %958 = vmatprep.subr.mxu0 0.0
    %959 = vmatpush1.msra.mxu0 0.0
    %960 = vmatprep.subr.mxu0 0.0
    %961 = vmatpush1.msra.mxu0 0.0
    %962 = vmatprep.subr.mxu0 0.0
    %963 = vmatpush1.msra.mxu0 0.0
    %964 = vmatprep.subr.mxu0 0.0
    %965 = vmatpush1.msra.mxu0 0.0
    %966 = vmatprep.subr.mxu0 0.0
    %967 = vmatpush1.msra.mxu0 0.0
    %968 = vmatprep.subr.mxu0 0.0
    %969 = vmatpush1.msra.mxu0 0.0
    %970 = vmatprep.subr.mxu0 0.0
    %971 = vmatpush1.msra.mxu0 0.0
    %972 = vmatprep.subr.mxu0 0.0
    %973 = vmatpush1.msra.mxu0 0.0
    %974 = vmatprep.subr.mxu0 0.0
    %975 = vmatpush1.msra.mxu0 0.0
    %976 = vmatprep.subr.mxu0 0.0
    %977 = vmatpush1.msra.mxu0 0.0
    %978 = vmatprep.subr.mxu0 0.0
    %979 = vmatpush1.msra.mxu0 0.0
    %980 = vmatprep.mubr.f32.mxu0 0.0
    %981 = vmatmul.mubr.f32.gmra.mrb[0].mxu0 %v843
    %v982 = vpop.f32.mrb[0].mxu0
    %v983 = vadd.f32 0.0, %v982
    %v984 = vpop.f32.mrb[0].mxu0
    %v985 = vadd.f32 0.0, %v984
    %986 = vdwg.mxu0
    %v987 = vadd.f32 %v817, %v912
    %v988 = vadd.f32 %v818, %v914
    %v989 = vadd.f32 %v819, %v983
    %v990 = vadd.f32 %v820, %v985
    %991 = vrot.lane.b32.xlu0 %v15, 127
    %v992 = vpop.permute.xlu0 %991
    %993 = vrot.lane.b32.xlu0 %v16, 127
    %v994 = vpop.permute.xlu0 %993
    %995 = vrot.lane.b32.xlu0 %v17, 127
    %v996 = vpop.permute.xlu0 %995
    %997 = vrot.lane.b32.xlu0 %v18, 127
    %v998 = vpop.permute.xlu0 %997
    %vm999 = vcmp.lt.s32.totalorder %v20, 127
    %v1000 = vsel %vm999, %v996, %v998
    %v1001 = vsel %vm999, %v994, %v996
    %v1002 = vsel %vm999, %v992, %v994
    %v1003 = vsel %vm999, %v998, %v992
    %vm1004 = vmand %vm647, %vm448
    %vm1005 = vmand %vm648, %vm449
    %vm1006 = vmand %vm649, %vm450
    %vm1007 = vmand %vm650, %vm451
    %vm1008 = vmand %vm1004, %vm456
    %vm1009 = vmand %vm1005, %vm457
    %vm1010 = vmand %vm1006, %vm458
    %vm1011 = vmand %vm1007, %vm459
    %v1012 = vsel %vm1008, 1, 0
    %v1013 = vsel %vm1009, 1, 0
    %v1014 = vsel %vm1010, 1, 0
    %v1015 = vsel %vm1011, 1, 0
    %vm1016 = vcmp.eq.s32.totalorder %v1012, 1
    %vm1017 = vcmp.eq.s32.totalorder %v1013, 1
    %vm1018 = vcmp.eq.s32.totalorder %v1014, 1
    %vm1019 = vcmp.eq.s32.totalorder %v1015, 1
    %v1020 = vsel %vm1016, %v1002, 0.0
    %v1021 = vsel %vm1017, %v1001, 0.0
    %v1022 = vsel %vm1018, %v1000, 0.0
    %v1023 = vsel %vm1019, %v1003, 0.0
    %v1024 = vld [vmem:[%s1 + $0x28] sm:$0xff]
    %v1026 = vsel %vm140, %v1024, 0
    %1028 = vmatprep.subr.mxu0 %v1021
    %1029 = vmatpush1.msra.mxu0 %v1020
    %1030 = vmatprep.subr.mxu0 0.0
    %1031 = vmatpush1.msra.mxu0 0.0
    %1032 = vmatprep.subr.mxu0 0.0
    %1033 = vmatpush1.msra.mxu0 0.0
    %1034 = vmatprep.subr.mxu0 0.0
    %1035 = vmatpush1.msra.mxu0 0.0
    %1036 = vmatprep.subr.mxu0 0.0
    %1037 = vmatpush1.msra.mxu0 0.0
    %1038 = vmatprep.subr.mxu0 0.0
    %1039 = vmatpush1.msra.mxu0 0.0
    %1040 = vmatprep.subr.mxu0 0.0
    %1041 = vmatpush1.msra.mxu0 0.0
    %1042 = vmatprep.subr.mxu0 0.0
    %1043 = vmatpush1.msra.mxu0 0.0
    %1044 = vmatprep.subr.mxu0 0.0
    %1045 = vmatpush1.msra.mxu0 0.0
    %1046 = vmatprep.subr.mxu0 0.0
    %1047 = vmatpush1.msra.mxu0 0.0
    %1048 = vmatprep.subr.mxu0 0.0
    %1049 = vmatpush1.msra.mxu0 0.0
    %1050 = vmatprep.subr.mxu0 0.0
    %1051 = vmatpush1.msra.mxu0 0.0
    %1052 = vmatprep.subr.mxu0 0.0
    %1053 = vmatpush1.msra.mxu0 0.0
    %1054 = vmatprep.subr.mxu0 0.0
    %1055 = vmatpush1.msra.mxu0 0.0
    %1056 = vmatprep.subr.mxu0 0.0
    %1057 = vmatpush1.msra.mxu0 0.0
    %1058 = vmatprep.subr.mxu0 0.0
    %1059 = vmatpush1.msra.mxu0 0.0
    %1060 = vmatprep.subr.mxu0 0.0
    %1061 = vmatpush1.msra.mxu0 0.0
    %1062 = vmatprep.subr.mxu0 0.0
    %1063 = vmatpush1.msra.mxu0 0.0
    %1064 = vmatprep.subr.mxu0 0.0
    %1065 = vmatpush1.msra.mxu0 0.0
    %1066 = vmatprep.subr.mxu0 0.0
    %1067 = vmatpush1.msra.mxu0 0.0
    %1068 = vmatprep.subr.mxu0 0.0
    %1069 = vmatpush1.msra.mxu0 0.0
    %1070 = vmatprep.subr.mxu0 0.0
    %1071 = vmatpush1.msra.mxu0 0.0
    %1072 = vmatprep.subr.mxu0 0.0
    %1073 = vmatpush1.msra.mxu0 0.0
    %1074 = vmatprep.subr.mxu0 0.0
    %1075 = vmatpush1.msra.mxu0 0.0
    %1076 = vmatprep.subr.mxu0 0.0
    %1077 = vmatpush1.msra.mxu0 0.0
    %1078 = vmatprep.subr.mxu0 0.0
    %1079 = vmatpush1.msra.mxu0 0.0
    %1080 = vmatprep.subr.mxu0 0.0
    %1081 = vmatpush1.msra.mxu0 0.0
    %1082 = vmatprep.subr.mxu0 0.0
    %1083 = vmatpush1.msra.mxu0 0.0
    %1084 = vmatprep.subr.mxu0 0.0
    %1085 = vmatpush1.msra.mxu0 0.0
    %1086 = vmatprep.subr.mxu0 0.0
    %1087 = vmatpush1.msra.mxu0 0.0
    %1088 = vmatprep.subr.mxu0 0.0
    %1089 = vmatpush1.msra.mxu0 0.0
    %1090 = vmatprep.subr.mxu0 0.0
    %1091 = vmatpush1.msra.mxu0 0.0
    %1092 = vmatprep.mubr.f32.mxu0 0.0
    %1093 = vmatmul.mubr.f32.gmra.mrb[0].mxu0 %v1026
    %v1094 = vpop.f32.mrb[0].mxu0
    %v1095 = vadd.f32 0.0, %v1094
    %v1096 = vpop.f32.mrb[0].mxu0
    %v1097 = vadd.f32 0.0, %v1096
    %1098 = vdwg.mxu0
    %1099 = vmatprep.subr.mxu0 %v1023
    %1100 = vmatpush1.msra.mxu0 %v1022
    %1101 = vmatprep.subr.mxu0 0.0
    %1102 = vmatpush1.msra.mxu0 0.0
    %1103 = vmatprep.subr.mxu0 0.0
    %1104 = vmatpush1.msra.mxu0 0.0
    %1105 = vmatprep.subr.mxu0 0.0
    %1106 = vmatpush1.msra.mxu0 0.0
    %1107 = vmatprep.subr.mxu0 0.0
    %1108 = vmatpush1.msra.mxu0 0.0
    %1109 = vmatprep.subr.mxu0 0.0
    %1110 = vmatpush1.msra.mxu0 0.0
    %1111 = vmatprep.subr.mxu0 0.0
    %1112 = vmatpush1.msra.mxu0 0.0
    %1113 = vmatprep.subr.mxu0 0.0
    %1114 = vmatpush1.msra.mxu0 0.0
    %1115 = vmatprep.subr.mxu0 0.0
    %1116 = vmatpush1.msra.mxu0 0.0
    %1117 = vmatprep.subr.mxu0 0.0
    %1118 = vmatpush1.msra.mxu0 0.0
    %1119 = vmatprep.subr.mxu0 0.0
    %1120 = vmatpush1.msra.mxu0 0.0
    %1121 = vmatprep.subr.mxu0 0.0
    %1122 = vmatpush1.msra.mxu0 0.0
    %1123 = vmatprep.subr.mxu0 0.0
    %1124 = vmatpush1.msra.mxu0 0.0
    %1125 = vmatprep.subr.mxu0 0.0
    %1126 = vmatpush1.msra.mxu0 0.0
    %1127 = vmatprep.subr.mxu0 0.0
    %1128 = vmatpush1.msra.mxu0 0.0
    %1129 = vmatprep.subr.mxu0 0.0
    %1130 = vmatpush1.msra.mxu0 0.0
    %1131 = vmatprep.subr.mxu0 0.0
    %1132 = vmatpush1.msra.mxu0 0.0
    %1133 = vmatprep.subr.mxu0 0.0
    %1134 = vmatpush1.msra.mxu0 0.0
    %1135 = vmatprep.subr.mxu0 0.0
    %1136 = vmatpush1.msra.mxu0 0.0
    %1137 = vmatprep.subr.mxu0 0.0
    %1138 = vmatpush1.msra.mxu0 0.0
    %1139 = vmatprep.subr.mxu0 0.0
    %1140 = vmatpush1.msra.mxu0 0.0
    %1141 = vmatprep.subr.mxu0 0.0
    %1142 = vmatpush1.msra.mxu0 0.0
    %1143 = vmatprep.subr.mxu0 0.0
    %1144 = vmatpush1.msra.mxu0 0.0
    %1145 = vmatprep.subr.mxu0 0.0
    %1146 = vmatpush1.msra.mxu0 0.0
    %1147 = vmatprep.subr.mxu0 0.0
    %1148 = vmatpush1.msra.mxu0 0.0
    %1149 = vmatprep.subr.mxu0 0.0
    %1150 = vmatpush1.msra.mxu0 0.0
    %1151 = vmatprep.subr.mxu0 0.0
    %1152 = vmatpush1.msra.mxu0 0.0
    %1153 = vmatprep.subr.mxu0 0.0
    %1154 = vmatpush1.msra.mxu0 0.0
    %1155 = vmatprep.subr.mxu0 0.0
    %1156 = vmatpush1.msra.mxu0 0.0
    %1157 = vmatprep.subr.mxu0 0.0
    %1158 = vmatpush1.msra.mxu0 0.0
    %1159 = vmatprep.subr.mxu0 0.0
    %1160 = vmatpush1.msra.mxu0 0.0
    %1161 = vmatprep.subr.mxu0 0.0
    %1162 = vmatpush1.msra.mxu0 0.0
    %1163 = vmatprep.mubr.f32.mxu0 0.0
    %1164 = vmatmul.mubr.f32.gmra.mrb[0].mxu0 %v1026
    %v1165 = vpop.f32.mrb[0].mxu0
    %v1166 = vadd.f32 0.0, %v1165
    %v1167 = vpop.f32.mrb[0].mxu0
    %v1168 = vadd.f32 0.0, %v1167
    %1169 = vdwg.mxu0
    %v1170 = vadd.f32 %v987, %v1095
    %v1171 = vadd.f32 %v988, %v1097
    %v1172 = vadd.f32 %v989, %v1166
    %v1173 = vadd.f32 %v990, %v1168
    %1174 = vrot.lane.b32.xlu0 %v15, 113
    %v1175 = vpop.permute.xlu0 %1174
    %1176 = vrot.lane.b32.xlu0 %v16, 113
    %v1177 = vpop.permute.xlu0 %1176
    %1178 = vrot.lane.b32.xlu0 %v17, 113
    %v1179 = vpop.permute.xlu0 %1178
    %1180 = vrot.lane.b32.xlu0 %v18, 113
    %v1181 = vpop.permute.xlu0 %1180
    %vm1182 = vcmp.lt.s32.totalorder %v20, 113
    %v1183 = vsel %vm1182, %v1179, %v1181
    %v1184 = vsel %vm1182, %v1177, %v1179
    %v1185 = vsel %vm1182, %v1175, %v1177
    %v1186 = vsel %vm1182, %v1181, %v1175
    %v1187 = vadd.s32 %v32, 1
    %v1188 = vadd.s32 %v33, 1
    %v1189 = vadd.s32 %v34, 1
    %v1190 = vadd.s32 %v35, 1
    %vm1191 = vcmp.ge.s32.totalorder %v1187, 0
    %vm1192 = vcmp.ge.s32.totalorder %v1188, 0
    %vm1193 = vcmp.ge.s32.totalorder %v1189, 0
    %vm1194 = vcmp.ge.s32.totalorder %v1190, 0
    %vm1195 = vcmp.lt.s32.totalorder %v1187, 16
    %vm1196 = vcmp.lt.s32.totalorder %v1188, 16
    %vm1197 = vcmp.lt.s32.totalorder %v1189, 16
    %vm1198 = vcmp.lt.s32.totalorder %v1190, 16
    %vm1199 = vmand %vm1191, %vm1195
    %vm1200 = vmand %vm1192, %vm1196
    %vm1201 = vmand %vm1193, %vm1197
    %vm1202 = vmand %vm1194, %vm1198
    %vm1203 = vmand %vm1199, %vm69
    %vm1204 = vmand %vm1200, %vm70
    %vm1205 = vmand %vm1201, %vm71
    %vm1206 = vmand %vm1202, %vm72
    %vm1207 = vmand %vm1203, %vm77
    %vm1208 = vmand %vm1204, %vm78
    %vm1209 = vmand %vm1205, %vm79
    %vm1210 = vmand %vm1206, %vm80
    %v1211 = vsel %vm1207, 1, 0
    %v1212 = vsel %vm1208, 1, 0
    %v1213 = vsel %vm1209, 1, 0
    %v1214 = vsel %vm1210, 1, 0
    %vm1215 = vcmp.eq.s32.totalorder %v1211, 1
    %vm1216 = vcmp.eq.s32.totalorder %v1212, 1
    %vm1217 = vcmp.eq.s32.totalorder %v1213, 1
    %vm1218 = vcmp.eq.s32.totalorder %v1214, 1
    %v1219 = vsel %vm1215, %v1185, 0.0
    %v1220 = vsel %vm1216, %v1184, 0.0
    %v1221 = vsel %vm1217, %v1183, 0.0
    %v1222 = vsel %vm1218, %v1186, 0.0
    %v1223 = vld [vmem:[%s1 + $0x30] sm:$0xff]
    %v1225 = vsel %vm140, %v1223, 0
    %1227 = vmatprep.subr.mxu0 %v1220
    %1228 = vmatpush1.msra.mxu0 %v1219
    %1229 = vmatprep.subr.mxu0 0.0
    %1230 = vmatpush1.msra.mxu0 0.0
    %1231 = vmatprep.subr.mxu0 0.0
    %1232 = vmatpush1.msra.mxu0 0.0
    %1233 = vmatprep.subr.mxu0 0.0
    %1234 = vmatpush1.msra.mxu0 0.0
    %1235 = vmatprep.subr.mxu0 0.0
    %1236 = vmatpush1.msra.mxu0 0.0
    %1237 = vmatprep.subr.mxu0 0.0
    %1238 = vmatpush1.msra.mxu0 0.0
    %1239 = vmatprep.subr.mxu0 0.0
    %1240 = vmatpush1.msra.mxu0 0.0
    %1241 = vmatprep.subr.mxu0 0.0
    %1242 = vmatpush1.msra.mxu0 0.0
    %1243 = vmatprep.subr.mxu0 0.0
    %1244 = vmatpush1.msra.mxu0 0.0
    %1245 = vmatprep.subr.mxu0 0.0
    %1246 = vmatpush1.msra.mxu0 0.0
    %1247 = vmatprep.subr.mxu0 0.0
    %1248 = vmatpush1.msra.mxu0 0.0
    %1249 = vmatprep.subr.mxu0 0.0
    %1250 = vmatpush1.msra.mxu0 0.0
    %1251 = vmatprep.subr.mxu0 0.0
    %1252 = vmatpush1.msra.mxu0 0.0
    %1253 = vmatprep.subr.mxu0 0.0
    %1254 = vmatpush1.msra.mxu0 0.0
    %1255 = vmatprep.subr.mxu0 0.0
    %1256 = vmatpush1.msra.mxu0 0.0
    %1257 = vmatprep.subr.mxu0 0.0
    %1258 = vmatpush1.msra.mxu0 0.0
    %1259 = vmatprep.subr.mxu0 0.0
    %1260 = vmatpush1.msra.mxu0 0.0
    %1261 = vmatprep.subr.mxu0 0.0
    %1262 = vmatpush1.msra.mxu0 0.0
    %1263 = vmatprep.subr.mxu0 0.0
    %1264 = vmatpush1.msra.mxu0 0.0
    %1265 = vmatprep.subr.mxu0 0.0
    %1266 = vmatpush1.msra.mxu0 0.0
    %1267 = vmatprep.subr.mxu0 0.0
    %1268 = vmatpush1.msra.mxu0 0.0
    %1269 = vmatprep.subr.mxu0 0.0
    %1270 = vmatpush1.msra.mxu0 0.0
    %1271 = vmatprep.subr.mxu0 0.0
    %1272 = vmatpush1.msra.mxu0 0.0
    %1273 = vmatprep.subr.mxu0 0.0
    %1274 = vmatpush1.msra.mxu0 0.0
    %1275 = vmatprep.subr.mxu0 0.0
    %1276 = vmatpush1.msra.mxu0 0.0
    %1277 = vmatprep.subr.mxu0 0.0
    %1278 = vmatpush1.msra.mxu0 0.0
    %1279 = vmatprep.subr.mxu0 0.0
    %1280 = vmatpush1.msra.mxu0 0.0
    %1281 = vmatprep.subr.mxu0 0.0
    %1282 = vmatpush1.msra.mxu0 0.0
    %1283 = vmatprep.subr.mxu0 0.0
    %1284 = vmatpush1.msra.mxu0 0.0
    %1285 = vmatprep.subr.mxu0 0.0
    %1286 = vmatpush1.msra.mxu0 0.0
    %1287 = vmatprep.subr.mxu0 0.0
    %1288 = vmatpush1.msra.mxu0 0.0
    %1289 = vmatprep.subr.mxu0 0.0
    %1290 = vmatpush1.msra.mxu0 0.0
    %1291 = vmatprep.mubr.f32.mxu0 0.0
    %1292 = vmatmul.mubr.f32.gmra.mrb[0].mxu0 %v1225
    %v1293 = vpop.f32.mrb[0].mxu0
    %v1294 = vadd.f32 0.0, %v1293
    %v1295 = vpop.f32.mrb[0].mxu0
    %v1296 = vadd.f32 0.0, %v1295
    %1297 = vdwg.mxu0
    %1298 = vmatprep.subr.mxu0 %v1222
    %1299 = vmatpush1.msra.mxu0 %v1221
    %1300 = vmatprep.subr.mxu0 0.0
    %1301 = vmatpush1.msra.mxu0 0.0
    %1302 = vmatprep.subr.mxu0 0.0
    %1303 = vmatpush1.msra.mxu0 0.0
    %1304 = vmatprep.subr.mxu0 0.0
    %1305 = vmatpush1.msra.mxu0 0.0
    %1306 = vmatprep.subr.mxu0 0.0
    %1307 = vmatpush1.msra.mxu0 0.0
    %1308 = vmatprep.subr.mxu0 0.0
    %1309 = vmatpush1.msra.mxu0 0.0
    %1310 = vmatprep.subr.mxu0 0.0
    %1311 = vmatpush1.msra.mxu0 0.0
    %1312 = vmatprep.subr.mxu0 0.0
    %1313 = vmatpush1.msra.mxu0 0.0
    %1314 = vmatprep.subr.mxu0 0.0
    %1315 = vmatpush1.msra.mxu0 0.0
    %1316 = vmatprep.subr.mxu0 0.0
    %1317 = vmatpush1.msra.mxu0 0.0
    %1318 = vmatprep.subr.mxu0 0.0
    %1319 = vmatpush1.msra.mxu0 0.0
    %1320 = vmatprep.subr.mxu0 0.0
    %1321 = vmatpush1.msra.mxu0 0.0
    %1322 = vmatprep.subr.mxu0 0.0
    %1323 = vmatpush1.msra.mxu0 0.0
    %1324 = vmatprep.subr.mxu0 0.0
    %1325 = vmatpush1.msra.mxu0 0.0
    %1326 = vmatprep.subr.mxu0 0.0
    %1327 = vmatpush1.msra.mxu0 0.0
    %1328 = vmatprep.subr.mxu0 0.0
    %1329 = vmatpush1.msra.mxu0 0.0
    %1330 = vmatprep.subr.mxu0 0.0
    %1331 = vmatpush1.msra.mxu0 0.0
    %1332 = vmatprep.subr.mxu0 0.0
    %1333 = vmatpush1.msra.mxu0 0.0
    %1334 = vmatprep.subr.mxu0 0.0
    %1335 = vmatpush1.msra.mxu0 0.0
    %1336 = vmatprep.subr.mxu0 0.0
    %1337 = vmatpush1.msra.mxu0 0.0
    %1338 = vmatprep.subr.mxu0 0.0
    %1339 = vmatpush1.msra.mxu0 0.0
    %1340 = vmatprep.subr.mxu0 0.0
    %1341 = vmatpush1.msra.mxu0 0.0
    %1342 = vmatprep.subr.mxu0 0.0
    %1343 = vmatpush1.msra.mxu0 0.0
    %1344 = vmatprep.subr.mxu0 0.0
    %1345 = vmatpush1.msra.mxu0 0.0
    %1346 = vmatprep.subr.mxu0 0.0
    %1347 = vmatpush1.msra.mxu0 0.0
    %1348 = vmatprep.subr.mxu0 0.0
    %1349 = vmatpush1.msra.mxu0 0.0
    %1350 = vmatprep.subr.mxu0 0.0
    %1351 = vmatpush1.msra.mxu0 0.0
    %1352 = vmatprep.subr.mxu0 0.0
    %1353 = vmatpush1.msra.mxu0 0.0
    %1354 = vmatprep.subr.mxu0 0.0
    %1355 = vmatpush1.msra.mxu0 0.0
    %1356 = vmatprep.subr.mxu0 0.0
    %1357 = vmatpush1.msra.mxu0 0.0
    %1358 = vmatprep.subr.mxu0 0.0
    %1359 = vmatpush1.msra.mxu0 0.0
    %1360 = vmatprep.subr.mxu0 0.0
    %1361 = vmatpush1.msra.mxu0 0.0
    %1362 = vmatprep.mubr.f32.mxu0 0.0
    %1363 = vmatmul.mubr.f32.gmra.mrb[0].mxu0 %v1225
    %v1364 = vpop.f32.mrb[0].mxu0
    %v1365 = vadd.f32 0.0, %v1364
    %v1366 = vpop.f32.mrb[0].mxu0
    %v1367 = vadd.f32 0.0, %v1366
    %1368 = vdwg.mxu0
    %v1369 = vadd.f32 %v1170, %v1294
    %v1370 = vadd.f32 %v1171, %v1296
    %v1371 = vadd.f32 %v1172, %v1365
    %v1372 = vadd.f32 %v1173, %v1367
    %1373 = vrot.lane.b32.xlu0 %v15, 112
    %v1374 = vpop.permute.xlu0 %1373
    %1375 = vrot.lane.b32.xlu0 %v16, 112
    %v1376 = vpop.permute.xlu0 %1375
    %1377 = vrot.lane.b32.xlu0 %v17, 112
    %v1378 = vpop.permute.xlu0 %1377
    %1379 = vrot.lane.b32.xlu0 %v18, 112
    %v1380 = vpop.permute.xlu0 %1379
    %vm1381 = vcmp.lt.s32.totalorder %v20, 112
    %v1382 = vsel %vm1381, %v1378, %v1380
    %v1383 = vsel %vm1381, %v1376, %v1378
    %v1384 = vsel %vm1381, %v1374, %v1376
    %v1385 = vsel %vm1381, %v1380, %v1374
    %vm1386 = vmand %vm1199, %vm111
    %vm1387 = vmand %vm1200, %vm112
    %vm1388 = vmand %vm1201, %vm113
    %vm1389 = vmand %vm1202, %vm114
    %vm1390 = vmand %vm1386, %vm119
    %vm1391 = vmand %vm1387, %vm120
    %vm1392 = vmand %vm1388, %vm121
    %vm1393 = vmand %vm1389, %vm122
    %v1394 = vsel %vm1390, 1, 0
    %v1395 = vsel %vm1391, 1, 0
    %v1396 = vsel %vm1392, 1, 0
    %v1397 = vsel %vm1393, 1, 0
    %vm1398 = vcmp.eq.s32.totalorder %v1394, 1
    %vm1399 = vcmp.eq.s32.totalorder %v1395, 1
    %vm1400 = vcmp.eq.s32.totalorder %v1396, 1
    %vm1401 = vcmp.eq.s32.totalorder %v1397, 1
    %v1402 = vsel %vm1398, %v1384, 0.0
    %v1403 = vsel %vm1399, %v1383, 0.0
    %v1404 = vsel %vm1400, %v1382, 0.0
    %v1405 = vsel %vm1401, %v1385, 0.0
    %v1406 = vld [vmem:[%s1 + $0x38] sm:$0xff]
    %v1408 = vsel %vm140, %v1406, 0
    %1410 = vmatprep.subr.mxu0 %v1403
    %1411 = vmatpush1.msra.mxu0 %v1402
    %1412 = vmatprep.subr.mxu0 0.0
    %1413 = vmatpush1.msra.mxu0 0.0
    %1414 = vmatprep.subr.mxu0 0.0
    %1415 = vmatpush1.msra.mxu0 0.0
    %1416 = vmatprep.subr.mxu0 0.0
    %1417 = vmatpush1.msra.mxu0 0.0
    %1418 = vmatprep.subr.mxu0 0.0
    %1419 = vmatpush1.msra.mxu0 0.0
    %1420 = vmatprep.subr.mxu0 0.0
    %1421 = vmatpush1.msra.mxu0 0.0
    %1422 = vmatprep.subr.mxu0 0.0
    %1423 = vmatpush1.msra.mxu0 0.0
    %1424 = vmatprep.subr.mxu0 0.0
    %1425 = vmatpush1.msra.mxu0 0.0
    %1426 = vmatprep.subr.mxu0 0.0
    %1427 = vmatpush1.msra.mxu0 0.0
    %1428 = vmatprep.subr.mxu0 0.0
    %1429 = vmatpush1.msra.mxu0 0.0
    %1430 = vmatprep.subr.mxu0 0.0
    %1431 = vmatpush1.msra.mxu0 0.0
    %1432 = vmatprep.subr.mxu0 0.0
    %1433 = vmatpush1.msra.mxu0 0.0
    %1434 = vmatprep.subr.mxu0 0.0
    %1435 = vmatpush1.msra.mxu0 0.0
    %1436 = vmatprep.subr.mxu0 0.0
    %1437 = vmatpush1.msra.mxu0 0.0
    %1438 = vmatprep.subr.mxu0 0.0
    %1439 = vmatpush1.msra.mxu0 0.0
    %1440 = vmatprep.subr.mxu0 0.0
    %1441 = vmatpush1.msra.mxu0 0.0
    %1442 = vmatprep.subr.mxu0 0.0
    %1443 = vmatpush1.msra.mxu0 0.0
    %1444 = vmatprep.subr.mxu0 0.0
    %1445 = vmatpush1.msra.mxu0 0.0
    %1446 = vmatprep.subr.mxu0 0.0
    %1447 = vmatpush1.msra.mxu0 0.0
    %1448 = vmatprep.subr.mxu0 0.0
    %1449 = vmatpush1.msra.mxu0 0.0
    %1450 = vmatprep.subr.mxu0 0.0
    %1451 = vmatpush1.msra.mxu0 0.0
    %1452 = vmatprep.subr.mxu0 0.0
    %1453 = vmatpush1.msra.mxu0 0.0
    %1454 = vmatprep.subr.mxu0 0.0
    %1455 = vmatpush1.msra.mxu0 0.0
    %1456 = vmatprep.subr.mxu0 0.0
    %1457 = vmatpush1.msra.mxu0 0.0
    %1458 = vmatprep.subr.mxu0 0.0
    %1459 = vmatpush1.msra.mxu0 0.0
    %1460 = vmatprep.subr.mxu0 0.0
    %1461 = vmatpush1.msra.mxu0 0.0
    %1462 = vmatprep.subr.mxu0 0.0
    %1463 = vmatpush1.msra.mxu0 0.0
    %1464 = vmatprep.subr.mxu0 0.0
    %1465 = vmatpush1.msra.mxu0 0.0
    %1466 = vmatprep.subr.mxu0 0.0
    %1467 = vmatpush1.msra.mxu0 0.0
    %1468 = vmatprep.subr.mxu0 0.0
    %1469 = vmatpush1.msra.mxu0 0.0
    %1470 = vmatprep.subr.mxu0 0.0
    %1471 = vmatpush1.msra.mxu0 0.0
    %1472 = vmatprep.subr.mxu0 0.0
    %1473 = vmatpush1.msra.mxu0 0.0
    %1474 = vmatprep.mubr.f32.mxu0 0.0
    %1475 = vmatmul.mubr.f32.gmra.mrb[0].mxu0 %v1408
    %v1476 = vpop.f32.mrb[0].mxu0
    %v1477 = vadd.f32 0.0, %v1476
    %v1478 = vpop.f32.mrb[0].mxu0
    %v1479 = vadd.f32 0.0, %v1478
    %1480 = vdwg.mxu0
    %1481 = vmatprep.subr.mxu0 %v1405
    %1482 = vmatpush1.msra.mxu0 %v1404
    %1483 = vmatprep.subr.mxu0 0.0
    %1484 = vmatpush1.msra.mxu0 0.0
    %1485 = vmatprep.subr.mxu0 0.0
    %1486 = vmatpush1.msra.mxu0 0.0
    %1487 = vmatprep.subr.mxu0 0.0
    %1488 = vmatpush1.msra.mxu0 0.0
    %1489 = vmatprep.subr.mxu0 0.0
    %1490 = vmatpush1.msra.mxu0 0.0
    %1491 = vmatprep.subr.mxu0 0.0
    %1492 = vmatpush1.msra.mxu0 0.0
    %1493 = vmatprep.subr.mxu0 0.0
    %1494 = vmatpush1.msra.mxu0 0.0
    %1495 = vmatprep.subr.mxu0 0.0
    %1496 = vmatpush1.msra.mxu0 0.0
    %1497 = vmatprep.subr.mxu0 0.0
    %1498 = vmatpush1.msra.mxu0 0.0
    %1499 = vmatprep.subr.mxu0 0.0
    %1500 = vmatpush1.msra.mxu0 0.0
    %1501 = vmatprep.subr.mxu0 0.0
    %1502 = vmatpush1.msra.mxu0 0.0
    %1503 = vmatprep.subr.mxu0 0.0
    %1504 = vmatpush1.msra.mxu0 0.0
    %1505 = vmatprep.subr.mxu0 0.0
    %1506 = vmatpush1.msra.mxu0 0.0
    %1507 = vmatprep.subr.mxu0 0.0
    %1508 = vmatpush1.msra.mxu0 0.0
    %1509 = vmatprep.subr.mxu0 0.0
    %1510 = vmatpush1.msra.mxu0 0.0
    %1511 = vmatprep.subr.mxu0 0.0
    %1512 = vmatpush1.msra.mxu0 0.0
    %1513 = vmatprep.subr.mxu0 0.0
    %1514 = vmatpush1.msra.mxu0 0.0
    %1515 = vmatprep.subr.mxu0 0.0
    %1516 = vmatpush1.msra.mxu0 0.0
    %1517 = vmatprep.subr.mxu0 0.0
    %1518 = vmatpush1.msra.mxu0 0.0
    %1519 = vmatprep.subr.mxu0 0.0
    %1520 = vmatpush1.msra.mxu0 0.0
    %1521 = vmatprep.subr.mxu0 0.0
    %1522 = vmatpush1.msra.mxu0 0.0
    %1523 = vmatprep.subr.mxu0 0.0
    %1524 = vmatpush1.msra.mxu0 0.0
    %1525 = vmatprep.subr.mxu0 0.0
    %1526 = vmatpush1.msra.mxu0 0.0
    %1527 = vmatprep.subr.mxu0 0.0
    %1528 = vmatpush1.msra.mxu0 0.0
    %1529 = vmatprep.subr.mxu0 0.0
    %1530 = vmatpush1.msra.mxu0 0.0
    %1531 = vmatprep.subr.mxu0 0.0
    %1532 = vmatpush1.msra.mxu0 0.0
    %1533 = vmatprep.subr.mxu0 0.0
    %1534 = vmatpush1.msra.mxu0 0.0
    %1535 = vmatprep.subr.mxu0 0.0
    %1536 = vmatpush1.msra.mxu0 0.0
    %1537 = vmatprep.subr.mxu0 0.0
    %1538 = vmatpush1.msra.mxu0 0.0
    %1539 = vmatprep.subr.mxu0 0.0
    %1540 = vmatpush1.msra.mxu0 0.0
    %1541 = vmatprep.subr.mxu0 0.0
    %1542 = vmatpush1.msra.mxu0 0.0
    %1543 = vmatprep.subr.mxu0 0.0
    %1544 = vmatpush1.msra.mxu0 0.0
    %1545 = vmatprep.mubr.f32.mxu0 0.0
    %1546 = vmatmul.mubr.f32.gmra.mrb[0].mxu0 %v1408
    %v1547 = vpop.f32.mrb[0].mxu0
    %v1548 = vadd.f32 0.0, %v1547
    %v1549 = vpop.f32.mrb[0].mxu0
    %v1550 = vadd.f32 0.0, %v1549
    %1551 = vdwg.mxu0
    %v1552 = vadd.f32 %v1369, %v1477
    %v1553 = vadd.f32 %v1370, %v1479
    %v1554 = vadd.f32 %v1371, %v1548
    %v1555 = vadd.f32 %v1372, %v1550
    %1556 = vrot.lane.b32.xlu0 %v15, 111
    %v1557 = vpop.permute.xlu0 %1556
    %1558 = vrot.lane.b32.xlu0 %v16, 111
    %v1559 = vpop.permute.xlu0 %1558
    %1560 = vrot.lane.b32.xlu0 %v17, 111
    %v1561 = vpop.permute.xlu0 %1560
    %1562 = vrot.lane.b32.xlu0 %v18, 111
    %v1563 = vpop.permute.xlu0 %1562
    %vm1564 = vcmp.lt.s32.totalorder %v20, 111
    %v1565 = vsel %vm1564, %v1561, %v1563
    %v1566 = vsel %vm1564, %v1559, %v1561
    %v1567 = vsel %vm1564, %v1557, %v1559
    %v1568 = vsel %vm1564, %v1563, %v1557
    %vm1569 = vmand %vm1199, %vm448
    %vm1570 = vmand %vm1200, %vm449
    %vm1571 = vmand %vm1201, %vm450
    %vm1572 = vmand %vm1202, %vm451
    %vm1573 = vmand %vm1569, %vm456
    %vm1574 = vmand %vm1570, %vm457
    %vm1575 = vmand %vm1571, %vm458
    %vm1576 = vmand %vm1572, %vm459
    %v1577 = vsel %vm1573, 1, 0
    %v1578 = vsel %vm1574, 1, 0
    %v1579 = vsel %vm1575, 1, 0
    %v1580 = vsel %vm1576, 1, 0
    %vm1581 = vcmp.eq.s32.totalorder %v1577, 1
    %vm1582 = vcmp.eq.s32.totalorder %v1578, 1
    %vm1583 = vcmp.eq.s32.totalorder %v1579, 1
    %vm1584 = vcmp.eq.s32.totalorder %v1580, 1
    %v1585 = vsel %vm1581, %v1567, 0.0
    %v1586 = vsel %vm1582, %v1566, 0.0
    %v1587 = vsel %vm1583, %v1565, 0.0
    %v1588 = vsel %vm1584, %v1568, 0.0
    %v1589 = vld [vmem:[%s1 + $0x40] sm:$0xff]
    %v1591 = vsel %vm140, %v1589, 0
    %1593 = vmatprep.subr.mxu0 %v1586
    %1594 = vmatpush1.msra.mxu0 %v1585
    %1595 = vmatprep.subr.mxu0 0.0
    %1596 = vmatpush1.msra.mxu0 0.0
    %1597 = vmatprep.subr.mxu0 0.0
    %1598 = vmatpush1.msra.mxu0 0.0
    %1599 = vmatprep.subr.mxu0 0.0
    %1600 = vmatpush1.msra.mxu0 0.0
    %1601 = vmatprep.subr.mxu0 0.0
    %1602 = vmatpush1.msra.mxu0 0.0
    %1603 = vmatprep.subr.mxu0 0.0
    %1604 = vmatpush1.msra.mxu0 0.0
    %1605 = vmatprep.subr.mxu0 0.0
    %1606 = vmatpush1.msra.mxu0 0.0
    %1607 = vmatprep.subr.mxu0 0.0
    %1608 = vmatpush1.msra.mxu0 0.0
    %1609 = vmatprep.subr.mxu0 0.0
    %1610 = vmatpush1.msra.mxu0 0.0
    %1611 = vmatprep.subr.mxu0 0.0
    %1612 = vmatpush1.msra.mxu0 0.0
    %1613 = vmatprep.subr.mxu0 0.0
    %1614 = vmatpush1.msra.mxu0 0.0
    %1615 = vmatprep.subr.mxu0 0.0
    %1616 = vmatpush1.msra.mxu0 0.0
    %1617 = vmatprep.subr.mxu0 0.0
    %1618 = vmatpush1.msra.mxu0 0.0
    %1619 = vmatprep.subr.mxu0 0.0
    %1620 = vmatpush1.msra.mxu0 0.0
    %1621 = vmatprep.subr.mxu0 0.0
    %1622 = vmatpush1.msra.mxu0 0.0
    %1623 = vmatprep.subr.mxu0 0.0
    %1624 = vmatpush1.msra.mxu0 0.0
    %1625 = vmatprep.subr.mxu0 0.0
    %1626 = vmatpush1.msra.mxu0 0.0
    %1627 = vmatprep.subr.mxu0 0.0
    %1628 = vmatpush1.msra.mxu0 0.0
    %1629 = vmatprep.subr.mxu0 0.0
    %1630 = vmatpush1.msra.mxu0 0.0
    %1631 = vmatprep.subr.mxu0 0.0
    %1632 = vmatpush1.msra.mxu0 0.0
    %1633 = vmatprep.subr.mxu0 0.0
    %1634 = vmatpush1.msra.mxu0 0.0
    %1635 = vmatprep.subr.mxu0 0.0
    %1636 = vmatpush1.msra.mxu0 0.0
    %1637 = vmatprep.subr.mxu0 0.0
    %1638 = vmatpush1.msra.mxu0 0.0
    %1639 = vmatprep.subr.mxu0 0.0
    %1640 = vmatpush1.msra.mxu0 0.0
    %1641 = vmatprep.subr.mxu0 0.0
    %1642 = vmatpush1.msra.mxu0 0.0
    %1643 = vmatprep.subr.mxu0 0.0
    %1644 = vmatpush1.msra.mxu0 0.0
    %1645 = vmatprep.subr.mxu0 0.0
    %1646 = vmatpush1.msra.mxu0 0.0
    %1647 = vmatprep.subr.mxu0 0.0
    %1648 = vmatpush1.msra.mxu0 0.0
    %1649 = vmatprep.subr.mxu0 0.0
    %1650 = vmatpush1.msra.mxu0 0.0
    %1651 = vmatprep.subr.mxu0 0.0
    %1652 = vmatpush1.msra.mxu0 0.0
    %1653 = vmatprep.subr.mxu0 0.0
    %1654 = vmatpush1.msra.mxu0 0.0
    %1655 = vmatprep.subr.mxu0 0.0
    %1656 = vmatpush1.msra.mxu0 0.0
    %1657 = vmatprep.mubr.f32.mxu0 0.0
    %1658 = vmatmul.mubr.f32.gmra.mrb[0].mxu0 %v1591
    %v1659 = vpop.f32.mrb[0].mxu0
    %v1660 = vadd.f32 0.0, %v1659
    %v1661 = vpop.f32.mrb[0].mxu0
    %v1662 = vadd.f32 0.0, %v1661
    %1663 = vdwg.mxu0
    %1664 = vmatprep.subr.mxu0 %v1588
    %1665 = vmatpush1.msra.mxu0 %v1587
    %1666 = vmatprep.subr.mxu0 0.0
    %1667 = vmatpush1.msra.mxu0 0.0
    %1668 = vmatprep.subr.mxu0 0.0
    %1669 = vmatpush1.msra.mxu0 0.0
    %1670 = vmatprep.subr.mxu0 0.0
    %1671 = vmatpush1.msra.mxu0 0.0
    %1672 = vmatprep.subr.mxu0 0.0
    %1673 = vmatpush1.msra.mxu0 0.0
    %1674 = vmatprep.subr.mxu0 0.0
    %1675 = vmatpush1.msra.mxu0 0.0
    %1676 = vmatprep.subr.mxu0 0.0
    %1677 = vmatpush1.msra.mxu0 0.0
    %1678 = vmatprep.subr.mxu0 0.0
    %1679 = vmatpush1.msra.mxu0 0.0
    %1680 = vmatprep.subr.mxu0 0.0
    %1681 = vmatpush1.msra.mxu0 0.0
    %1682 = vmatprep.subr.mxu0 0.0
    %1683 = vmatpush1.msra.mxu0 0.0
    %1684 = vmatprep.subr.mxu0 0.0
    %1685 = vmatpush1.msra.mxu0 0.0
    %1686 = vmatprep.subr.mxu0 0.0
    %1687 = vmatpush1.msra.mxu0 0.0
    %1688 = vmatprep.subr.mxu0 0.0
    %1689 = vmatpush1.msra.mxu0 0.0
    %1690 = vmatprep.subr.mxu0 0.0
    %1691 = vmatpush1.msra.mxu0 0.0
    %1692 = vmatprep.subr.mxu0 0.0
    %1693 = vmatpush1.msra.mxu0 0.0
    %1694 = vmatprep.subr.mxu0 0.0
    %1695 = vmatpush1.msra.mxu0 0.0
    %1696 = vmatprep.subr.mxu0 0.0
    %1697 = vmatpush1.msra.mxu0 0.0
    %1698 = vmatprep.subr.mxu0 0.0
    %1699 = vmatpush1.msra.mxu0 0.0
    %1700 = vmatprep.subr.mxu0 0.0
    %1701 = vmatpush1.msra.mxu0 0.0
    %1702 = vmatprep.subr.mxu0 0.0
    %1703 = vmatpush1.msra.mxu0 0.0
    %1704 = vmatprep.subr.mxu0 0.0
    %1705 = vmatpush1.msra.mxu0 0.0
    %1706 = vmatprep.subr.mxu0 0.0
    %1707 = vmatpush1.msra.mxu0 0.0
    %1708 = vmatprep.subr.mxu0 0.0
    %1709 = vmatpush1.msra.mxu0 0.0
    %1710 = vmatprep.subr.mxu0 0.0
    %1711 = vmatpush1.msra.mxu0 0.0
    %1712 = vmatprep.subr.mxu0 0.0
    %1713 = vmatpush1.msra.mxu0 0.0
    %1714 = vmatprep.subr.mxu0 0.0
    %1715 = vmatpush1.msra.mxu0 0.0
    %1716 = vmatprep.subr.mxu0 0.0
    %1717 = vmatpush1.msra.mxu0 0.0
    %1718 = vmatprep.subr.mxu0 0.0
    %1719 = vmatpush1.msra.mxu0 0.0
    %1720 = vmatprep.subr.mxu0 0.0
    %1721 = vmatpush1.msra.mxu0 0.0
    %1722 = vmatprep.subr.mxu0 0.0
    %1723 = vmatpush1.msra.mxu0 0.0
    %1724 = vmatprep.subr.mxu0 0.0
    %1725 = vmatpush1.msra.mxu0 0.0
    %1726 = vmatprep.subr.mxu0 0.0
    %1727 = vmatpush1.msra.mxu0 0.0
    %1728 = vmatprep.mubr.f32.mxu0 0.0
    %1729 = vmatmul.mubr.f32.gmra.mrb[0].mxu0 %v1591
    %v1730 = vpop.f32.mrb[0].mxu0
    %v1731 = vadd.f32 0.0, %v1730
    %v1732 = vpop.f32.mrb[0].mxu0
    %v1733 = vadd.f32 0.0, %v1732
    %1734 = vdwg.mxu0
    %v1735 = vadd.f32 %v1552, %v1660
    %v1736 = vadd.f32 %v1553, %v1662
    %v1737 = vadd.f32 %v1554, %v1731
    %v1738 = vadd.f32 %v1555, %v1733
    %v1739 = vld [vmem:[%s1 + $0x48] sm:$0xff]
    %1741 = vset.pattern.permute.xlu0 0
    %1742 = vperm.xlu0 %1741, %v1739
    %v1743 = vpop.permute.xlu0 %1742
    %v1745 = vadd.f32 %v1735, %v1743
    %v1746 = vadd.f32 %v1736, %v1743
    %v1747 = vadd.f32 %v1737, %v1743
    %v1748 = vadd.f32 %v1738, %v1743
    %v1749 = vmax.f32 %v1745, 0.0
    %v1750 = vmax.f32 %v1746, 0.0
    %v1751 = vmax.f32 %v1747, 0.0
    %v1752 = vmax.f32 %v1748, 0.0
    %v1753 = vadd.f32 %v1749, %v1750
    %1754 = vadd.xlane.f32.xlu0 %v1753
    %v1755 = vpop.xlane.xlu0 %1754
    %v1756 = vadd.f32 %v1751, %v1752
    %1757 = vadd.xlane.f32.xlu0 %v1756
    %v1758 = vpop.xlane.xlu0 %1757
    %vm1759 = vcmask 7168
    %v1760 = vsel %vm1759, %v1755, %v1758
    %v1761 = vmul.f32 %v1760, 0.00390625
    %v1762 = vld [vmem:[%s1 + $0x50] sm:$0xff]
    %v1763 = vld [vmem:[%s1 + $0x58] sm:$0xff]
    %v1764 = vld [vmem:[%s1 + $0x60] sm:$0xff]
    %v1765 = vld [vmem:[%s1 + $0x68] sm:$0xff]
    %v1766 = vld [vmem:[%s1 + $0x70] sm:$0xff]
    %v1767 = vld [vmem:[%s1 + $0x78] sm:$0xff]
    %v1768 = vld [vmem:[%s1 + $0x80] sm:$0xff]
    %v1769 = vld [vmem:[%s1 + $0x88] sm:$0xff]
    %1771 = vset.pattern.permute.xlu0 0
    %1772 = vperm.xlu0 %1771, %v1766
    %v1773 = vpop.permute.xlu0 %1772
    %1776 = vset.pattern.permute.xlu0 0
    %1777 = vperm.xlu0 %1776, %v1767
    %v1778 = vpop.permute.xlu0 %1777
    %1781 = vset.pattern.permute.xlu0 0
    %1782 = vperm.xlu0 %1781, %v1768
    %v1783 = vpop.permute.xlu0 %1782
    %1786 = vset.pattern.permute.xlu0 0
    %1787 = vperm.xlu0 %1786, %v1769
    %v1788 = vpop.permute.xlu0 %1787
    %v1791 = vsel %vm140, %v1762, 0
    %v1794 = vsel %vm140, %v1763, 0
    %v1797 = vsel %vm140, %v1764, 0
    %v1800 = vsel %vm140, %v1765, 0
    %1802 = vmatprep.subr.mxu0 0.0
    %1803 = vmatpush1.msra.mxu0 %v1761
    %1804 = vmatprep.subr.mxu0 0.0
    %1805 = vmatpush1.msra.mxu0 0.0
    %1806 = vmatprep.subr.mxu0 0.0
    %1807 = vmatpush1.msra.mxu0 0.0
    %1808 = vmatprep.subr.mxu0 0.0
    %1809 = vmatpush1.msra.mxu0 0.0
    %1810 = vmatprep.subr.mxu0 0.0
    %1811 = vmatpush1.msra.mxu0 0.0
    %1812 = vmatprep.subr.mxu0 0.0
    %1813 = vmatpush1.msra.mxu0 0.0
    %1814 = vmatprep.subr.mxu0 0.0
    %1815 = vmatpush1.msra.mxu0 0.0
    %1816 = vmatprep.subr.mxu0 0.0
    %1817 = vmatpush1.msra.mxu0 0.0
    %1818 = vmatprep.subr.mxu0 0.0
    %1819 = vmatpush1.msra.mxu0 0.0
    %1820 = vmatprep.subr.mxu0 0.0
    %1821 = vmatpush1.msra.mxu0 0.0
    %1822 = vmatprep.subr.mxu0 0.0
    %1823 = vmatpush1.msra.mxu0 0.0
    %1824 = vmatprep.subr.mxu0 0.0
    %1825 = vmatpush1.msra.mxu0 0.0
    %1826 = vmatprep.subr.mxu0 0.0
    %1827 = vmatpush1.msra.mxu0 0.0
    %1828 = vmatprep.subr.mxu0 0.0
    %1829 = vmatpush1.msra.mxu0 0.0
    %1830 = vmatprep.subr.mxu0 0.0
    %1831 = vmatpush1.msra.mxu0 0.0
    %1832 = vmatprep.subr.mxu0 0.0
    %1833 = vmatpush1.msra.mxu0 0.0
    %1834 = vmatprep.subr.mxu0 0.0
    %1835 = vmatpush1.msra.mxu0 0.0
    %1836 = vmatprep.subr.mxu0 0.0
    %1837 = vmatpush1.msra.mxu0 0.0
    %1838 = vmatprep.subr.mxu0 0.0
    %1839 = vmatpush1.msra.mxu0 0.0
    %1840 = vmatprep.subr.mxu0 0.0
    %1841 = vmatpush1.msra.mxu0 0.0
    %1842 = vmatprep.subr.mxu0 0.0
    %1843 = vmatpush1.msra.mxu0 0.0
    %1844 = vmatprep.subr.mxu0 0.0
    %1845 = vmatpush1.msra.mxu0 0.0
    %1846 = vmatprep.subr.mxu0 0.0
    %1847 = vmatpush1.msra.mxu0 0.0
    %1848 = vmatprep.subr.mxu0 0.0
    %1849 = vmatpush1.msra.mxu0 0.0
    %1850 = vmatprep.subr.mxu0 0.0
    %1851 = vmatpush1.msra.mxu0 0.0
    %1852 = vmatprep.subr.mxu0 0.0
    %1853 = vmatpush1.msra.mxu0 0.0
    %1854 = vmatprep.subr.mxu0 0.0
    %1855 = vmatpush1.msra.mxu0 0.0
    %1856 = vmatprep.subr.mxu0 0.0
    %1857 = vmatpush1.msra.mxu0 0.0
    %1858 = vmatprep.subr.mxu0 0.0
    %1859 = vmatpush1.msra.mxu0 0.0
    %1860 = vmatprep.subr.mxu0 0.0
    %1861 = vmatpush1.msra.mxu0 0.0
    %1862 = vmatprep.subr.mxu0 0.0
    %1863 = vmatpush1.msra.mxu0 0.0
    %1864 = vmatprep.subr.mxu0 0.0
    %1865 = vmatpush1.msra.mxu0 0.0
    %1866 = vmatprep.mubr.f32.mxu0 0.0
    %1867 = vmatmul.mubr.f32.gmra.mrb[0].mxu0 %v1791
    %v1868 = vpop.f32.mrb[0].mxu0
    %v1869 = vadd.f32 %v1773, %v1868
    %v1870 = vpop.f32.mrb[0].mxu0
    %1871 = vmatprep.mubr.f32.mxu0 0.0
    %1872 = vmatmul.mubr.f32.gmra.mrb[0].mxu0 %v1794
    %v1873 = vpop.f32.mrb[0].mxu0
    %v1874 = vadd.f32 %v1778, %v1873
    %v1875 = vpop.f32.mrb[0].mxu0
    %1876 = vmatprep.mubr.f32.mxu0 0.0
    %1877 = vmatmul.mubr.f32.gmra.mrb[0].mxu0 %v1797
    %v1878 = vpop.f32.mrb[0].mxu0
    %v1879 = vadd.f32 %v1783, %v1878
    %v1880 = vpop.f32.mrb[0].mxu0
    %1881 = vmatprep.mubr.f32.mxu0 0.0
    %1882 = vmatmul.mubr.f32.gmra.mrb[0].mxu0 %v1800
    %v1883 = vpop.f32.mrb[0].mxu0
    %v1884 = vadd.f32 %v1788, %v1883
    %v1885 = vpop.f32.mrb[0].mxu0
    %1886 = vdwg.mxu0
    %v1887 = vld [vmem:[%s2] sm:$0x1]
    %1888 = vset.pattern.permute.xlu0 1
    %1889 = vperm.xlu0 %1888, %v1766
    %v1890 = vpop.permute.xlu0 %1889
    %1892 = vset.pattern.permute.xlu0 1
    %1893 = vperm.xlu0 %1892, %v1767
    %v1894 = vpop.permute.xlu0 %1893
    %1896 = vset.pattern.permute.xlu0 1
    %1897 = vperm.xlu0 %1896, %v1768
    %v1898 = vpop.permute.xlu0 %1897
    %1900 = vset.pattern.permute.xlu0 1
    %1901 = vperm.xlu0 %1900, %v1769
    %v1902 = vpop.permute.xlu0 %1901
    %v1904 = vlaneseq
    %v1905 = vshrl.u32 %v1904, 7
    %v1906 = vsub.s32 0, %v1905
    %v1907 = vrot.slane %v1887, %v1906
    %v1908 = vmul.f32 %v1890, %v1907
    %v1909 = vmul.f32 %v1894, %v1907
    %v1910 = vmul.f32 %v1898, %v1907
    %v1911 = vmul.f32 %v1902, %v1907
    %1912 = vset.pattern.permute.xlu0 2
    %1913 = vperm.xlu0 %1912, %v1766
    %v1914 = vpop.permute.xlu0 %1913
    %1916 = vset.pattern.permute.xlu0 2
    %1917 = vperm.xlu0 %1916, %v1767
    %v1918 = vpop.permute.xlu0 %1917
    %1920 = vset.pattern.permute.xlu0 2
    %1921 = vperm.xlu0 %1920, %v1768
    %v1922 = vpop.permute.xlu0 %1921
    %1924 = vset.pattern.permute.xlu0 2
    %1925 = vperm.xlu0 %1924, %v1769
    %v1926 = vpop.permute.xlu0 %1925
    %v1928 = vadd.f32 %v1908, %v1914
    %v1929 = vadd.f32 %v1909, %v1918
    %v1930 = vadd.f32 %v1910, %v1922
    %v1931 = vadd.f32 %v1911, %v1926
    %v1932 = vmax.f32 %v1928, 0.0
    %v1933 = vmax.f32 %v1929, 0.0
    %v1934 = vmax.f32 %v1930, 0.0
    %v1935 = vmax.f32 %v1931, 0.0
    %v1936 = vld [vmem:[%s2 + $0x1] sm:$0x1]
    %1937 = vset.pattern.permute.xlu0 4
    %1938 = vperm.xlu0 %1937, %v1766
    %v1939 = vpop.permute.xlu0 %1938
    %1941 = vset.pattern.permute.xlu0 4
    %1942 = vperm.xlu0 %1941, %v1767
    %v1943 = vpop.permute.xlu0 %1942
    %1945 = vset.pattern.permute.xlu0 4
    %1946 = vperm.xlu0 %1945, %v1768
    %v1947 = vpop.permute.xlu0 %1946
    %1949 = vset.pattern.permute.xlu0 4
    %1950 = vperm.xlu0 %1949, %v1769
    %v1951 = vpop.permute.xlu0 %1950
    %v1953 = vlaneseq
    %v1954 = vshrl.u32 %v1953, 7
    %v1955 = vsub.s32 0, %v1954
    %v1956 = vrot.slane %v1936, %v1955
    %v1957 = vmul.f32 %v1939, %v1956
    %v1958 = vmul.f32 %v1943, %v1956
    %v1959 = vmul.f32 %v1947, %v1956
    %v1960 = vmul.f32 %v1951, %v1956
    %1961 = vset.pattern.permute.xlu0 3
    %1962 = vperm.xlu0 %1961, %v1766
    %v1963 = vpop.permute.xlu0 %1962
    %1965 = vset.pattern.permute.xlu0 3
    %1966 = vperm.xlu0 %1965, %v1767
    %v1967 = vpop.permute.xlu0 %1966
    %1969 = vset.pattern.permute.xlu0 3
    %1970 = vperm.xlu0 %1969, %v1768
    %v1971 = vpop.permute.xlu0 %1970
    %1973 = vset.pattern.permute.xlu0 3
    %1974 = vperm.xlu0 %1973, %v1769
    %v1975 = vpop.permute.xlu0 %1974
    %v1977 = vadd.f32 %v1963, %v1957
    %v1978 = vadd.f32 %v1967, %v1958
    %v1979 = vadd.f32 %v1971, %v1959
    %v1980 = vadd.f32 %v1975, %v1960
    %v1981 = vld [vmem:[%s2 + $0x2] sm:$0x1]
    %1982 = vset.pattern.permute.xlu0 5
    %1983 = vperm.xlu0 %1982, %v1766
    %v1984 = vpop.permute.xlu0 %1983
    %1986 = vset.pattern.permute.xlu0 5
    %1987 = vperm.xlu0 %1986, %v1767
    %v1988 = vpop.permute.xlu0 %1987
    %1990 = vset.pattern.permute.xlu0 5
    %1991 = vperm.xlu0 %1990, %v1768
    %v1992 = vpop.permute.xlu0 %1991
    %1994 = vset.pattern.permute.xlu0 5
    %1995 = vperm.xlu0 %1994, %v1769
    %v1996 = vpop.permute.xlu0 %1995
    %v1998 = vlaneseq
    %v1999 = vshrl.u32 %v1998, 7
    %v2000 = vsub.s32 0, %v1999
    %v2001 = vrot.slane %v1981, %v2000
    %v2002 = vmul.f32 %v1984, %v2001
    %v2003 = vmul.f32 %v1988, %v2001
    %v2004 = vmul.f32 %v1992, %v2001
    %v2005 = vmul.f32 %v1996, %v2001
    %v2006 = vadd.f32 %v1977, %v2002
    %v2007 = vadd.f32 %v1978, %v2003
    %v2008 = vadd.f32 %v1979, %v2004
    %v2009 = vadd.f32 %v1980, %v2005
    %v2010 = vld [vmem:[%s2 + $0x3] sm:$0x1]
    %2011 = vset.pattern.permute.xlu0 6
    %2012 = vperm.xlu0 %2011, %v1766
    %v2013 = vpop.permute.xlu0 %2012
    %2015 = vset.pattern.permute.xlu0 6
    %2016 = vperm.xlu0 %2015, %v1767
    %v2017 = vpop.permute.xlu0 %2016
    %2019 = vset.pattern.permute.xlu0 6
    %2020 = vperm.xlu0 %2019, %v1768
    %v2021 = vpop.permute.xlu0 %2020
    %2023 = vset.pattern.permute.xlu0 6
    %2024 = vperm.xlu0 %2023, %v1769
    %v2025 = vpop.permute.xlu0 %2024
    %v2027 = vlaneseq
    %v2028 = vshrl.u32 %v2027, 7
    %v2029 = vsub.s32 0, %v2028
    %v2030 = vrot.slane %v2010, %v2029
    %v2031 = vmul.f32 %v2013, %v2030
    %v2032 = vmul.f32 %v2017, %v2030
    %v2033 = vmul.f32 %v2021, %v2030
    %v2034 = vmul.f32 %v2025, %v2030
    %v2035 = vadd.f32 %v2006, %v2031
    %v2036 = vadd.f32 %v2007, %v2032
    %v2037 = vadd.f32 %v2008, %v2033
    %v2038 = vadd.f32 %v2009, %v2034
    %v2039 = vld [vmem:[%s2 + $0x4] sm:$0x1]
    %2040 = vset.pattern.permute.xlu0 7
    %2041 = vperm.xlu0 %2040, %v1766
    %v2042 = vpop.permute.xlu0 %2041
    %2044 = vset.pattern.permute.xlu0 7
    %2045 = vperm.xlu0 %2044, %v1767
    %v2046 = vpop.permute.xlu0 %2045
    %2048 = vset.pattern.permute.xlu0 7
    %2049 = vperm.xlu0 %2048, %v1768
    %v2050 = vpop.permute.xlu0 %2049
    %2052 = vset.pattern.permute.xlu0 7
    %2053 = vperm.xlu0 %2052, %v1769
    %v2054 = vpop.permute.xlu0 %2053
    %v2056 = vlaneseq
    %v2057 = vshrl.u32 %v2056, 7
    %v2058 = vsub.s32 0, %v2057
    %v2059 = vrot.slane %v2039, %v2058
    %v2060 = vmul.f32 %v2042, %v2059
    %v2061 = vmul.f32 %v2046, %v2059
    %v2062 = vmul.f32 %v2050, %v2059
    %v2063 = vmul.f32 %v2054, %v2059
    %v2064 = vadd.f32 %v2035, %v2060
    %v2065 = vadd.f32 %v2036, %v2061
    %v2066 = vadd.f32 %v2037, %v2062
    %v2067 = vadd.f32 %v2038, %v2063
    %v2068 = vmax.f32 %v2064, 0.0
    %v2069 = vmax.f32 %v2065, 0.0
    %v2070 = vmax.f32 %v2066, 0.0
    %v2071 = vmax.f32 %v2067, 0.0
    %v2072 = vld [vmem:[%s1 + $0x90] sm:$0xff]
    %v2073 = vld [vmem:[%s1 + $0x98] sm:$0xff]
    %v2074 = vld [vmem:[%s1 + $0xa0] sm:$0xff]
    %v2075 = vld [vmem:[%s1 + $0xa8] sm:$0xff]
    %v2076 = vld [vmem:[%s1 + $0xb0] sm:$0xff]
    %v2077 = vld [vmem:[%s1 + $0xb8] sm:$0xff]
    %v2078 = vld [vmem:[%s1 + $0xc0] sm:$0xff]
    %v2079 = vld [vmem:[%s1 + $0xc8] sm:$0xff]
    %v2080 = vld [vmem:[%s1 + $0xd0] sm:$0xff]
    %v2081 = vld [vmem:[%s1 + $0xd8] sm:$0xff]
    %v2082 = vld [vmem:[%s1 + $0xe0] sm:$0xff]
    %v2083 = vld [vmem:[%s1 + $0xe8] sm:$0xff]
    %v2084 = vld [vmem:[%s1 + $0xf0] sm:$0xff]
    %v2085 = vld [vmem:[%s1 + $0xf8] sm:$0xff]
    %v2086 = vld [vmem:[%s1 + $0x100] sm:$0xff]
    %v2087 = vld [vmem:[%s1 + $0x108] sm:$0xff]
    %2089 = vset.pattern.permute.xlu0 0
    %2090 = vperm.xlu0 %2089, %v2080
    %v2091 = vpop.permute.xlu0 %2090
    %2094 = vset.pattern.permute.xlu0 0
    %2095 = vperm.xlu0 %2094, %v2081
    %v2096 = vpop.permute.xlu0 %2095
    %2099 = vset.pattern.permute.xlu0 0
    %2100 = vperm.xlu0 %2099, %v2082
    %v2101 = vpop.permute.xlu0 %2100
    %2104 = vset.pattern.permute.xlu0 0
    %2105 = vperm.xlu0 %2104, %v2083
    %v2106 = vpop.permute.xlu0 %2105
    %2109 = vset.pattern.permute.xlu0 0
    %2110 = vperm.xlu0 %2109, %v2084
    %v2111 = vpop.permute.xlu0 %2110
    %2114 = vset.pattern.permute.xlu0 0
    %2115 = vperm.xlu0 %2114, %v2085
    %v2116 = vpop.permute.xlu0 %2115
    %2119 = vset.pattern.permute.xlu0 0
    %2120 = vperm.xlu0 %2119, %v2086
    %v2121 = vpop.permute.xlu0 %2120
    %2124 = vset.pattern.permute.xlu0 0
    %2125 = vperm.xlu0 %2124, %v2087
    %v2126 = vpop.permute.xlu0 %2125
    %vm2128 = vcmask 785408
    %v2130 = vsel %vm2128, %v2072, 0
    %v2133 = vsel %vm2128, %v2073, 0
    %v2136 = vsel %vm2128, %v2074, 0
    %v2139 = vsel %vm2128, %v2075, 0
    %v2142 = vsel %vm2128, %v2076, 0
    %v2145 = vsel %vm2128, %v2077, 0
    %v2148 = vsel %vm2128, %v2078, 0
    %v2151 = vsel %vm2128, %v2079, 0
    %2153 = vmatprep.subr.mxu0 0.0
    %2154 = vmatpush1.msra.mxu0 %v1869
    %2155 = vmatprep.subr.mxu0 0.0
    %2156 = vmatpush1.msra.mxu0 %v1874
    %2157 = vmatprep.subr.mxu0 0.0
    %2158 = vmatpush1.msra.mxu0 %v1879
    %2159 = vmatprep.subr.mxu0 0.0
    %2160 = vmatpush1.msra.mxu0 %v1884
    %2161 = vmatprep.subr.mxu0 0.0
    %2162 = vmatpush1.msra.mxu0 %v1932
    %2163 = vmatprep.subr.mxu0 0.0
    %2164 = vmatpush1.msra.mxu0 %v1933
    %2165 = vmatprep.subr.mxu0 0.0
    %2166 = vmatpush1.msra.mxu0 %v1934
    %2167 = vmatprep.subr.mxu0 0.0
    %2168 = vmatpush1.msra.mxu0 %v1935
    %2169 = vmatprep.subr.mxu0 0.0
    %2170 = vmatpush1.msra.mxu0 %v2068
    %2171 = vmatprep.subr.mxu0 0.0
    %2172 = vmatpush1.msra.mxu0 %v2069
    %2173 = vmatprep.subr.mxu0 0.0
    %2174 = vmatpush1.msra.mxu0 %v2070
    %2175 = vmatprep.subr.mxu0 0.0
    %2176 = vmatpush1.msra.mxu0 %v2071
    %2177 = vmatprep.subr.mxu0 0.0
    %2178 = vmatpush1.msra.mxu0 0.0
    %2179 = vmatprep.subr.mxu0 0.0
    %2180 = vmatpush1.msra.mxu0 0.0
    %2181 = vmatprep.subr.mxu0 0.0
    %2182 = vmatpush1.msra.mxu0 0.0
    %2183 = vmatprep.subr.mxu0 0.0
    %2184 = vmatpush1.msra.mxu0 0.0
    %2185 = vmatprep.subr.mxu0 0.0
    %2186 = vmatpush1.msra.mxu0 0.0
    %2187 = vmatprep.subr.mxu0 0.0
    %2188 = vmatpush1.msra.mxu0 0.0
    %2189 = vmatprep.subr.mxu0 0.0
    %2190 = vmatpush1.msra.mxu0 0.0
    %2191 = vmatprep.subr.mxu0 0.0
    %2192 = vmatpush1.msra.mxu0 0.0
    %2193 = vmatprep.subr.mxu0 0.0
    %2194 = vmatpush1.msra.mxu0 0.0
    %2195 = vmatprep.subr.mxu0 0.0
    %2196 = vmatpush1.msra.mxu0 0.0
    %2197 = vmatprep.subr.mxu0 0.0
    %2198 = vmatpush1.msra.mxu0 0.0
    %2199 = vmatprep.subr.mxu0 0.0
    %2200 = vmatpush1.msra.mxu0 0.0
    %2201 = vmatprep.subr.mxu0 0.0
    %2202 = vmatpush1.msra.mxu0 0.0
    %2203 = vmatprep.subr.mxu0 0.0
    %2204 = vmatpush1.msra.mxu0 0.0
    %2205 = vmatprep.subr.mxu0 0.0
    %2206 = vmatpush1.msra.mxu0 0.0
    %2207 = vmatprep.subr.mxu0 0.0
    %2208 = vmatpush1.msra.mxu0 0.0
    %2209 = vmatprep.subr.mxu0 0.0
    %2210 = vmatpush1.msra.mxu0 0.0
    %2211 = vmatprep.subr.mxu0 0.0
    %2212 = vmatpush1.msra.mxu0 0.0
    %2213 = vmatprep.subr.mxu0 0.0
    %2214 = vmatpush1.msra.mxu0 0.0
    %2215 = vmatprep.subr.mxu0 0.0
    %2216 = vmatpush1.msra.mxu0 0.0
    %2217 = vmatprep.mubr.f32.mxu0 0.0
    %2218 = vmatmul.mubr.f32.gmra.mrb[0].mxu0 %v2130
    %v2219 = vpop.f32.mrb[0].mxu0
    %v2220 = vadd.f32 %v2091, %v2219
    %v2221 = vpop.f32.mrb[0].mxu0
    %2222 = vmatprep.mubr.f32.mxu0 0.0
    %2223 = vmatmul.mubr.f32.gmra.mrb[0].mxu0 %v2133
    %v2224 = vpop.f32.mrb[0].mxu0
    %v2225 = vadd.f32 %v2096, %v2224
    %v2226 = vpop.f32.mrb[0].mxu0
    %2227 = vmatprep.mubr.f32.mxu0 0.0
    %2228 = vmatmul.mubr.f32.gmra.mrb[0].mxu0 %v2136
    %v2229 = vpop.f32.mrb[0].mxu0
    %v2230 = vadd.f32 %v2101, %v2229
    %v2231 = vpop.f32.mrb[0].mxu0
    %2232 = vmatprep.mubr.f32.mxu0 0.0
    %2233 = vmatmul.mubr.f32.gmra.mrb[0].mxu0 %v2139
    %v2234 = vpop.f32.mrb[0].mxu0
    %v2235 = vadd.f32 %v2106, %v2234
    %v2236 = vpop.f32.mrb[0].mxu0
    %2237 = vmatprep.mubr.f32.mxu0 0.0
    %2238 = vmatmul.mubr.f32.gmra.mrb[0].mxu0 %v2142
    %v2239 = vpop.f32.mrb[0].mxu0
    %v2240 = vadd.f32 %v2111, %v2239
    %v2241 = vpop.f32.mrb[0].mxu0
    %2242 = vmatprep.mubr.f32.mxu0 0.0
    %2243 = vmatmul.mubr.f32.gmra.mrb[0].mxu0 %v2145
    %v2244 = vpop.f32.mrb[0].mxu0
    %v2245 = vadd.f32 %v2116, %v2244
    %v2246 = vpop.f32.mrb[0].mxu0
    %2247 = vmatprep.mubr.f32.mxu0 0.0
    %2248 = vmatmul.mubr.f32.gmra.mrb[0].mxu0 %v2148
    %v2249 = vpop.f32.mrb[0].mxu0
    %v2250 = vadd.f32 %v2121, %v2249
    %v2251 = vpop.f32.mrb[0].mxu0
    %2252 = vmatprep.mubr.f32.mxu0 0.0
    %2253 = vmatmul.mubr.f32.gmra.mrb[0].mxu0 %v2151
    %v2254 = vpop.f32.mrb[0].mxu0
    %v2255 = vadd.f32 %v2126, %v2254
    %v2256 = vpop.f32.mrb[0].mxu0
    %2257 = vdwg.mxu0
    %v2258 = vmax.f32 %v2220, 0.0
    %v2259 = vmax.f32 %v2225, 0.0
    %v2260 = vmax.f32 %v2230, 0.0
    %v2261 = vmax.f32 %v2235, 0.0
    %v2262 = vmax.f32 %v2240, 0.0
    %v2263 = vmax.f32 %v2245, 0.0
    %v2264 = vmax.f32 %v2250, 0.0
    %v2265 = vmax.f32 %v2255, 0.0
    %v2266 = vld [vmem:[%s1 + $0x110] sm:$0x3f]
    %v2267 = vld [vmem:[%s1 + $0xd0] sm:$0x3f]
    %2269 = vset.pattern.permute.xlu0 1
    %2270 = vperm.xlu0 %2269, %v2267
    %v2271 = vpop.permute.xlu0 %2270
    %vm2273 = vcmask 523264
    %v2275 = vsel %vm2273, %v2266, 0
    %2277 = vmatprep.subr.mxu0 0.0
    %2278 = vmatpush1.msra.mxu0 %v2258
    %2279 = vmatprep.subr.mxu0 0.0
    %2280 = vmatpush1.msra.mxu0 %v2259
    %2281 = vmatprep.subr.mxu0 0.0
    %2282 = vmatpush1.msra.mxu0 %v2260
    %2283 = vmatprep.subr.mxu0 0.0
    %2284 = vmatpush1.msra.mxu0 %v2261
    %2285 = vmatprep.subr.mxu0 0.0
    %2286 = vmatpush1.msra.mxu0 %v2262
    %2287 = vmatprep.subr.mxu0 0.0
    %2288 = vmatpush1.msra.mxu0 %v2263
    %2289 = vmatprep.subr.mxu0 0.0
    %2290 = vmatpush1.msra.mxu0 %v2264
    %2291 = vmatprep.subr.mxu0 0.0
    %2292 = vmatpush1.msra.mxu0 %v2265
    %2293 = vmatprep.subr.mxu0 0.0
    %2294 = vmatpush1.msra.mxu0 0.0
    %2295 = vmatprep.subr.mxu0 0.0
    %2296 = vmatpush1.msra.mxu0 0.0
    %2297 = vmatprep.subr.mxu0 0.0
    %2298 = vmatpush1.msra.mxu0 0.0
    %2299 = vmatprep.subr.mxu0 0.0
    %2300 = vmatpush1.msra.mxu0 0.0
    %2301 = vmatprep.subr.mxu0 0.0
    %2302 = vmatpush1.msra.mxu0 0.0
    %2303 = vmatprep.subr.mxu0 0.0
    %2304 = vmatpush1.msra.mxu0 0.0
    %2305 = vmatprep.subr.mxu0 0.0
    %2306 = vmatpush1.msra.mxu0 0.0
    %2307 = vmatprep.subr.mxu0 0.0
    %2308 = vmatpush1.msra.mxu0 0.0
    %2309 = vmatprep.subr.mxu0 0.0
    %2310 = vmatpush1.msra.mxu0 0.0
    %2311 = vmatprep.subr.mxu0 0.0
    %2312 = vmatpush1.msra.mxu0 0.0
    %2313 = vmatprep.subr.mxu0 0.0
    %2314 = vmatpush1.msra.mxu0 0.0
    %2315 = vmatprep.subr.mxu0 0.0
    %2316 = vmatpush1.msra.mxu0 0.0
    %2317 = vmatprep.subr.mxu0 0.0
    %2318 = vmatpush1.msra.mxu0 0.0
    %2319 = vmatprep.subr.mxu0 0.0
    %2320 = vmatpush1.msra.mxu0 0.0
    %2321 = vmatprep.subr.mxu0 0.0
    %2322 = vmatpush1.msra.mxu0 0.0
    %2323 = vmatprep.subr.mxu0 0.0
    %2324 = vmatpush1.msra.mxu0 0.0
    %2325 = vmatprep.subr.mxu0 0.0
    %2326 = vmatpush1.msra.mxu0 0.0
    %2327 = vmatprep.subr.mxu0 0.0
    %2328 = vmatpush1.msra.mxu0 0.0
    %2329 = vmatprep.subr.mxu0 0.0
    %2330 = vmatpush1.msra.mxu0 0.0
    %2331 = vmatprep.subr.mxu0 0.0
    %2332 = vmatpush1.msra.mxu0 0.0
    %2333 = vmatprep.subr.mxu0 0.0
    %2334 = vmatpush1.msra.mxu0 0.0
    %2335 = vmatprep.subr.mxu0 0.0
    %2336 = vmatpush1.msra.mxu0 0.0
    %2337 = vmatprep.subr.mxu0 0.0
    %2338 = vmatpush1.msra.mxu0 0.0
    %2339 = vmatprep.subr.mxu0 0.0
    %2340 = vmatpush1.msra.mxu0 0.0
    %2341 = vmatprep.mubr.f32.mxu0 0.0
    %2342 = vmatmul.mubr.f32.gmra.mrb[0].mxu0 %v2275
    %v2343 = vpop.f32.mrb[0].mxu0
    %v2344 = vadd.f32 %v2271, %v2343
    %v2345 = vpop.f32.mrb[0].mxu0
    %2346 = vdwg.mxu0
    %v2347 = vld [vmem:[%s2 + $0x5] sm:$0x3]
    %v2348 = vld [vmem:[%s2 + $0x7] sm:$0x3]
    %v2349 = vld [vmem:[%s2 + $0x9] sm:$0x3]
    %v2350 = vld [vmem:[%s2 + $0xb] sm:$0x3]
    %v2351 = vlaneseq
    %v2352 = vshrl.u32 %v2351, 7
    %vm2353 = vcmask 9216
    %v2354 = vsel %vm2353, %v2344, -inf
    %v2355 = vrot.slane %v2354, 4
    %v2356 = vmax.f32 %v2354, %v2355
    %v2357 = vrot.slane %v2356, 2
    %v2358 = vmax.f32 %v2356, %v2357
    %v2359 = vrot.slane %v2358, 1
    %v2360 = vmax.f32 %v2358, %v2359
    %v2361 = vsub.f32 %v2344, %v2360
    %v2362 = vmul.f32 %v2361, 1.442695
    %v2363 = vpow.pop %v2362
    %v2364 = vsel %vm2353, %v2363, 0.0
    %v2365 = vrot.slane %v2364, 4
    %v2366 = vadd.f32 %v2364, %v2365
    %v2367 = vrot.slane %v2366, 2
    %v2368 = vadd.f32 %v2366, %v2367
    %v2369 = vrot.slane %v2368, 1
    %v2370 = vadd.f32 %v2368, %v2369
    %v2371 = vlog2.pop %v2370
    %v2372 = vmul.f32 %v2371, 0.6931472
    %v2373 = vadd.f32 %v2360, %v2372
    %v2374 = vsub.f32 %v2344, %v2373
    %v2375 = vcvt.f32.s32.to.zero.pseudo %v2347
    %v2376 = vlaneseq
    %v2377 = vshrl.u32 %v2376, 7
    %v2378 = vsub.s32 0, %v2377
    %v2379 = vrot.slane %v2375, %v2378
    %vm2380 = vcmp.eq.s32.totalorder %v2352, %v2379
    %v2381 = vsel %vm2380, 1, 0
    %v2382 = vcvt.s32.f32 %v2381
    %v2383 = vmul.f32 %v2382, %v2374
    %v2384 = vsel %vm2353, %v2383, 0.0
    %v2385 = vrot.slane %v2384, 4
    %v2386 = vadd.f32 %v2384, %v2385
    %v2387 = vrot.slane %v2386, 2
    %v2388 = vadd.f32 %v2386, %v2387
    %v2389 = vrot.slane %v2388, 1
    %v2390 = vadd.f32 %v2388, %v2389
    %v2391 = vsub.f32 0.0, %v2390
    %2393 = vset.pattern.permute.xlu0 0
    %2394 = vperm.xlu0 %2393, %v2348
    %v2395 = vpop.permute.xlu0 %2394
    %v2397 = vmul.f32 %v2382, %v2395
    %v2398 = vsel %vm2353, %v2397, 0.0
    %v2399 = vrot.slane %v2398, 4
    %v2400 = vadd.f32 %v2398, %v2399
    %v2401 = vrot.slane %v2400, 2
    %v2402 = vadd.f32 %v2400, %v2401
    %v2403 = vrot.slane %v2402, 1
    %v2404 = vadd.f32 %v2402, %v2403
    %v2405 = vmul.f32 %v2404, %v2391
    %vm2406 = vcmask 8192
    %v2407 = vsel %vm2406, %v2405, 0.0
    %2408 = vadd.xlane.f32.xlu0 %v2407
    %v2409 = vpop.xlane.xlu0 %2408
    %v2410 = vrot.slane %v2409, 4
    %v2411 = vadd.f32 %v2409, %v2410
    %v2412 = vrot.slane %v2411, 2
    %v2413 = vadd.f32 %v2411, %v2412
    %v2414 = vrot.slane %v2413, 1
    %v2415 = vadd.f32 %v2413, %v2414
    %s2416 = vtos %v2415
    %v2417 = vstv %s2416
    %v2418 = vsel %vm2406, %v2404, 0.0
    %2419 = vadd.xlane.f32.xlu0 %v2418
    %v2420 = vpop.xlane.xlu0 %2419
    %v2421 = vrot.slane %v2420, 4
    %v2422 = vadd.f32 %v2420, %v2421
    %v2423 = vrot.slane %v2422, 2
    %v2424 = vadd.f32 %v2422, %v2423
    %v2425 = vrot.slane %v2424, 1
    %v2426 = vadd.f32 %v2424, %v2425
    %s2427 = vtos %v2426
    %v2428 = vstv %s2427
    %v2429 = vrcp.pop %v2428
    %v2430 = vmul.f32 %v2417, %v2429
    %v2431 = vadd.f32 %v2430, 0.0
    %vm2432 = vcmask 11266
    %v2433 = vsel %vm2432, %v2344, -inf
    %v2434 = vrot.slane %v2433, 4
    %v2435 = vmax.f32 %v2433, %v2434
    %v2436 = vrot.slane %v2435, 2
    %v2437 = vmax.f32 %v2435, %v2436
    %v2438 = vrot.slane %v2437, 1
    %v2439 = vmax.f32 %v2437, %v2438
    %v2440 = vsub.f32 %v2344, %v2439
    %v2441 = vmul.f32 %v2440, 1.442695
    %v2442 = vpow.pop %v2441
    %v2444 = vrot.slane %v2442, 2
    %v2446 = vsel %vm2353, %v2444, 0.0
    %v2447 = vrot.slane %v2446, 4
    %v2448 = vadd.f32 %v2446, %v2447
    %v2449 = vrot.slane %v2448, 2
    %v2450 = vadd.f32 %v2448, %v2449
    %v2451 = vrot.slane %v2450, 1
    %v2452 = vadd.f32 %v2450, %v2451
    %v2453 = vlog2.pop %v2452
    %v2454 = vmul.f32 %v2453, 0.6931472
    %v2455 = vadd.f32 %v2439, %v2454
    %v2456 = vsub.f32 %v2344, %v2455
    %v2457 = vlaneseq
    %v2458 = vshrl.u32 %v2457, 7
    %v2459 = vsub.s32 1, %v2458
    %v2460 = vrot.slane %v2375, %v2459
    %vm2461 = vcmp.eq.s32.totalorder %v2352, %v2460
    %v2462 = vsel %vm2461, 1, 0
    %v2463 = vcvt.s32.f32 %v2462
    %v2465 = vrot.slane %v2456, 2
    %v2467 = vmul.f32 %v2463, %v2465
    %v2468 = vsel %vm2353, %v2467, 0.0
    %v2469 = vrot.slane %v2468, 4
    %v2470 = vadd.f32 %v2468, %v2469
    %v2471 = vrot.slane %v2470, 2
    %v2472 = vadd.f32 %v2470, %v2471
    %v2473 = vrot.slane %v2472, 1
    %v2474 = vadd.f32 %v2472, %v2473
    %v2475 = vsub.f32 0.0, %v2474
    %2476 = vset.pattern.permute.xlu0 1
    %2477 = vperm.xlu0 %2476, %v2348
    %v2478 = vpop.permute.xlu0 %2477
    %v2480 = vmul.f32 %v2463, %v2478
    %v2481 = vsel %vm2353, %v2480, 0.0
    %v2482 = vrot.slane %v2481, 4
    %v2483 = vadd.f32 %v2481, %v2482
    %v2484 = vrot.slane %v2483, 2
    %v2485 = vadd.f32 %v2483, %v2484
    %v2486 = vrot.slane %v2485, 1
    %v2487 = vadd.f32 %v2485, %v2486
    %v2488 = vmul.f32 %v2487, %v2475
    %v2489 = vsel %vm2406, %v2488, 0.0
    %2490 = vadd.xlane.f32.xlu0 %v2489
    %v2491 = vpop.xlane.xlu0 %2490
    %v2492 = vrot.slane %v2491, 4
    %v2493 = vadd.f32 %v2491, %v2492
    %v2494 = vrot.slane %v2493, 2
    %v2495 = vadd.f32 %v2493, %v2494
    %v2496 = vrot.slane %v2495, 1
    %v2497 = vadd.f32 %v2495, %v2496
    %s2498 = vtos %v2497
    %v2499 = vstv %s2498
    %v2500 = vsel %vm2406, %v2487, 0.0
    %2501 = vadd.xlane.f32.xlu0 %v2500
    %v2502 = vpop.xlane.xlu0 %2501
    %v2503 = vrot.slane %v2502, 4
    %v2504 = vadd.f32 %v2502, %v2503
    %v2505 = vrot.slane %v2504, 2
    %v2506 = vadd.f32 %v2504, %v2505
    %v2507 = vrot.slane %v2506, 1
    %v2508 = vadd.f32 %v2506, %v2507
    %s2509 = vtos %v2508
    %v2510 = vstv %s2509
    %v2511 = vrcp.pop %v2510
    %v2512 = vmul.f32 %v2499, %v2511
    %v2513 = vadd.f32 %v2431, %v2512
    %v2515 = vrot.slane %v2349, 4
    %v2517 = vsub.f32 %v2344, %v2515
    %v2518 = vand.u32 2147483647, %v2517
    %2520 = vset.pattern.permute.xlu0 0
    %2521 = vperm.xlu0 %2520, %v2350
    %v2522 = vpop.permute.xlu0 %2521
    %v2523 = vrot.slane %v2522, 4
    %v2525 = vmul.f32 %v2518, %v2523
    %v2527 = vrot.slane %v2525, 4
    %v2529 = vsel %vm2353, %v2527, 0.0
    %2530 = vadd.xlane.f32.xlu0 %v2529
    %v2531 = vpop.xlane.xlu0 %2530
    %v2532 = vrot.slane %v2531, 4
    %v2533 = vadd.f32 %v2531, %v2532
    %v2534 = vrot.slane %v2533, 2
    %v2535 = vadd.f32 %v2533, %v2534
    %v2536 = vrot.slane %v2535, 1
    %v2537 = vadd.f32 %v2535, %v2536
    %s2538 = vtos %v2537
    %v2539 = vstv %s2538
    %v2540 = vmul.f32 %v2539, 0.5
    %v2541 = vadd.f32 %v2513, %v2540
    %vm2542 = vcmask 0
    %2543 = vst.msk [vmem:[#allocation2] sm:$0x1] %vm2542, %v2541
    // Predicated region
    $region14: #{affordances_separate_forward.1} parent=1 // pred_check
      _
    $region15: #{affordances_separate_forward.1} parent=1 // pred_check_branch
      %2545 = sbr.rel (0) target = $region17
    $region16: #{affordances_separate_forward.1} parent=1 // pred_region
      %s2547 = ssub.s32 16, 16
      %2548 = vsyncadd [#allocation3], %s2547
      %s2550 = sshll.u32 [#allocation2], 4
      %s2551 = int_to_ptr.vmem [resolvable:$true] %s2550
      %2553 = dma.vmem_to_hbm [thread:$0]  %s2551, 16, %s3, [#allocation3]
    $region17: #{affordances_separate_forward.1} parent=1 // pred_fallthru
      _
    // Predicated region
    $region18: #{affordances_separate_forward.1} parent=1 // pred_check
      _
    $region19: #{affordances_separate_forward.1} parent=1 // pred_check_branch
      %2555 = sbr.rel (0) target = $region21
    $region20: #{affordances_separate_forward.1} parent=1 // pred_region
      %2556 = dma.done [#allocation3], 16
    $region21: #{affordances_separate_forward.1} parent=1 // pred_fallthru
      _
    %2557 = vsyncpa [#allocation3], 1

</llo_original>
